<compile_context>
chip_gen: v5e
topology: v5e:2x2
jax: 0.10.0
libtpu: 0.0.40
codegen_flags: <defaults>
</compile_context>

<pallas_src>
import numpy as np
import jax
import jax.numpy as jnp
from jax import lax
from jax.experimental import pallas as pl
from jax.experimental.pallas import tpu as pltpu


# ---------------------------------------------------------------------------
# Fused Pallas kernel: (normalize+)conv1/ReLU + conv2/ReLU + conv3/ReLU
# ---------------------------------------------------------------------------
def _fused_vision_kernel(x_ref,
                         r1_ref, t1_ref, b1_ref,
                         r2_ref, t2_ref, b2_ref,
                         r3_ref, t3_ref, b3_ref,
                         o_ref):
    def layer(a_in, r_ref, t_ref, b_ref):
        k = r_ref.shape[0]                 # kernel size (static)
        h_out = r_ref.shape[1]
        lanes_out = t_ref.shape[2]
        acc = jnp.zeros((h_out, lanes_out), jnp.float32)
        for b in range(k):                 # static unroll, k <= 8
            rows = jnp.dot(r_ref[b], a_in, preferred_element_type=jnp.float32)
            acc = acc + jnp.dot(rows, t_ref[b],
                                preferred_element_type=jnp.float32)
        return jnp.maximum(acc + b_ref[...], 0.0)

    a1 = layer(x_ref[...], r1_ref, t1_ref, b1_ref)   # [11, 11*32]  (norm folded in)
    a2 = layer(a1,         r2_ref, t2_ref, b2_ref)   # [ 4,  4*64]
    o_ref[...] = layer(a2, r3_ref, t3_ref, b3_ref)   # [ 2,  2*hidden]


# ---------------------------------------------------------------------------
# One-time parameter packing (hoisted out of the forward path)
# ---------------------------------------------------------------------------
def _layer_operators(weight, bias, stride, h_in, w_in):
    """Build (R, T, bias_row, h_out, w_out) for one conv layer (numpy, host).

    weight: torch layout [Cout, Cin, KH, KW] (square kernel).  The layer is
    applied in the swapped-spatial orientation implied by the module's two
    transpose(1, 3) calls:
        act_out[i, j, o] = sum_{a,b,c} act_in[s*i + b, s*j + a, c] * w[o, c, a, b]
    on activations stored as A[i, j*Cin + c].
    """
    w = np.asarray(weight, np.float32)
    co, ci, kh, kw = w.shape
    assert kh == kw
    k = kh
    h_out = (h_in - k) // stride + 1
    w_out = (w_in - k) // stride + 1

    # R[b]: one-hot row selection (picks input row stride*i + b for output row i).
    R = np.zeros((k, h_out, h_in), np.float32)
    for b in range(k):
        R[b, np.arange(h_out), stride * np.arange(h_out) + b] = 1.0

    # T[b]: column stride + channel contraction.
    #   T[b, (stride*j + a)*Cin + c, j*Cout + o] = w[o, c, a, b]
    T = np.zeros((k, w_in * ci, w_out * co), np.float32)
    for b in range(k):
        for j in range(w_out):
            for a in range(k):
                q = stride * j + a
                T[b, q * ci:(q + 1) * ci, j * co:(j + 1) * co] = w[:, :, a, b].T

    bias_row = np.tile(np.asarray(bias, np.float32).reshape(1, co), (1, w_out))
    return R, T, bias_row, h_out, w_out


def pack_params(params, mean_image, height, width):
    """Pre-pack torch-layout weights + mean image into matmul operators (once)."""
    r1, t1, bb1, h1, w1 = _layer_operators(params["w1"], params["b1"], 3, height, width)
    r2, t2, bb2, h2, w2 = _layer_operators(params["w2"], params["b2"], 2, h1, w1)
    r3, t3, bb3, h3, w3 = _layer_operators(params["w3"], params["b3"], 1, h2, w2)

    # Fold the input normalization (x - mean) * (1/255) into layer 1:
    #   conv1((x - m)/255) = sum_b R_b @ x @ (T_b/255)
    #                        + [bias - sum_b R_b @ m @ (T_b/255)]
    t1 = t1 * np.float32(1.0 / 255.0)
    ci1 = int(np.asarray(params["w1"]).shape[1])
    m2 = np.asarray(mean_image, np.float32).reshape(height, width * ci1)
    mean_contrib = np.zeros((h1, t1.shape[2]), np.float32)
    for b in range(t1.shape[0]):
        mean_contrib += r1[b] @ m2 @ t1[b]
    bb1 = bb1 - mean_contrib                       # full [h1, w1*Cout1] bias map

    j = jnp.asarray
    return dict(r1=j(r1), t1=j(t1), b1=j(bb1),
                r2=j(r2), t2=j(t2), b2=j(bb2),
                r3=j(r3), t3=j(t3), b3=j(bb3),
                h_out=h3, w_out=w3, c_out=int(np.asarray(params["w3"]).shape[0]))


# ---------------------------------------------------------------------------
# Forward wrapper (single pallas_call)
# ---------------------------------------------------------------------------
def conv_vision_core_forward(x, packed):
    """Matches ConvVisionCore.forward for NHWC input x: [N, H, W, 3]."""
    n, h, w, c = x.shape
    x2 = x.reshape(n, h, w * c)                    # A0[i, j*C + c]
    h3, w3, co = packed["h_out"], packed["w_out"], packed["c_out"]

    def const_spec(shape):
        return pl.BlockSpec(shape, lambda i, _s=shape: (0,) * len(_s))

    out = pl.pallas_call(
        _fused_vision_kernel,
        out_shape=jax.ShapeDtypeStruct((n, h3, w3 * co), jnp.float32),
        grid=(n,),
        in_specs=[
            pl.BlockSpec((None, h, w * c), lambda i: (i, 0, 0)),     # per-image tile
            const_spec(packed["r1"].shape), const_spec(packed["t1"].shape),
            const_spec(packed["b1"].shape),
            const_spec(packed["r2"].shape), const_spec(packed["t2"].shape),
            const_spec(packed["b2"].shape),
            const_spec(packed["r3"].shape), const_spec(packed["t3"].shape),
            const_spec(packed["b3"].shape),
        ],
        out_specs=pl.BlockSpec((None, h3, w3 * co), lambda i: (i, 0, 0)),
        compiler_params=pltpu.CompilerParams(
            dimension_semantics=("parallel",)),
    )(x2,
      packed["r1"], packed["t1"], packed["b1"],
      packed["r2"], packed["t2"], packed["b2"],
      packed["r3"], packed["t3"], packed["b3"])

    return out.reshape(n, h3, w3, co)


# ---------------------------------------------------------------------------
# Pure-JAX reference (correctness check only)
# ---------------------------------------------------------------------------
def _ref_forward(x, mean_image, params):
    h = jnp.transpose((x - mean_image) / 255.0, (0, 2, 1, 3))
    for wk, bk, s in (("w1", "b1", 3), ("w2", "b2", 2), ("w3", "b3", 1)):
        dn = lax.conv_dimension_numbers(h.shape, params[wk].shape,
                                        ("NHWC", "OIHW", "NHWC"))
        h = lax.conv_general_dilated(h, params[wk], (s, s), "VALID",
                                     dimension_numbers=dn)
        h = jax.nn.relu(h + params[bk])
    return jnp.transpose(h, (0, 2, 1, 3))


# ---------------------------------------------------------------------------
# Main
# ---------------------------------------------------------------------------
if __name__ == "__main__":
    hidden_size = 32
    N, H, W, C = 2, 38, 38, 3   # 38 -> 11 -> 4 -> 2 spatial through the conv stack

    key = jax.random.PRNGKey(0)
    kx, km, k1, k2, k3 = jax.random.split(key, 5)

    # Deterministic synthetic parameters (torch Conv2d layout [Cout, Cin, KH, KW]);
    # ptu.weights_init-style small weights scaled by relu gain sqrt(2), zero bias.
    relu_gain = float(np.sqrt(2.0))
    params = {
        "w1": jax.random.normal(k1, (32, 3, 8, 8), jnp.float32) * 0.05 * relu_gain,
        "b1": jnp.zeros((32,), jnp.float32),
        "w2": jax.random.normal(k2, (64, 32, 4, 4), jnp.float32) * 0.05 * relu_gain,
        "b2": jnp.zeros((64,), jnp.float32),
        "w3": jax.random.normal(k3, (hidden_size, 64, 3, 3), jnp.float32) * 0.05 * relu_gain,
        "b3": jnp.zeros((hidden_size,), jnp.float32),
    }

    x = jax.random.uniform(kx, (N, H, W, C), jnp.float32, 0.0, 255.0)
    mean_image = jax.random.uniform(km, (H, W, C), jnp.float32, 0.0, 255.0)

    packed = pack_params(params, mean_image, H, W)    # one-time packing (norm folded)
    fwd = jax.jit(lambda xx: conv_vision_core_forward(xx, packed))

    out = jax.block_until_ready(fwd(x))
    ref = jax.block_until_ready(_ref_forward(x, mean_image, params))

    assert out.shape == (N, 2, 2, hidden_size), out.shape
    assert jnp.allclose(out, ref, rtol=2e-3, atol=2e-3), \
        float(jnp.max(jnp.abs(out - ref)))

    print("KERNEL_OK")
</pallas_src>

<mosaic_0001>
module attributes {stable_mosaic.version = 11 : i64} {
  func.func @_fused_vision_kernel(%arg0: i32, %arg1: memref<1x38x114xf32, #tpu.memory_space<vmem>>, %arg2: memref<8x11x38xf32, #tpu.memory_space<vmem>>, %arg3: memref<8x114x352xf32, #tpu.memory_space<vmem>>, %arg4: memref<11x352xf32, #tpu.memory_space<vmem>>, %arg5: memref<4x4x11xf32, #tpu.memory_space<vmem>>, %arg6: memref<4x352x256xf32, #tpu.memory_space<vmem>>, %arg7: memref<1x256xf32, #tpu.memory_space<vmem>>, %arg8: memref<3x2x4xf32, #tpu.memory_space<vmem>>, %arg9: memref<3x256x64xf32, #tpu.memory_space<vmem>>, %arg10: memref<1x64xf32, #tpu.memory_space<vmem>>, %arg11: memref<1x2x64xf32, #tpu.memory_space<vmem>>) attributes {dimension_semantics = [#tpu.dimension_semantics<parallel>], iteration_bounds = array<i64: 2>, scalar_prefetch = 0 : i64, scratch_operands = 0 : i64, tpu.core_type = #tpu.core_type<tc>, window_params = [{transform_indices = @transform_0, window_bounds = array<i64: 1, 38, 114>}, {pipeline_mode = #tpu.pipeline_mode<synchronous>, transform_indices = @transform_1, window_bounds = array<i64: 8, 11, 38>}, {pipeline_mode = #tpu.pipeline_mode<synchronous>, transform_indices = @transform_2, window_bounds = array<i64: 8, 114, 352>}, {pipeline_mode = #tpu.pipeline_mode<synchronous>, transform_indices = @transform_3, window_bounds = array<i64: 11, 352>}, {pipeline_mode = #tpu.pipeline_mode<synchronous>, transform_indices = @transform_4, window_bounds = array<i64: 4, 4, 11>}, {pipeline_mode = #tpu.pipeline_mode<synchronous>, transform_indices = @transform_5, window_bounds = array<i64: 4, 352, 256>}, {pipeline_mode = #tpu.pipeline_mode<synchronous>, transform_indices = @transform_6, window_bounds = array<i64: 1, 256>}, {pipeline_mode = #tpu.pipeline_mode<synchronous>, transform_indices = @transform_7, window_bounds = array<i64: 3, 2, 4>}, {pipeline_mode = #tpu.pipeline_mode<synchronous>, transform_indices = @transform_8, window_bounds = array<i64: 3, 256, 64>}, {pipeline_mode = #tpu.pipeline_mode<synchronous>, transform_indices = @transform_9, window_bounds = array<i64: 1, 64>}, {transform_indices = @transform_10, window_bounds = array<i64: 1, 2, 64>}]} {
    %c0 = arith.constant 0 : index
    %c0_0 = arith.constant 0 : index
    %c0_1 = arith.constant 0 : index
    %0 = vector.load %arg1[%c0, %c0_0, %c0_1] : memref<1x38x114xf32, #tpu.memory_space<vmem>>, vector<1x38x114xf32>
    %1 = vector.shape_cast %0 : vector<1x38x114xf32> to vector<38x114xf32>
    %cst = arith.constant 0.000000e+00 : f32
    %2 = vector.broadcast %cst : f32 to vector<11x352xf32>
    %c0_2 = arith.constant 0 : index
    %c0_3 = arith.constant 0 : index
    %c0_4 = arith.constant 0 : index
    %3 = vector.load %arg2[%c0_2, %c0_3, %c0_4] : memref<8x11x38xf32, #tpu.memory_space<vmem>>, vector<1x11x38xf32>
    %4 = vector.shape_cast %3 : vector<1x11x38xf32> to vector<11x38xf32>
    %cst_5 = arith.constant dense<0.000000e+00> : vector<11x114xf32>
    %5 = tpu.matmul %4, %1, %cst_5 {dimension_numbers = #tpu.dot_dimension_numbers<[1], [0], [0], [1], [0, 0, 1, 1], [], []>} : vector<11x38xf32>, vector<38x114xf32>, vector<11x114xf32> -> vector<11x114xf32>
    %c0_6 = arith.constant 0 : index
    %c0_7 = arith.constant 0 : index
    %c0_8 = arith.constant 0 : index
    %6 = vector.load %arg3[%c0_6, %c0_7, %c0_8] : memref<8x114x352xf32, #tpu.memory_space<vmem>>, vector<1x114x352xf32>
    %7 = vector.shape_cast %6 : vector<1x114x352xf32> to vector<114x352xf32>
    %cst_9 = arith.constant dense<0.000000e+00> : vector<11x352xf32>
    %8 = tpu.matmul %5, %7, %cst_9 {dimension_numbers = #tpu.dot_dimension_numbers<[1], [0], [0], [1], [0, 0, 1, 1], [], []>} : vector<11x114xf32>, vector<114x352xf32>, vector<11x352xf32> -> vector<11x352xf32>
    %9 = arith.addf %2, %8 : vector<11x352xf32>
    %c1 = arith.constant 1 : index
    %c0_10 = arith.constant 0 : index
    %c0_11 = arith.constant 0 : index
    %10 = vector.load %arg2[%c1, %c0_10, %c0_11] : memref<8x11x38xf32, #tpu.memory_space<vmem>>, vector<1x11x38xf32>
    %11 = vector.shape_cast %10 : vector<1x11x38xf32> to vector<11x38xf32>
    %cst_12 = arith.constant dense<0.000000e+00> : vector<11x114xf32>
    %12 = tpu.matmul %11, %1, %cst_12 {dimension_numbers = #tpu.dot_dimension_numbers<[1], [0], [0], [1], [0, 0, 1, 1], [], []>} : vector<11x38xf32>, vector<38x114xf32>, vector<11x114xf32> -> vector<11x114xf32>
    %c1_13 = arith.constant 1 : index
    %c0_14 = arith.constant 0 : index
    %c0_15 = arith.constant 0 : index
    %13 = vector.load %arg3[%c1_13, %c0_14, %c0_15] : memref<8x114x352xf32, #tpu.memory_space<vmem>>, vector<1x114x352xf32>
    %14 = vector.shape_cast %13 : vector<1x114x352xf32> to vector<114x352xf32>
    %cst_16 = arith.constant dense<0.000000e+00> : vector<11x352xf32>
    %15 = tpu.matmul %12, %14, %cst_16 {dimension_numbers = #tpu.dot_dimension_numbers<[1], [0], [0], [1], [0, 0, 1, 1], [], []>} : vector<11x114xf32>, vector<114x352xf32>, vector<11x352xf32> -> vector<11x352xf32>
    %16 = arith.addf %9, %15 : vector<11x352xf32>
    %c2 = arith.constant 2 : index
    %c0_17 = arith.constant 0 : index
    %c0_18 = arith.constant 0 : index
    %17 = vector.load %arg2[%c2, %c0_17, %c0_18] : memref<8x11x38xf32, #tpu.memory_space<vmem>>, vector<1x11x38xf32>
    %18 = vector.shape_cast %17 : vector<1x11x38xf32> to vector<11x38xf32>
    %cst_19 = arith.constant dense<0.000000e+00> : vector<11x114xf32>
    %19 = tpu.matmul %18, %1, %cst_19 {dimension_numbers = #tpu.dot_dimension_numbers<[1], [0], [0], [1], [0, 0, 1, 1], [], []>} : vector<11x38xf32>, vector<38x114xf32>, vector<11x114xf32> -> vector<11x114xf32>
    %c2_20 = arith.constant 2 : index
    %c0_21 = arith.constant 0 : index
    %c0_22 = arith.constant 0 : index
    %20 = vector.load %arg3[%c2_20, %c0_21, %c0_22] : memref<8x114x352xf32, #tpu.memory_space<vmem>>, vector<1x114x352xf32>
    %21 = vector.shape_cast %20 : vector<1x114x352xf32> to vector<114x352xf32>
    %cst_23 = arith.constant dense<0.000000e+00> : vector<11x352xf32>
    %22 = tpu.matmul %19, %21, %cst_23 {dimension_numbers = #tpu.dot_dimension_numbers<[1], [0], [0], [1], [0, 0, 1, 1], [], []>} : vector<11x114xf32>, vector<114x352xf32>, vector<11x352xf32> -> vector<11x352xf32>
    %23 = arith.addf %16, %22 : vector<11x352xf32>
    %c3 = arith.constant 3 : index
    %c0_24 = arith.constant 0 : index
    %c0_25 = arith.constant 0 : index
    %24 = vector.load %arg2[%c3, %c0_24, %c0_25] : memref<8x11x38xf32, #tpu.memory_space<vmem>>, vector<1x11x38xf32>
    %25 = vector.shape_cast %24 : vector<1x11x38xf32> to vector<11x38xf32>
    %cst_26 = arith.constant dense<0.000000e+00> : vector<11x114xf32>
    %26 = tpu.matmul %25, %1, %cst_26 {dimension_numbers = #tpu.dot_dimension_numbers<[1], [0], [0], [1], [0, 0, 1, 1], [], []>} : vector<11x38xf32>, vector<38x114xf32>, vector<11x114xf32> -> vector<11x114xf32>
    %c3_27 = arith.constant 3 : index
    %c0_28 = arith.constant 0 : index
    %c0_29 = arith.constant 0 : index
    %27 = vector.load %arg3[%c3_27, %c0_28, %c0_29] : memref<8x114x352xf32, #tpu.memory_space<vmem>>, vector<1x114x352xf32>
    %28 = vector.shape_cast %27 : vector<1x114x352xf32> to vector<114x352xf32>
    %cst_30 = arith.constant dense<0.000000e+00> : vector<11x352xf32>
    %29 = tpu.matmul %26, %28, %cst_30 {dimension_numbers = #tpu.dot_dimension_numbers<[1], [0], [0], [1], [0, 0, 1, 1], [], []>} : vector<11x114xf32>, vector<114x352xf32>, vector<11x352xf32> -> vector<11x352xf32>
    %30 = arith.addf %23, %29 : vector<11x352xf32>
    %c4 = arith.constant 4 : index
    %c0_31 = arith.constant 0 : index
    %c0_32 = arith.constant 0 : index
    %31 = vector.load %arg2[%c4, %c0_31, %c0_32] : memref<8x11x38xf32, #tpu.memory_space<vmem>>, vector<1x11x38xf32>
    %32 = vector.shape_cast %31 : vector<1x11x38xf32> to vector<11x38xf32>
    %cst_33 = arith.constant dense<0.000000e+00> : vector<11x114xf32>
    %33 = tpu.matmul %32, %1, %cst_33 {dimension_numbers = #tpu.dot_dimension_numbers<[1], [0], [0], [1], [0, 0, 1, 1], [], []>} : vector<11x38xf32>, vector<38x114xf32>, vector<11x114xf32> -> vector<11x114xf32>
    %c4_34 = arith.constant 4 : index
    %c0_35 = arith.constant 0 : index
    %c0_36 = arith.constant 0 : index
    %34 = vector.load %arg3[%c4_34, %c0_35, %c0_36] : memref<8x114x352xf32, #tpu.memory_space<vmem>>, vector<1x114x352xf32>
    %35 = vector.shape_cast %34 : vector<1x114x352xf32> to vector<114x352xf32>
    %cst_37 = arith.constant dense<0.000000e+00> : vector<11x352xf32>
    %36 = tpu.matmul %33, %35, %cst_37 {dimension_numbers = #tpu.dot_dimension_numbers<[1], [0], [0], [1], [0, 0, 1, 1], [], []>} : vector<11x114xf32>, vector<114x352xf32>, vector<11x352xf32> -> vector<11x352xf32>
    %37 = arith.addf %30, %36 : vector<11x352xf32>
    %c5 = arith.constant 5 : index
    %c0_38 = arith.constant 0 : index
    %c0_39 = arith.constant 0 : index
    %38 = vector.load %arg2[%c5, %c0_38, %c0_39] : memref<8x11x38xf32, #tpu.memory_space<vmem>>, vector<1x11x38xf32>
    %39 = vector.shape_cast %38 : vector<1x11x38xf32> to vector<11x38xf32>
    %cst_40 = arith.constant dense<0.000000e+00> : vector<11x114xf32>
    %40 = tpu.matmul %39, %1, %cst_40 {dimension_numbers = #tpu.dot_dimension_numbers<[1], [0], [0], [1], [0, 0, 1, 1], [], []>} : vector<11x38xf32>, vector<38x114xf32>, vector<11x114xf32> -> vector<11x114xf32>
    %c5_41 = arith.constant 5 : index
    %c0_42 = arith.constant 0 : index
    %c0_43 = arith.constant 0 : index
    %41 = vector.load %arg3[%c5_41, %c0_42, %c0_43] : memref<8x114x352xf32, #tpu.memory_space<vmem>>, vector<1x114x352xf32>
    %42 = vector.shape_cast %41 : vector<1x114x352xf32> to vector<114x352xf32>
    %cst_44 = arith.constant dense<0.000000e+00> : vector<11x352xf32>
    %43 = tpu.matmul %40, %42, %cst_44 {dimension_numbers = #tpu.dot_dimension_numbers<[1], [0], [0], [1], [0, 0, 1, 1], [], []>} : vector<11x114xf32>, vector<114x352xf32>, vector<11x352xf32> -> vector<11x352xf32>
    %44 = arith.addf %37, %43 : vector<11x352xf32>
    %c6 = arith.constant 6 : index
    %c0_45 = arith.constant 0 : index
    %c0_46 = arith.constant 0 : index
    %45 = vector.load %arg2[%c6, %c0_45, %c0_46] : memref<8x11x38xf32, #tpu.memory_space<vmem>>, vector<1x11x38xf32>
    %46 = vector.shape_cast %45 : vector<1x11x38xf32> to vector<11x38xf32>
    %cst_47 = arith.constant dense<0.000000e+00> : vector<11x114xf32>
    %47 = tpu.matmul %46, %1, %cst_47 {dimension_numbers = #tpu.dot_dimension_numbers<[1], [0], [0], [1], [0, 0, 1, 1], [], []>} : vector<11x38xf32>, vector<38x114xf32>, vector<11x114xf32> -> vector<11x114xf32>
    %c6_48 = arith.constant 6 : index
    %c0_49 = arith.constant 0 : index
    %c0_50 = arith.constant 0 : index
    %48 = vector.load %arg3[%c6_48, %c0_49, %c0_50] : memref<8x114x352xf32, #tpu.memory_space<vmem>>, vector<1x114x352xf32>
    %49 = vector.shape_cast %48 : vector<1x114x352xf32> to vector<114x352xf32>
    %cst_51 = arith.constant dense<0.000000e+00> : vector<11x352xf32>
    %50 = tpu.matmul %47, %49, %cst_51 {dimension_numbers = #tpu.dot_dimension_numbers<[1], [0], [0], [1], [0, 0, 1, 1], [], []>} : vector<11x114xf32>, vector<114x352xf32>, vector<11x352xf32> -> vector<11x352xf32>
    %51 = arith.addf %44, %50 : vector<11x352xf32>
    %c7 = arith.constant 7 : index
    %c0_52 = arith.constant 0 : index
    %c0_53 = arith.constant 0 : index
    %52 = vector.load %arg2[%c7, %c0_52, %c0_53] : memref<8x11x38xf32, #tpu.memory_space<vmem>>, vector<1x11x38xf32>
    %53 = vector.shape_cast %52 : vector<1x11x38xf32> to vector<11x38xf32>
    %cst_54 = arith.constant dense<0.000000e+00> : vector<11x114xf32>
    %54 = tpu.matmul %53, %1, %cst_54 {dimension_numbers = #tpu.dot_dimension_numbers<[1], [0], [0], [1], [0, 0, 1, 1], [], []>} : vector<11x38xf32>, vector<38x114xf32>, vector<11x114xf32> -> vector<11x114xf32>
    %c7_55 = arith.constant 7 : index
    %c0_56 = arith.constant 0 : index
    %c0_57 = arith.constant 0 : index
    %55 = vector.load %arg3[%c7_55, %c0_56, %c0_57] : memref<8x114x352xf32, #tpu.memory_space<vmem>>, vector<1x114x352xf32>
    %56 = vector.shape_cast %55 : vector<1x114x352xf32> to vector<114x352xf32>
    %cst_58 = arith.constant dense<0.000000e+00> : vector<11x352xf32>
    %57 = tpu.matmul %54, %56, %cst_58 {dimension_numbers = #tpu.dot_dimension_numbers<[1], [0], [0], [1], [0, 0, 1, 1], [], []>} : vector<11x114xf32>, vector<114x352xf32>, vector<11x352xf32> -> vector<11x352xf32>
    %58 = arith.addf %51, %57 : vector<11x352xf32>
    %c0_59 = arith.constant 0 : index
    %c0_60 = arith.constant 0 : index
    %59 = vector.load %arg4[%c0_59, %c0_60] : memref<11x352xf32, #tpu.memory_space<vmem>>, vector<11x352xf32>
    %60 = arith.addf %58, %59 : vector<11x352xf32>
    %cst_61 = arith.constant 0.000000e+00 : f32
    %61 = vector.broadcast %cst_61 : f32 to vector<11x352xf32>
    %62 = arith.maximumf %60, %61 : vector<11x352xf32>
    %cst_62 = arith.constant 0.000000e+00 : f32
    %63 = vector.broadcast %cst_62 : f32 to vector<4x256xf32>
    %c0_63 = arith.constant 0 : index
    %c0_64 = arith.constant 0 : index
    %c0_65 = arith.constant 0 : index
    %64 = vector.load %arg5[%c0_63, %c0_64, %c0_65] : memref<4x4x11xf32, #tpu.memory_space<vmem>>, vector<1x4x11xf32>
    %65 = vector.shape_cast %64 : vector<1x4x11xf32> to vector<4x11xf32>
    %cst_66 = arith.constant dense<0.000000e+00> : vector<4x352xf32>
    %66 = tpu.matmul %65, %62, %cst_66 {dimension_numbers = #tpu.dot_dimension_numbers<[1], [0], [0], [1], [0, 0, 1, 1], [], []>} : vector<4x11xf32>, vector<11x352xf32>, vector<4x352xf32> -> vector<4x352xf32>
    %c0_67 = arith.constant 0 : index
    %c0_68 = arith.constant 0 : index
    %c0_69 = arith.constant 0 : index
    %67 = vector.load %arg6[%c0_67, %c0_68, %c0_69] : memref<4x352x256xf32, #tpu.memory_space<vmem>>, vector<1x352x256xf32>
    %68 = vector.shape_cast %67 : vector<1x352x256xf32> to vector<352x256xf32>
    %cst_70 = arith.constant dense<0.000000e+00> : vector<4x256xf32>
    %69 = tpu.matmul %66, %68, %cst_70 {dimension_numbers = #tpu.dot_dimension_numbers<[1], [0], [0], [1], [0, 0, 1, 1], [], []>} : vector<4x352xf32>, vector<352x256xf32>, vector<4x256xf32> -> vector<4x256xf32>
    %70 = arith.addf %63, %69 : vector<4x256xf32>
    %c1_71 = arith.constant 1 : index
    %c0_72 = arith.constant 0 : index
    %c0_73 = arith.constant 0 : index
    %71 = vector.load %arg5[%c1_71, %c0_72, %c0_73] : memref<4x4x11xf32, #tpu.memory_space<vmem>>, vector<1x4x11xf32>
    %72 = vector.shape_cast %71 : vector<1x4x11xf32> to vector<4x11xf32>
    %cst_74 = arith.constant dense<0.000000e+00> : vector<4x352xf32>
    %73 = tpu.matmul %72, %62, %cst_74 {dimension_numbers = #tpu.dot_dimension_numbers<[1], [0], [0], [1], [0, 0, 1, 1], [], []>} : vector<4x11xf32>, vector<11x352xf32>, vector<4x352xf32> -> vector<4x352xf32>
    %c1_75 = arith.constant 1 : index
    %c0_76 = arith.constant 0 : index
    %c0_77 = arith.constant 0 : index
    %74 = vector.load %arg6[%c1_75, %c0_76, %c0_77] : memref<4x352x256xf32, #tpu.memory_space<vmem>>, vector<1x352x256xf32>
    %75 = vector.shape_cast %74 : vector<1x352x256xf32> to vector<352x256xf32>
    %cst_78 = arith.constant dense<0.000000e+00> : vector<4x256xf32>
    %76 = tpu.matmul %73, %75, %cst_78 {dimension_numbers = #tpu.dot_dimension_numbers<[1], [0], [0], [1], [0, 0, 1, 1], [], []>} : vector<4x352xf32>, vector<352x256xf32>, vector<4x256xf32> -> vector<4x256xf32>
    %77 = arith.addf %70, %76 : vector<4x256xf32>
    %c2_79 = arith.constant 2 : index
    %c0_80 = arith.constant 0 : index
    %c0_81 = arith.constant 0 : index
    %78 = vector.load %arg5[%c2_79, %c0_80, %c0_81] : memref<4x4x11xf32, #tpu.memory_space<vmem>>, vector<1x4x11xf32>
    %79 = vector.shape_cast %78 : vector<1x4x11xf32> to vector<4x11xf32>
    %cst_82 = arith.constant dense<0.000000e+00> : vector<4x352xf32>
    %80 = tpu.matmul %79, %62, %cst_82 {dimension_numbers = #tpu.dot_dimension_numbers<[1], [0], [0], [1], [0, 0, 1, 1], [], []>} : vector<4x11xf32>, vector<11x352xf32>, vector<4x352xf32> -> vector<4x352xf32>
    %c2_83 = arith.constant 2 : index
    %c0_84 = arith.constant 0 : index
    %c0_85 = arith.constant 0 : index
    %81 = vector.load %arg6[%c2_83, %c0_84, %c0_85] : memref<4x352x256xf32, #tpu.memory_space<vmem>>, vector<1x352x256xf32>
    %82 = vector.shape_cast %81 : vector<1x352x256xf32> to vector<352x256xf32>
    %cst_86 = arith.constant dense<0.000000e+00> : vector<4x256xf32>
    %83 = tpu.matmul %80, %82, %cst_86 {dimension_numbers = #tpu.dot_dimension_numbers<[1], [0], [0], [1], [0, 0, 1, 1], [], []>} : vector<4x352xf32>, vector<352x256xf32>, vector<4x256xf32> -> vector<4x256xf32>
    %84 = arith.addf %77, %83 : vector<4x256xf32>
    %c3_87 = arith.constant 3 : index
    %c0_88 = arith.constant 0 : index
    %c0_89 = arith.constant 0 : index
    %85 = vector.load %arg5[%c3_87, %c0_88, %c0_89] : memref<4x4x11xf32, #tpu.memory_space<vmem>>, vector<1x4x11xf32>
    %86 = vector.shape_cast %85 : vector<1x4x11xf32> to vector<4x11xf32>
    %cst_90 = arith.constant dense<0.000000e+00> : vector<4x352xf32>
    %87 = tpu.matmul %86, %62, %cst_90 {dimension_numbers = #tpu.dot_dimension_numbers<[1], [0], [0], [1], [0, 0, 1, 1], [], []>} : vector<4x11xf32>, vector<11x352xf32>, vector<4x352xf32> -> vector<4x352xf32>
    %c3_91 = arith.constant 3 : index
    %c0_92 = arith.constant 0 : index
    %c0_93 = arith.constant 0 : index
    %88 = vector.load %arg6[%c3_91, %c0_92, %c0_93] : memref<4x352x256xf32, #tpu.memory_space<vmem>>, vector<1x352x256xf32>
    %89 = vector.shape_cast %88 : vector<1x352x256xf32> to vector<352x256xf32>
    %cst_94 = arith.constant dense<0.000000e+00> : vector<4x256xf32>
    %90 = tpu.matmul %87, %89, %cst_94 {dimension_numbers = #tpu.dot_dimension_numbers<[1], [0], [0], [1], [0, 0, 1, 1], [], []>} : vector<4x352xf32>, vector<352x256xf32>, vector<4x256xf32> -> vector<4x256xf32>
    %91 = arith.addf %84, %90 : vector<4x256xf32>
    %c0_95 = arith.constant 0 : index
    %c0_96 = arith.constant 0 : index
    %92 = vector.load %arg7[%c0_95, %c0_96] : memref<1x256xf32, #tpu.memory_space<vmem>>, vector<1x256xf32>
    %93 = vector.broadcast %92 : vector<1x256xf32> to vector<4x256xf32>
    %94 = arith.addf %91, %93 : vector<4x256xf32>
    %cst_97 = arith.constant 0.000000e+00 : f32
    %95 = vector.broadcast %cst_97 : f32 to vector<4x256xf32>
    %96 = arith.maximumf %94, %95 : vector<4x256xf32>
    %cst_98 = arith.constant 0.000000e+00 : f32
    %97 = vector.broadcast %cst_98 : f32 to vector<2x64xf32>
    %c0_99 = arith.constant 0 : index
    %c0_100 = arith.constant 0 : index
    %c0_101 = arith.constant 0 : index
    %98 = vector.load %arg8[%c0_99, %c0_100, %c0_101] : memref<3x2x4xf32, #tpu.memory_space<vmem>>, vector<1x2x4xf32>
    %99 = vector.shape_cast %98 : vector<1x2x4xf32> to vector<2x4xf32>
    %cst_102 = arith.constant dense<0.000000e+00> : vector<2x256xf32>
    %100 = tpu.matmul %99, %96, %cst_102 {dimension_numbers = #tpu.dot_dimension_numbers<[1], [0], [0], [1], [0, 0, 1, 1], [], []>} : vector<2x4xf32>, vector<4x256xf32>, vector<2x256xf32> -> vector<2x256xf32>
    %c0_103 = arith.constant 0 : index
    %c0_104 = arith.constant 0 : index
    %c0_105 = arith.constant 0 : index
    %101 = vector.load %arg9[%c0_103, %c0_104, %c0_105] : memref<3x256x64xf32, #tpu.memory_space<vmem>>, vector<1x256x64xf32>
    %102 = vector.shape_cast %101 : vector<1x256x64xf32> to vector<256x64xf32>
    %cst_106 = arith.constant dense<0.000000e+00> : vector<2x64xf32>
    %103 = tpu.matmul %100, %102, %cst_106 {dimension_numbers = #tpu.dot_dimension_numbers<[1], [0], [0], [1], [0, 0, 1, 1], [], []>} : vector<2x256xf32>, vector<256x64xf32>, vector<2x64xf32> -> vector<2x64xf32>
    %104 = arith.addf %97, %103 : vector<2x64xf32>
    %c1_107 = arith.constant 1 : index
    %c0_108 = arith.constant 0 : index
    %c0_109 = arith.constant 0 : index
    %105 = vector.load %arg8[%c1_107, %c0_108, %c0_109] : memref<3x2x4xf32, #tpu.memory_space<vmem>>, vector<1x2x4xf32>
    %106 = vector.shape_cast %105 : vector<1x2x4xf32> to vector<2x4xf32>
    %cst_110 = arith.constant dense<0.000000e+00> : vector<2x256xf32>
    %107 = tpu.matmul %106, %96, %cst_110 {dimension_numbers = #tpu.dot_dimension_numbers<[1], [0], [0], [1], [0, 0, 1, 1], [], []>} : vector<2x4xf32>, vector<4x256xf32>, vector<2x256xf32> -> vector<2x256xf32>
    %c1_111 = arith.constant 1 : index
    %c0_112 = arith.constant 0 : index
    %c0_113 = arith.constant 0 : index
    %108 = vector.load %arg9[%c1_111, %c0_112, %c0_113] : memref<3x256x64xf32, #tpu.memory_space<vmem>>, vector<1x256x64xf32>
    %109 = vector.shape_cast %108 : vector<1x256x64xf32> to vector<256x64xf32>
    %cst_114 = arith.constant dense<0.000000e+00> : vector<2x64xf32>
    %110 = tpu.matmul %107, %109, %cst_114 {dimension_numbers = #tpu.dot_dimension_numbers<[1], [0], [0], [1], [0, 0, 1, 1], [], []>} : vector<2x256xf32>, vector<256x64xf32>, vector<2x64xf32> -> vector<2x64xf32>
    %111 = arith.addf %104, %110 : vector<2x64xf32>
    %c2_115 = arith.constant 2 : index
    %c0_116 = arith.constant 0 : index
    %c0_117 = arith.constant 0 : index
    %112 = vector.load %arg8[%c2_115, %c0_116, %c0_117] : memref<3x2x4xf32, #tpu.memory_space<vmem>>, vector<1x2x4xf32>
    %113 = vector.shape_cast %112 : vector<1x2x4xf32> to vector<2x4xf32>
    %cst_118 = arith.constant dense<0.000000e+00> : vector<2x256xf32>
    %114 = tpu.matmul %113, %96, %cst_118 {dimension_numbers = #tpu.dot_dimension_numbers<[1], [0], [0], [1], [0, 0, 1, 1], [], []>} : vector<2x4xf32>, vector<4x256xf32>, vector<2x256xf32> -> vector<2x256xf32>
    %c2_119 = arith.constant 2 : index
    %c0_120 = arith.constant 0 : index
    %c0_121 = arith.constant 0 : index
    %115 = vector.load %arg9[%c2_119, %c0_120, %c0_121] : memref<3x256x64xf32, #tpu.memory_space<vmem>>, vector<1x256x64xf32>
    %116 = vector.shape_cast %115 : vector<1x256x64xf32> to vector<256x64xf32>
    %cst_122 = arith.constant dense<0.000000e+00> : vector<2x64xf32>
    %117 = tpu.matmul %114, %116, %cst_122 {dimension_numbers = #tpu.dot_dimension_numbers<[1], [0], [0], [1], [0, 0, 1, 1], [], []>} : vector<2x256xf32>, vector<256x64xf32>, vector<2x64xf32> -> vector<2x64xf32>
    %118 = arith.addf %111, %117 : vector<2x64xf32>
    %c0_123 = arith.constant 0 : index
    %c0_124 = arith.constant 0 : index
    %119 = vector.load %arg10[%c0_123, %c0_124] : memref<1x64xf32, #tpu.memory_space<vmem>>, vector<1x64xf32>
    %120 = vector.broadcast %119 : vector<1x64xf32> to vector<2x64xf32>
    %121 = arith.addf %118, %120 : vector<2x64xf32>
    %cst_125 = arith.constant 0.000000e+00 : f32
    %122 = vector.broadcast %cst_125 : f32 to vector<2x64xf32>
    %123 = arith.maximumf %121, %122 : vector<2x64xf32>
    %c0_126 = arith.constant 0 : index
    %c0_127 = arith.constant 0 : index
    %c0_128 = arith.constant 0 : index
    %124 = vector.load %arg11[%c0_126, %c0_127, %c0_128] : memref<1x2x64xf32, #tpu.memory_space<vmem>>, vector<1x2x64xf32>
    %125 = vector.shape_cast %124 : vector<1x2x64xf32> to vector<2x64xf32>
    %126 = vector.shape_cast %123 : vector<2x64xf32> to vector<1x2x64xf32>
    tpu.vector_store %arg11[%c0_126, %c0_127, %c0_128], %126 {strides = array<i32>} : memref<1x2x64xf32, #tpu.memory_space<vmem>>, vector<1x2x64xf32>,
    return
  }
  func.func @transform_0(%arg0: i32) -> (i32, i32, i32) {
    %c0_i32 = arith.constant 0 : i32
    %c0_i32_0 = arith.constant 0 : i32
    %c0_i32_1 = arith.constant 0 : i32
    return %arg0, %c0_i32, %c0_i32_0 : i32, i32, i32
  }
  func.func @transform_1(%arg0: i32) -> (i32, i32, i32) {
    %c0_i32 = arith.constant 0 : i32
    %c0_i32_0 = arith.constant 0 : i32
    %c0_i32_1 = arith.constant 0 : i32
    %c0_i32_2 = arith.constant 0 : i32
    return %c0_i32, %c0_i32_0, %c0_i32_1 : i32, i32, i32
  }
  func.func @transform_2(%arg0: i32) -> (i32, i32, i32) {
    %c0_i32 = arith.constant 0 : i32
    %c0_i32_0 = arith.constant 0 : i32
    %c0_i32_1 = arith.constant 0 : i32
    %c0_i32_2 = arith.constant 0 : i32
    return %c0_i32, %c0_i32_0, %c0_i32_1 : i32, i32, i32
  }
  func.func @transform_3(%arg0: i32) -> (i32, i32) {
    %c0_i32 = arith.constant 0 : i32
    %c0_i32_0 = arith.constant 0 : i32
    %c0_i32_1 = arith.constant 0 : i32
    return %c0_i32, %c0_i32_0 : i32, i32
  }
  func.func @transform_4(%arg0: i32) -> (i32, i32, i32) {
    %c0_i32 = arith.constant 0 : i32
    %c0_i32_0 = arith.constant 0 : i32
    %c0_i32_1 = arith.constant 0 : i32
    %c0_i32_2 = arith.constant 0 : i32
    return %c0_i32, %c0_i32_0, %c0_i32_1 : i32, i32, i32
  }
  func.func @transform_5(%arg0: i32) -> (i32, i32, i32) {
    %c0_i32 = arith.constant 0 : i32
    %c0_i32_0 = arith.constant 0 : i32
    %c0_i32_1 = arith.constant 0 : i32
    %c0_i32_2 = arith.constant 0 : i32
    return %c0_i32, %c0_i32_0, %c0_i32_1 : i32, i32, i32
  }
  func.func @transform_6(%arg0: i32) -> (i32, i32) {
    %c0_i32 = arith.constant 0 : i32
    %c0_i32_0 = arith.constant 0 : i32
    %c0_i32_1 = arith.constant 0 : i32
    return %c0_i32, %c0_i32_0 : i32, i32
  }
  func.func @transform_7(%arg0: i32) -> (i32, i32, i32) {
    %c0_i32 = arith.constant 0 : i32
    %c0_i32_0 = arith.constant 0 : i32
    %c0_i32_1 = arith.constant 0 : i32
    %c0_i32_2 = arith.constant 0 : i32
    return %c0_i32, %c0_i32_0, %c0_i32_1 : i32, i32, i32
  }
  func.func @transform_8(%arg0: i32) -> (i32, i32, i32) {
    %c0_i32 = arith.constant 0 : i32
    %c0_i32_0 = arith.constant 0 : i32
    %c0_i32_1 = arith.constant 0 : i32
    %c0_i32_2 = arith.constant 0 : i32
    return %c0_i32, %c0_i32_0, %c0_i32_1 : i32, i32, i32
  }
  func.func @transform_9(%arg0: i32) -> (i32, i32) {
    %c0_i32 = arith.constant 0 : i32
    %c0_i32_0 = arith.constant 0 : i32
    %c0_i32_1 = arith.constant 0 : i32
    return %c0_i32, %c0_i32_0 : i32, i32
  }
  func.func @transform_10(%arg0: i32) -> (i32, i32, i32) {
    %c0_i32 = arith.constant 0 : i32
    %c0_i32_0 = arith.constant 0 : i32
    %c0_i32_1 = arith.constant 0 : i32
    return %arg0, %c0_i32, %c0_i32_0 : i32, i32, i32
  }
}

</mosaic_0001>

<llo_original>
// kernel: _lambda_.1
$region0: #{_lambda_.1}
  #allocation0 [shape = 'u32[]', space=smem, size = 0x4, offset = 0x4, fixed_abs, tag = 'smem constant byte address 0x4 - core index']
  #allocation1 [shape = 'u32[72,128]{1,0:T(1,128)}', space=vmem, size = 0x9000, scoped, tag = 'internal scratch']
  %s0 = inlined_call_operand.vmem [shape: f32[2,38,114], index: 0, kind: input, shape index: {}]
  %s1 = inlined_call_operand.hbm [shape: f32[8,11,38], index: 1, kind: input, shape index: {}]
  %s2 = inlined_call_operand.hbm [shape: f32[8,114,352], index: 2, kind: input, shape index: {}]
  %s3 = inlined_call_operand.hbm [shape: f32[11,352], index: 3, kind: input, shape index: {}]
  %s4 = inlined_call_operand.hbm [shape: f32[4,4,11], index: 4, kind: input, shape index: {}]
  %s5 = inlined_call_operand.hbm [shape: f32[4,352,256], index: 5, kind: input, shape index: {}]
  %s6 = inlined_call_operand.vmem [shape: f32[1,256], index: 6, kind: input, shape index: {}]
  %s7 = inlined_call_operand.hbm [shape: f32[3,2,4], index: 7, kind: input, shape index: {}]
  %s8 = inlined_call_operand.hbm [shape: f32[3,256,64], index: 8, kind: input, shape index: {}]
  %s9 = inlined_call_operand.vmem [shape: f32[1,64], index: 9, kind: input, shape index: {}]
  %s10 = inlined_call_operand.vmem [shape: f32[2,2,64], index: 10, kind: output, shape index: {}]
  %s11 = sld [smem:[#allocation0]]
  $region101: #{_lambda_.1} parent=0
    _
  %s13 = ssub.s32 1, %s11
  %s14 = scalar_select 0, %s13, %s11
  $region1: #{_lambda_.1} parent=0
    #allocation2 [shape = 'u8[65536]{0}', space=vmem, size = 0x10000, scoped, tag = 'input window, operand 1, single buffered']
    #allocation3 [shape = 's32[2]{0}', space=sflag, size = 0x8, scoped, tag = 'scoped memory for _lambda_.1']
    #allocation4 [shape = 'u8[1474560]{0}', space=vmem, size = 0x168000, scoped, tag = 'input window, operand 2, single buffered']
    #allocation5 [shape = 's32[1]{0}', space=sflag, size = 0x4, scoped, tag = 'scoped memory for _lambda_.1']
    #allocation6 [shape = 'u8[24576]{0}', space=vmem, size = 0x6000, scoped, tag = 'input window, operand 3, single buffered']
    #allocation7 [shape = 'u8[8192]{0}', space=vmem, size = 0x2000, scoped, tag = 'input window, operand 4, single buffered']
    #allocation8 [shape = 's32[1]{0}', space=sflag, size = 0x4, scoped, tag = 'scoped memory for _lambda_.1']
    #allocation9 [shape = 'u8[1441792]{0}', space=vmem, size = 0x160000, scoped, tag = 'input window, operand 5, single buffered']
    #allocation10 [shape = 'u8[3072]{0}', space=vmem, size = 0xc00, scoped, tag = 'input window, operand 7, single buffered']
    #allocation11 [shape = 's32[1]{0}', space=sflag, size = 0x4, scoped, tag = 'scoped memory for _lambda_.1']
    #allocation12 [shape = 'u8[393216]{0}', space=vmem, size = 0x60000, scoped, tag = 'input window, operand 8, single buffered']
    %15 = vsyncpa [#allocation3], 0
    %16 = vsyncpa [#allocation5], 0
    %17 = vsyncpa [#allocation8], 0
    %18 = vsyncpa [#allocation11], 0
    loop: start=0, step=1, limit=4
    $region2: #{_lambda_.1} parent=1 // loop_pre_header
      _
    $region3: #{_lambda_.1} parent=1 // loop_header
      %s20 = sphi 0, %s24
      %p21 = scmp.ge.s32.totalorder %s20, 4
      %s30 = sphi 0, %s32
      %s33 = sphi 0, %s30
      %s34 = sphi 0, %s33
      %s50 = sphi 0, %s34
      %s54 = sphi 0, %s54
      %s56 = sphi 0, %s54
      %s57 = sphi 0, %s56
      %s71 = sphi 0, %s57
      %s75 = sphi 0, %s75
      %s77 = sphi 0, %s75
      %s78 = sphi 0, %s77
      %s92 = sphi 0, %s78
      %s96 = sphi 0, %s96
      %s98 = sphi 0, %s96
      %s99 = sphi 0, %s98
      %s113 = sphi 0, %s99
      %s117 = sphi 0, %s117
      %s119 = sphi 0, %s117
      %s120 = sphi 0, %s119
      %s134 = sphi 0, %s120
      %s138 = sphi 0, %s138
      %s140 = sphi 0, %s138
      %s141 = sphi 0, %s140
      %s155 = sphi 0, %s141
      %s159 = sphi 0, %s159
      %s161 = sphi 0, %s159
      %s162 = sphi 0, %s161
      %s176 = sphi 0, %s162
      %s180 = sphi 0, %s180
      %s182 = sphi 0, %s180
      %s183 = sphi 0, %s182
      %s197 = sphi 0, %s183
      %s201 = sphi 0, %s201
      %s203 = sphi 0, %s201
      %s204 = sphi 0, %s203
      %s218 = sphi 0, %s204
      %s222 = sphi 0, %s222
      %s224 = sphi 0, %s222
      %s225 = sphi 0, %s224
      %s239 = sphi 0, %s225
      %s245 = sphi 0, %s247
      %s248 = sphi 0, %s245
      %s249 = sphi 0, %s248
      %s265 = sphi 0, %s249
    $region4: #{_lambda_.1} parent=1 // loop_header_branch
      %23 = sbr.rel (%p21) target = $region8
    $region5: #{_lambda_.1} parent=1 // loop_body
      %s25 = ssub.s32 %s20, 1
      %s26 = ssub.s32 %s20, 2
      %s27 = sadd.s32 %s20, 1
      %s28 = ssub.s32 %s20, %s27
      %p29 = scmp.eq.s32.totalorder %s28, 0
      %s31 = sadd.s32 %s30, 1
      %s32 = scalar_select %p29, %s30, %s31
      %p35 = pneg %p29
      %p36 = scmp.eq.s32.totalorder %s20, 1
      %p37 = por %p35, %p36
      %p38 = scmp.ne.s32.totalorder %s30, %s33
      %p39 = scmp.eq.s32.totalorder %s20, 0
      %p40 = por %p38, %p39
      %p41 = scmp.ne.s32.totalorder %s30, %s33
      %p42 = scmp.eq.s32.totalorder %s25, 1
      %p43 = por %p41, %p42
      %p44 = scmp.ne.s32.totalorder %s33, %s34
      %p45 = scmp.eq.s32.totalorder %s25, 0
      %p46 = por %p44, %p45
      %p47 = scmp.ne.s32.totalorder %s33, %s34
      %p48 = scmp.eq.s32.totalorder %s26, 1
      %p49 = por %p47, %p48
      %p51 = scmp.ne.s32.totalorder %s34, %s50
      %p52 = scmp.eq.s32.totalorder %s26, 0
      %p53 = por %p51, %p52
      %s55 = sadd.s32 %s54, 1
      %p58 = scmp.eq.s32.totalorder %s20, 1
      %p59 = scmp.ne.s32.totalorder %s54, %s56
      %p60 = scmp.eq.s32.totalorder %s20, 0
      %p61 = por %p59, %p60
      %p62 = scmp.ne.s32.totalorder %s54, %s56
      %p63 = scmp.eq.s32.totalorder %s25, 1
      %p64 = por %p62, %p63
      %p65 = scmp.ne.s32.totalorder %s56, %s57
      %p66 = scmp.eq.s32.totalorder %s25, 0
      %p67 = por %p65, %p66
      %p68 = scmp.ne.s32.totalorder %s56, %s57
      %p69 = scmp.eq.s32.totalorder %s26, 1
      %p70 = por %p68, %p69
      %p72 = scmp.ne.s32.totalorder %s57, %s71
      %p73 = scmp.eq.s32.totalorder %s26, 0
      %p74 = por %p72, %p73
      %s76 = sadd.s32 %s75, 1
      %p79 = scmp.eq.s32.totalorder %s20, 1
      %p80 = scmp.ne.s32.totalorder %s75, %s77
      %p81 = scmp.eq.s32.totalorder %s20, 0
      %p82 = por %p80, %p81
      %p83 = scmp.ne.s32.totalorder %s75, %s77
      %p84 = scmp.eq.s32.totalorder %s25, 1
      %p85 = por %p83, %p84
      %p86 = scmp.ne.s32.totalorder %s77, %s78
      %p87 = scmp.eq.s32.totalorder %s25, 0
      %p88 = por %p86, %p87
      %p89 = scmp.ne.s32.totalorder %s77, %s78
      %p90 = scmp.eq.s32.totalorder %s26, 1
      %p91 = por %p89, %p90
      %p93 = scmp.ne.s32.totalorder %s78, %s92
      %p94 = scmp.eq.s32.totalorder %s26, 0
      %p95 = por %p93, %p94
      %s97 = sadd.s32 %s96, 1
      %p100 = scmp.eq.s32.totalorder %s20, 1
      %p101 = scmp.ne.s32.totalorder %s96, %s98
      %p102 = scmp.eq.s32.totalorder %s20, 0
      %p103 = por %p101, %p102
      %p104 = scmp.ne.s32.totalorder %s96, %s98
      %p105 = scmp.eq.s32.totalorder %s25, 1
      %p106 = por %p104, %p105
      %p107 = scmp.ne.s32.totalorder %s98, %s99
      %p108 = scmp.eq.s32.totalorder %s25, 0
      %p109 = por %p107, %p108
      %p110 = scmp.ne.s32.totalorder %s98, %s99
      %p111 = scmp.eq.s32.totalorder %s26, 1
      %p112 = por %p110, %p111
      %p114 = scmp.ne.s32.totalorder %s99, %s113
      %p115 = scmp.eq.s32.totalorder %s26, 0
      %p116 = por %p114, %p115
      %s118 = sadd.s32 %s117, 1
      %p121 = scmp.eq.s32.totalorder %s20, 1
      %p122 = scmp.ne.s32.totalorder %s117, %s119
      %p123 = scmp.eq.s32.totalorder %s20, 0
      %p124 = por %p122, %p123
      %p125 = scmp.ne.s32.totalorder %s117, %s119
      %p126 = scmp.eq.s32.totalorder %s25, 1
      %p127 = por %p125, %p126
      %p128 = scmp.ne.s32.totalorder %s119, %s120
      %p129 = scmp.eq.s32.totalorder %s25, 0
      %p130 = por %p128, %p129
      %p131 = scmp.ne.s32.totalorder %s119, %s120
      %p132 = scmp.eq.s32.totalorder %s26, 1
      %p133 = por %p131, %p132
      %p135 = scmp.ne.s32.totalorder %s120, %s134
      %p136 = scmp.eq.s32.totalorder %s26, 0
      %p137 = por %p135, %p136
      %s139 = sadd.s32 %s138, 1
      %p142 = scmp.eq.s32.totalorder %s20, 1
      %p143 = scmp.ne.s32.totalorder %s138, %s140
      %p144 = scmp.eq.s32.totalorder %s20, 0
      %p145 = por %p143, %p144
      %p146 = scmp.ne.s32.totalorder %s138, %s140
      %p147 = scmp.eq.s32.totalorder %s25, 1
      %p148 = por %p146, %p147
      %p149 = scmp.ne.s32.totalorder %s140, %s141
      %p150 = scmp.eq.s32.totalorder %s25, 0
      %p151 = por %p149, %p150
      %p152 = scmp.ne.s32.totalorder %s140, %s141
      %p153 = scmp.eq.s32.totalorder %s26, 1
      %p154 = por %p152, %p153
      %p156 = scmp.ne.s32.totalorder %s141, %s155
      %p157 = scmp.eq.s32.totalorder %s26, 0
      %p158 = por %p156, %p157
      %s160 = sadd.s32 %s159, 1
      %p163 = scmp.eq.s32.totalorder %s20, 1
      %p164 = scmp.ne.s32.totalorder %s159, %s161
      %p165 = scmp.eq.s32.totalorder %s20, 0
      %p166 = por %p164, %p165
      %p167 = scmp.ne.s32.totalorder %s159, %s161
      %p168 = scmp.eq.s32.totalorder %s25, 1
      %p169 = por %p167, %p168
      %p170 = scmp.ne.s32.totalorder %s161, %s162
      %p171 = scmp.eq.s32.totalorder %s25, 0
      %p172 = por %p170, %p171
      %p173 = scmp.ne.s32.totalorder %s161, %s162
      %p174 = scmp.eq.s32.totalorder %s26, 1
      %p175 = por %p173, %p174
      %p177 = scmp.ne.s32.totalorder %s162, %s176
      %p178 = scmp.eq.s32.totalorder %s26, 0
      %p179 = por %p177, %p178
      %s181 = sadd.s32 %s180, 1
      %p184 = scmp.eq.s32.totalorder %s20, 1
      %p185 = scmp.ne.s32.totalorder %s180, %s182
      %p186 = scmp.eq.s32.totalorder %s20, 0
      %p187 = por %p185, %p186
      %p188 = scmp.ne.s32.totalorder %s180, %s182
      %p189 = scmp.eq.s32.totalorder %s25, 1
      %p190 = por %p188, %p189
      %p191 = scmp.ne.s32.totalorder %s182, %s183
      %p192 = scmp.eq.s32.totalorder %s25, 0
      %p193 = por %p191, %p192
      %p194 = scmp.ne.s32.totalorder %s182, %s183
      %p195 = scmp.eq.s32.totalorder %s26, 1
      %p196 = por %p194, %p195
      %p198 = scmp.ne.s32.totalorder %s183, %s197
      %p199 = scmp.eq.s32.totalorder %s26, 0
      %p200 = por %p198, %p199
      %s202 = sadd.s32 %s201, 1
      %p205 = scmp.eq.s32.totalorder %s20, 1
      %p206 = scmp.ne.s32.totalorder %s201, %s203
      %p207 = scmp.eq.s32.totalorder %s20, 0
      %p208 = por %p206, %p207
      %p209 = scmp.ne.s32.totalorder %s201, %s203
      %p210 = scmp.eq.s32.totalorder %s25, 1
      %p211 = por %p209, %p210
      %p212 = scmp.ne.s32.totalorder %s203, %s204
      %p213 = scmp.eq.s32.totalorder %s25, 0
      %p214 = por %p212, %p213
      %p215 = scmp.ne.s32.totalorder %s203, %s204
      %p216 = scmp.eq.s32.totalorder %s26, 1
      %p217 = por %p215, %p216
      %p219 = scmp.ne.s32.totalorder %s204, %s218
      %p220 = scmp.eq.s32.totalorder %s26, 0
      %p221 = por %p219, %p220
      %s223 = sadd.s32 %s222, 1
      %p226 = scmp.eq.s32.totalorder %s20, 1
      %p227 = scmp.ne.s32.totalorder %s222, %s224
      %p228 = scmp.eq.s32.totalorder %s20, 0
      %p229 = por %p227, %p228
      %p230 = scmp.ne.s32.totalorder %s222, %s224
      %p231 = scmp.eq.s32.totalorder %s25, 1
      %p232 = por %p230, %p231
      %p233 = scmp.ne.s32.totalorder %s224, %s225
      %p234 = scmp.eq.s32.totalorder %s25, 0
      %p235 = por %p233, %p234
      %p236 = scmp.ne.s32.totalorder %s224, %s225
      %p237 = scmp.eq.s32.totalorder %s26, 1
      %p238 = por %p236, %p237
      %p240 = scmp.ne.s32.totalorder %s225, %s239
      %p241 = scmp.eq.s32.totalorder %s26, 0
      %p242 = por %p240, %p241
      %s243 = ssub.s32 %s20, %s27
      %p244 = scmp.eq.s32.totalorder %s243, 0
      %s246 = sadd.s32 %s245, 1
      %s247 = scalar_select %p244, %s245, %s246
      %p250 = pneg %p244
      %p251 = scmp.eq.s32.totalorder %s20, 1
      %p252 = por %p250, %p251
      %p253 = scmp.ne.s32.totalorder %s245, %s248
      %p254 = scmp.eq.s32.totalorder %s20, 0
      %p255 = por %p253, %p254
      %p256 = scmp.ne.s32.totalorder %s245, %s248
      %p257 = scmp.eq.s32.totalorder %s25, 1
      %p258 = por %p256, %p257
      %p259 = scmp.ne.s32.totalorder %s248, %s249
      %p260 = scmp.eq.s32.totalorder %s25, 0
      %p261 = por %p259, %p260
      %p262 = scmp.ne.s32.totalorder %s248, %s249
      %p263 = scmp.eq.s32.totalorder %s26, 1
      %p264 = por %p262, %p263
      %p266 = scmp.ne.s32.totalorder %s249, %s265
      %p267 = scmp.eq.s32.totalorder %s26, 0
      %p268 = por %p266, %p267
      %p269 = scmp.le.s32.totalorder 1, %s20
      %p270 = scmp.lt.s32.totalorder %s20, 3
      %p271 = pnand %p269, %p270
      %p272 = pneg %p271
      // Predicated region
      $region9: #{_lambda_.1} parent=5 // pred_check
        _
      $region10: #{_lambda_.1} parent=5 // pred_check_branch
        %274 = sbr.rel (%p271) target = $region12
      $region11: #{_lambda_.1} parent=5 // pred_region
        %s275 = ssub.s32 %s20, 1
        // Predicated region
        $region13: #{_lambda_.1} parent=11 // pred_check
          %p276 = pneg %p67
        $region14: #{_lambda_.1} parent=11 // pred_check_branch
          %278 = sbr.rel (%p276) target = $region16
        $region15: #{_lambda_.1} parent=11 // pred_region
          %280 = vsyncadd [#allocation3], 0
          %s281 = sshll.u32 %s1, 4
          %s282 = int_to_ptr.hbm [resolvable:$true] %s281
          %s283 = sshll.u32 [#allocation2], 4
          %s284 = int_to_ptr.vmem [resolvable:$true] %s283
          %289 = dma.hbm_to_vmem [thread:$0]  %s282, 2048, %s284, [#allocation3], 128, 128, 8
        $region16: #{_lambda_.1} parent=11 // pred_fallthru
          _
        // Predicated region
        $region17: #{_lambda_.1} parent=11 // pred_check
          %p290 = pneg %p88
        $region18: #{_lambda_.1} parent=11 // pred_check_branch
          %292 = sbr.rel (%p290) target = $region20
        $region19: #{_lambda_.1} parent=11 // pred_region
          %294 = vsyncadd [#allocation5], 0
          %s295 = sshll.u32 %s2, 4
          %s296 = int_to_ptr.hbm [resolvable:$true] %s295
          %s297 = sshll.u32 [#allocation4], 4
          %s298 = int_to_ptr.vmem [resolvable:$true] %s297
          %303 = dma.hbm_to_vmem [thread:$0]  %s296, 46080, %s298, [#allocation5], 384, 384, 24
        $region20: #{_lambda_.1} parent=11 // pred_fallthru
          _
        // Predicated region
        $region21: #{_lambda_.1} parent=11 // pred_check
          %p304 = pneg %p109
        $region22: #{_lambda_.1} parent=11 // pred_check_branch
          %306 = sbr.rel (%p304) target = $region24
        $region23: #{_lambda_.1} parent=11 // pred_region
          %308 = vsyncadd [#allocation5], 0
          %s309 = sshll.u32 %s3, 4
          %s310 = int_to_ptr.hbm [resolvable:$true] %s309
          %s311 = sshll.u32 [#allocation6], 4
          %s312 = int_to_ptr.vmem [resolvable:$true] %s311
          %317 = dma.hbm_to_vmem [thread:$0]  %s310, 768, %s312, [#allocation5], 384, 384, 24
        $region24: #{_lambda_.1} parent=11 // pred_fallthru
          _
        // Predicated region
        $region25: #{_lambda_.1} parent=11 // pred_check
          %p318 = pneg %p130
        $region26: #{_lambda_.1} parent=11 // pred_check_branch
          %320 = sbr.rel (%p318) target = $region28
        $region27: #{_lambda_.1} parent=11 // pred_region
          %322 = vsyncadd [#allocation8], 0
          %s323 = sshll.u32 %s4, 4
          %s324 = int_to_ptr.hbm [resolvable:$true] %s323
          %s325 = sshll.u32 [#allocation7], 4
          %s326 = int_to_ptr.vmem [resolvable:$true] %s325
          %331 = dma.hbm_to_vmem [thread:$0]  %s324, 256, %s326, [#allocation8], 64, 64, 4
        $region28: #{_lambda_.1} parent=11 // pred_fallthru
          _
        // Predicated region
        $region29: #{_lambda_.1} parent=11 // pred_check
          %p332 = pneg %p151
        $region30: #{_lambda_.1} parent=11 // pred_check_branch
          %334 = sbr.rel (%p332) target = $region32
        $region31: #{_lambda_.1} parent=11 // pred_region
          %336 = vsyncadd [#allocation8], 0
          %s337 = sshll.u32 %s5, 4
          %s338 = int_to_ptr.hbm [resolvable:$true] %s337
          %s339 = sshll.u32 [#allocation9], 4
          %s340 = int_to_ptr.vmem [resolvable:$true] %s339
          %345 = dma.hbm_to_vmem [thread:$0]  %s338, 45056, %s340, [#allocation8], 256, 256, 16
        $region32: #{_lambda_.1} parent=11 // pred_fallthru
          _
        // Predicated region
        $region33: #{_lambda_.1} parent=11 // pred_check
          %p346 = pneg %p172
        $region34: #{_lambda_.1} parent=11 // pred_check_branch
          %348 = sbr.rel (%p346) target = $region36
        $region35: #{_lambda_.1} parent=11 // pred_region
          _
        $region36: #{_lambda_.1} parent=11 // pred_fallthru
          _
        // Predicated region
        $region37: #{_lambda_.1} parent=11 // pred_check
          %p349 = pneg %p193
        $region38: #{_lambda_.1} parent=11 // pred_check_branch
          %351 = sbr.rel (%p349) target = $region40
        $region39: #{_lambda_.1} parent=11 // pred_region
          %353 = vsyncadd [#allocation11], 0
          %s354 = sshll.u32 %s7, 4
          %s355 = int_to_ptr.hbm [resolvable:$true] %s354
          %s356 = sshll.u32 [#allocation10], 4
          %s357 = int_to_ptr.vmem [resolvable:$true] %s356
          %362 = dma.hbm_to_vmem [thread:$0]  %s355, 96, %s357, [#allocation11], 32, 32, 2
        $region40: #{_lambda_.1} parent=11 // pred_fallthru
          _
        // Predicated region
        $region41: #{_lambda_.1} parent=11 // pred_check
          %p363 = pneg %p214
        $region42: #{_lambda_.1} parent=11 // pred_check_branch
          %365 = sbr.rel (%p363) target = $region44
        $region43: #{_lambda_.1} parent=11 // pred_region
          %367 = vsyncadd [#allocation11], 0
          %s368 = sshll.u32 %s8, 4
          %s369 = int_to_ptr.hbm [resolvable:$true] %s368
          %s370 = sshll.u32 [#allocation12], 4
          %s371 = int_to_ptr.vmem [resolvable:$true] %s370
          %376 = dma.hbm_to_vmem [thread:$0]  %s369, 12288, %s371, [#allocation11], 128, 128, 8
        $region44: #{_lambda_.1} parent=11 // pred_fallthru
          _
        // Predicated region
        $region45: #{_lambda_.1} parent=11 // pred_check
          %p377 = pneg %p235
        $region46: #{_lambda_.1} parent=11 // pred_check_branch
          %379 = sbr.rel (%p377) target = $region48
        $region47: #{_lambda_.1} parent=11 // pred_region
          _
        $region48: #{_lambda_.1} parent=11 // pred_fallthru
          _
      $region12: #{_lambda_.1} parent=5 // pred_fallthru
        _
      %p380 = scmp.lt.s32.totalorder %s20, 2
      // Predicated region
      $region49: #{_lambda_.1} parent=5 // pred_check
        %p381 = pneg %p380
      $region50: #{_lambda_.1} parent=5 // pred_check_branch
        %383 = sbr.rel (%p381) target = $region52
      $region51: #{_lambda_.1} parent=5 // pred_region
        // Predicated region
        $region53: #{_lambda_.1} parent=51 // pred_check
          %p384 = pneg %p40
        $region54: #{_lambda_.1} parent=51 // pred_check_branch
          %386 = sbr.rel (%p384) target = $region56
        $region55: #{_lambda_.1} parent=51 // pred_region
          %p387 = scmp.lt.s32.totalorder %s20, 1
          %s388 = scalar_select %p387, %s20, 1
          %s389 = smul.addr %s388, 5
          %s390 = smul.addr %s389, 8
          %s391 = scalar_lea.vmem %s0, %s390
        $region56: #{_lambda_.1} parent=51 // pred_fallthru
          _
      $region52: #{_lambda_.1} parent=5 // pred_fallthru
        _
      %p392 = scmp.le.s32.totalorder 1, %s20
      %p393 = scmp.lt.s32.totalorder %s20, 3
      %p394 = pnand %p392, %p393
      %p395 = pneg %p394
      // Predicated region
      $region57: #{_lambda_.1} parent=5 // pred_check
        _
      $region58: #{_lambda_.1} parent=5 // pred_check_branch
        %397 = sbr.rel (%p394) target = $region60
      $region59: #{_lambda_.1} parent=5 // pred_region
        %s398 = ssub.s32 %s20, 1
        // Predicated region
        $region61: #{_lambda_.1} parent=59 // pred_check
          %p399 = pneg %p67
        $region62: #{_lambda_.1} parent=59 // pred_check_branch
          %401 = sbr.rel (%p399) target = $region64
        $region63: #{_lambda_.1} parent=59 // pred_region
          %403 = dma.done [#allocation3], 2048
        $region64: #{_lambda_.1} parent=59 // pred_fallthru
          _
        // Predicated region
        $region65: #{_lambda_.1} parent=59 // pred_check
          %p404 = pneg %p88
        $region66: #{_lambda_.1} parent=59 // pred_check_branch
          %406 = sbr.rel (%p404) target = $region68
        $region67: #{_lambda_.1} parent=59 // pred_region
          %408 = dma.done [#allocation5], 46080
        $region68: #{_lambda_.1} parent=59 // pred_fallthru
          _
        // Predicated region
        $region69: #{_lambda_.1} parent=59 // pred_check
          %p409 = pneg %p109
        $region70: #{_lambda_.1} parent=59 // pred_check_branch
          %411 = sbr.rel (%p409) target = $region72
        $region71: #{_lambda_.1} parent=59 // pred_region
          %413 = dma.done [#allocation5], 768
        $region72: #{_lambda_.1} parent=59 // pred_fallthru
          _
        // Predicated region
        $region73: #{_lambda_.1} parent=59 // pred_check
          %p414 = pneg %p130
        $region74: #{_lambda_.1} parent=59 // pred_check_branch
          %416 = sbr.rel (%p414) target = $region76
        $region75: #{_lambda_.1} parent=59 // pred_region
          %418 = dma.done [#allocation8], 256
        $region76: #{_lambda_.1} parent=59 // pred_fallthru
          _
        // Predicated region
        $region77: #{_lambda_.1} parent=59 // pred_check
          %p419 = pneg %p151
        $region78: #{_lambda_.1} parent=59 // pred_check_branch
          %421 = sbr.rel (%p419) target = $region80
        $region79: #{_lambda_.1} parent=59 // pred_region
          %423 = dma.done [#allocation8], 45056
        $region80: #{_lambda_.1} parent=59 // pred_fallthru
          _
        // Predicated region
        $region81: #{_lambda_.1} parent=59 // pred_check
          %p424 = pneg %p193
        $region82: #{_lambda_.1} parent=59 // pred_check_branch
          %426 = sbr.rel (%p424) target = $region84
        $region83: #{_lambda_.1} parent=59 // pred_region
          %428 = dma.done [#allocation11], 96
        $region84: #{_lambda_.1} parent=59 // pred_fallthru
          _
        // Predicated region
        $region85: #{_lambda_.1} parent=59 // pred_check
          %p429 = pneg %p214
        $region86: #{_lambda_.1} parent=59 // pred_check_branch
          %431 = sbr.rel (%p429) target = $region88
        $region87: #{_lambda_.1} parent=59 // pred_region
          %433 = dma.done [#allocation11], 12288
        $region88: #{_lambda_.1} parent=59 // pred_fallthru
          _
        %p434 = scmp.lt.s32.totalorder %s25, 1
        %s435 = scalar_select %p434, %s25, 1
        %s436 = smul.addr %s435, 5
        %s437 = smul.addr %s436, 8
        %s438 = scalar_lea.vmem %s0, %s437
        %p439 = pneg %p46
        %p440 = pneg %p43
        %p441 = pneg %p67
        %p442 = pneg %p64
        %p443 = pneg %p88
        %p444 = pneg %p85
        %p445 = pneg %p109
        %p446 = pneg %p106
        %p447 = pneg %p130
        %p448 = pneg %p127
        %p449 = pneg %p151
        %p450 = pneg %p148
        %p451 = pneg %p172
        %p452 = pneg %p169
        %p453 = pneg %p193
        %p454 = pneg %p190
        %p455 = pneg %p214
        %p456 = pneg %p211
        %p457 = pneg %p235
        %p458 = pneg %p232
        %p459 = pneg %p261
        %p460 = pneg %p258
        %p461 = scmp.lt.s32.totalorder %s25, 1
        %s462 = scalar_select %p461, %s25, 1
        %s463 = smul.addr %s462, 2
        %s464 = scalar_lea.vmem %s10, %s463
        %p465 = scmp.lt.s32.totalorder %s25, 1
        %s466 = scalar_select %p465, %s25, 1
        %s467 = smul.addr %s466, 5
        %s468 = smul.addr %s467, 8
        %s469 = scalar_lea.vmem %s0, %s468
        %p470 = scmp.lt.s32.totalorder %s25, 1
        %s471 = scalar_select %p470, %s25, 1
        %s472 = smul.addr %s471, 2
        %s473 = scalar_lea.vmem %s10, %s472
        %v474 = vld [vmem:[%s469] sm:$0xff]
        %v475 = vld [vmem:[%s469 + $0x8] sm:$0xff]
        %v476 = vld [vmem:[%s469 + $0x10] sm:$0xff]
        %v477 = vld [vmem:[%s469 + $0x18] sm:$0xff]
        %v478 = vld [vmem:[%s469 + $0x20] sm:$0x3f]
        %v479 = vld [vmem:[#allocation2] sm:$0xff]
        %v480 = vld [vmem:[#allocation2 + $0x8] sm:$0x7]
        %vm481 = vcmask 310272
        %v483 = vsel %vm481, %v479, 0
        %v486 = vsel %vm481, %v480, 0
        %vm488 = vcmask 1045504
        %v490 = vsel %vm488, %v478, 0
        %492 = vmatpush.msra.mxu0 0.0
        %493 = vmatpush.msra.mxu0 0.0
        %494 = vmatpush.msra.mxu0 0.0
        %495 = vmatpush.msra.mxu0 0.0
        %496 = vmatpush.msra.mxu0 0.0
        %497 = vmatpush.msra.mxu0 0.0
        %498 = vmatpush.msra.mxu0 0.0
        %499 = vmatpush.msra.mxu0 0.0
        %500 = vmatpush.msra.mxu0 0.0
        %501 = vmatpush.msra.mxu0 0.0
        %502 = vmatpush.msra.mxu0 0.0
        %503 = vmatpush.msra.mxu0 %v490
        %504 = vmatpush.msra.mxu0 %v477
        %505 = vmatpush.msra.mxu0 %v476
        %506 = vmatpush.msra.mxu0 %v475
        %507 = vmatpush.msra.mxu0 %v474
        %508 = vmatmul.f32.gmra.mxu0 %v483
        %v509 = vpop.f32.mrf.mxu0
        %v510 = vadd.f32 0.0, %v509
        %511 = vmatmul.f32.gmra.mxu0 %v486
        %v512 = vpop.f32.mrf.mxu0
        %v513 = vadd.f32 0.0, %v512
        %514 = vdwg.mxu0
        %v515 = vld [vmem:[#allocation4] sm:$0xff]
        %v516 = vld [vmem:[#allocation4 + $0x8] sm:$0xff]
        %v517 = vld [vmem:[#allocation4 + $0x10] sm:$0xff]
        %v518 = vld [vmem:[#allocation4 + $0x18] sm:$0xff]
        %v519 = vld [vmem:[#allocation4 + $0x20] sm:$0xff]
        %v520 = vld [vmem:[#allocation4 + $0x28] sm:$0xff]
        %v521 = vld [vmem:[#allocation4 + $0x30] sm:$0xff]
        %v522 = vld [vmem:[#allocation4 + $0x38] sm:$0xff]
        %v523 = vld [vmem:[#allocation4 + $0x40] sm:$0xff]
        %v524 = vld [vmem:[#allocation4 + $0x48] sm:$0xff]
        %v525 = vld [vmem:[#allocation4 + $0x50] sm:$0xff]
        %v526 = vld [vmem:[#allocation4 + $0x58] sm:$0xff]
        %v527 = vld [vmem:[#allocation4 + $0x60] sm:$0xff]
        %v528 = vld [vmem:[#allocation4 + $0x68] sm:$0xff]
        %v529 = vld [vmem:[#allocation4 + $0x70] sm:$0xff]
        %v530 = vld [vmem:[#allocation4 + $0x78] sm:$0xff]
        %v531 = vld [vmem:[#allocation4 + $0x80] sm:$0xff]
        %v532 = vld [vmem:[#allocation4 + $0x88] sm:$0xff]
        %v533 = vld [vmem:[#allocation4 + $0x90] sm:$0xff]
        %v534 = vld [vmem:[#allocation4 + $0x98] sm:$0xff]
        %v535 = vld [vmem:[#allocation4 + $0xa0] sm:$0xff]
        %v536 = vld [vmem:[#allocation4 + $0xa8] sm:$0xff]
        %v537 = vld [vmem:[#allocation4 + $0xb0] sm:$0xff]
        %v538 = vld [vmem:[#allocation4 + $0xb8] sm:$0xff]
        %v539 = vld [vmem:[#allocation4 + $0xc0] sm:$0xff]
        %v540 = vld [vmem:[#allocation4 + $0xc8] sm:$0xff]
        %v541 = vld [vmem:[#allocation4 + $0xd0] sm:$0xff]
        %v542 = vld [vmem:[#allocation4 + $0xd8] sm:$0xff]
        %v543 = vld [vmem:[#allocation4 + $0xe0] sm:$0xff]
        %v544 = vld [vmem:[#allocation4 + $0xe8] sm:$0xff]
        %v545 = vld [vmem:[#allocation4 + $0xf0] sm:$0xff]
        %v546 = vld [vmem:[#allocation4 + $0xf8] sm:$0xff]
        %v547 = vld [vmem:[#allocation4 + $0x100] sm:$0xff]
        %v548 = vld [vmem:[#allocation4 + $0x108] sm:$0xff]
        %v549 = vld [vmem:[#allocation4 + $0x110] sm:$0xff]
        %v550 = vld [vmem:[#allocation4 + $0x118] sm:$0xff]
        %v551 = vld [vmem:[#allocation4 + $0x120] sm:$0xff]
        %v552 = vld [vmem:[#allocation4 + $0x128] sm:$0xff]
        %v553 = vld [vmem:[#allocation4 + $0x130] sm:$0xff]
        %v554 = vld [vmem:[#allocation4 + $0x138] sm:$0xff]
        %v555 = vld [vmem:[#allocation4 + $0x140] sm:$0xff]
        %v556 = vld [vmem:[#allocation4 + $0x148] sm:$0xff]
        %v557 = vld [vmem:[#allocation4 + $0x150] sm:$0x3]
        %v558 = vld [vmem:[#allocation4 + $0x158] sm:$0x3]
        %v559 = vld [vmem:[#allocation4 + $0x160] sm:$0x3]
        %s560 = scalar_lea.vmem [#allocation2], 16
        %v561 = vld [vmem:[%s560] sm:$0xff]
        %v562 = vld [vmem:[%s560 + $0x8] sm:$0x7]
        %v564 = vsel %vm481, %v561, 0
        %v567 = vsel %vm481, %v562, 0
        %569 = vmatpush.msra.mxu0 0.0
        %570 = vmatpush.msra.mxu0 0.0
        %571 = vmatpush.msra.mxu0 0.0
        %572 = vmatpush.msra.mxu0 0.0
        %573 = vmatpush.msra.mxu0 0.0
        %574 = vmatpush.msra.mxu0 0.0
        %575 = vmatpush.msra.mxu0 0.0
        %576 = vmatpush.msra.mxu0 0.0
        %577 = vmatpush.msra.mxu0 0.0
        %578 = vmatpush.msra.mxu0 0.0
        %579 = vmatpush.msra.mxu0 0.0
        %580 = vmatpush.msra.mxu0 %v490
        %581 = vmatpush.msra.mxu0 %v477
        %582 = vmatpush.msra.mxu0 %v476
        %583 = vmatpush.msra.mxu0 %v475
        %584 = vmatpush.msra.mxu0 %v474
        %585 = vmatmul.f32.gmra.mxu0 %v564
        %v586 = vpop.f32.mrf.mxu0
        %v587 = vadd.f32 0.0, %v586
        %588 = vmatmul.f32.gmra.mxu0 %v567
        %v589 = vpop.f32.mrf.mxu0
        %v590 = vadd.f32 0.0, %v589
        %591 = vdwg.mxu0
        %s592 = scalar_lea.vmem [#allocation4], 360
        %v593 = vld [vmem:[%s592] sm:$0xff]
        %v594 = vld [vmem:[%s592 + $0x8] sm:$0xff]
        %v595 = vld [vmem:[%s592 + $0x10] sm:$0xff]
        %v596 = vld [vmem:[%s592 + $0x18] sm:$0xff]
        %v597 = vld [vmem:[%s592 + $0x20] sm:$0xff]
        %v598 = vld [vmem:[%s592 + $0x28] sm:$0xff]
        %v599 = vld [vmem:[%s592 + $0x30] sm:$0xff]
        %v600 = vld [vmem:[%s592 + $0x38] sm:$0xff]
        %v601 = vld [vmem:[%s592 + $0x40] sm:$0xff]
        %v602 = vld [vmem:[%s592 + $0x48] sm:$0xff]
        %v603 = vld [vmem:[%s592 + $0x50] sm:$0xff]
        %v604 = vld [vmem:[%s592 + $0x58] sm:$0xff]
        %v605 = vld [vmem:[%s592 + $0x60] sm:$0xff]
        %v606 = vld [vmem:[%s592 + $0x68] sm:$0xff]
        %v607 = vld [vmem:[%s592 + $0x70] sm:$0xff]
        %v608 = vld [vmem:[%s592 + $0x78] sm:$0xff]
        %v609 = vld [vmem:[%s592 + $0x80] sm:$0xff]
        %v610 = vld [vmem:[%s592 + $0x88] sm:$0xff]
        %v611 = vld [vmem:[%s592 + $0x90] sm:$0xff]
        %v612 = vld [vmem:[%s592 + $0x98] sm:$0xff]
        %v613 = vld [vmem:[%s592 + $0xa0] sm:$0xff]
        %v614 = vld [vmem:[%s592 + $0xa8] sm:$0xff]
        %v615 = vld [vmem:[%s592 + $0xb0] sm:$0xff]
        %v616 = vld [vmem:[%s592 + $0xb8] sm:$0xff]
        %v617 = vld [vmem:[%s592 + $0xc0] sm:$0xff]
        %v618 = vld [vmem:[%s592 + $0xc8] sm:$0xff]
        %v619 = vld [vmem:[%s592 + $0xd0] sm:$0xff]
        %v620 = vld [vmem:[%s592 + $0xd8] sm:$0xff]
        %v621 = vld [vmem:[%s592 + $0xe0] sm:$0xff]
        %v622 = vld [vmem:[%s592 + $0xe8] sm:$0xff]
        %v623 = vld [vmem:[%s592 + $0xf0] sm:$0xff]
        %v624 = vld [vmem:[%s592 + $0xf8] sm:$0xff]
        %v625 = vld [vmem:[%s592 + $0x100] sm:$0xff]
        %v626 = vld [vmem:[%s592 + $0x108] sm:$0xff]
        %v627 = vld [vmem:[%s592 + $0x110] sm:$0xff]
        %v628 = vld [vmem:[%s592 + $0x118] sm:$0xff]
        %v629 = vld [vmem:[%s592 + $0x120] sm:$0xff]
        %v630 = vld [vmem:[%s592 + $0x128] sm:$0xff]
        %v631 = vld [vmem:[%s592 + $0x130] sm:$0xff]
        %v632 = vld [vmem:[%s592 + $0x138] sm:$0xff]
        %v633 = vld [vmem:[%s592 + $0x140] sm:$0xff]
        %v634 = vld [vmem:[%s592 + $0x148] sm:$0xff]
        %v635 = vld [vmem:[%s592 + $0x150] sm:$0x3]
        %v636 = vld [vmem:[%s592 + $0x158] sm:$0x3]
        %v637 = vld [vmem:[%s592 + $0x160] sm:$0x3]
        %vm638 = vcmask 932864
        %v640 = vsel %vm638, %v587, 0
        %v643 = vsel %vm638, %v590, 0
        %vm645 = vcmask 1041408
        %v647 = vsel %vm645, %v635, 0
        %v650 = vsel %vm645, %v636, 0
        %v653 = vsel %vm645, %v637, 0
        %655 = vmatpush.msra.mxu0 0.0
        %656 = vmatpush.msra.mxu0 %v647
        %657 = vmatpush.msra.mxu0 %v632
        %658 = vmatpush.msra.mxu0 %v629
        %659 = vmatpush.msra.mxu0 %v626
        %660 = vmatpush.msra.mxu0 %v623
        %661 = vmatpush.msra.mxu0 %v620
        %662 = vmatpush.msra.mxu0 %v617
        %663 = vmatpush.msra.mxu0 %v614
        %664 = vmatpush.msra.mxu0 %v611
        %665 = vmatpush.msra.mxu0 %v608
        %666 = vmatpush.msra.mxu0 %v605
        %667 = vmatpush.msra.mxu0 %v602
        %668 = vmatpush.msra.mxu0 %v599
        %669 = vmatpush.msra.mxu0 %v596
        %670 = vmatpush.msra.mxu0 %v593
        %671 = vmatmul.f32.gmra.mxu0 %v640
        %v672 = vpop.f32.mrf.mxu0
        %v673 = vadd.f32 0.0, %v672
        %674 = vmatmul.f32.gmra.mxu0 %v643
        %v675 = vpop.f32.mrf.mxu0
        %v676 = vadd.f32 0.0, %v675
        %677 = vdwg.mxu0
        %678 = vmatpush.msra.mxu0 0.0
        %679 = vmatpush.msra.mxu0 %v650
        %680 = vmatpush.msra.mxu0 %v633
        %681 = vmatpush.msra.mxu0 %v630
        %682 = vmatpush.msra.mxu0 %v627
        %683 = vmatpush.msra.mxu0 %v624
        %684 = vmatpush.msra.mxu0 %v621
        %685 = vmatpush.msra.mxu0 %v618
        %686 = vmatpush.msra.mxu0 %v615
        %687 = vmatpush.msra.mxu0 %v612
        %688 = vmatpush.msra.mxu0 %v609
        %689 = vmatpush.msra.mxu0 %v606
        %690 = vmatpush.msra.mxu0 %v603
        %691 = vmatpush.msra.mxu0 %v600
        %692 = vmatpush.msra.mxu0 %v597
        %693 = vmatpush.msra.mxu0 %v594
        %694 = vmatmul.f32.gmra.mxu0 %v640
        %v695 = vpop.f32.mrf.mxu0
        %v696 = vadd.f32 0.0, %v695
        %697 = vmatmul.f32.gmra.mxu0 %v643
        %v698 = vpop.f32.mrf.mxu0
        %v699 = vadd.f32 0.0, %v698
        %700 = vdwg.mxu0
        %701 = vmatpush.msra.mxu0 0.0
        %702 = vmatpush.msra.mxu0 %v653
        %703 = vmatpush.msra.mxu0 %v634
        %704 = vmatpush.msra.mxu0 %v631
        %705 = vmatpush.msra.mxu0 %v628
        %706 = vmatpush.msra.mxu0 %v625
        %707 = vmatpush.msra.mxu0 %v622
        %708 = vmatpush.msra.mxu0 %v619
        %709 = vmatpush.msra.mxu0 %v616
        %710 = vmatpush.msra.mxu0 %v613
        %711 = vmatpush.msra.mxu0 %v610
        %712 = vmatpush.msra.mxu0 %v607
        %713 = vmatpush.msra.mxu0 %v604
        %714 = vmatpush.msra.mxu0 %v601
        %715 = vmatpush.msra.mxu0 %v598
        %716 = vmatpush.msra.mxu0 %v595
        %717 = vmatmul.f32.gmra.mxu0 %v640
        %v718 = vpop.f32.mrf.mxu0
        %v719 = vadd.f32 0.0, %v718
        %720 = vmatmul.f32.gmra.mxu0 %v643
        %v721 = vpop.f32.mrf.mxu0
        %v722 = vadd.f32 0.0, %v721
        %723 = vdwg.mxu0
        %v725 = vsel %vm638, %v510, 0
        %v728 = vsel %vm638, %v513, 0
        %v731 = vsel %vm645, %v557, 0
        %v734 = vsel %vm645, %v558, 0
        %v737 = vsel %vm645, %v559, 0
        %739 = vmatpush.msra.mxu0 0.0
        %740 = vmatpush.msra.mxu0 %v731
        %741 = vmatpush.msra.mxu0 %v554
        %742 = vmatpush.msra.mxu0 %v551
        %743 = vmatpush.msra.mxu0 %v548
        %744 = vmatpush.msra.mxu0 %v545
        %745 = vmatpush.msra.mxu0 %v542
        %746 = vmatpush.msra.mxu0 %v539
        %747 = vmatpush.msra.mxu0 %v536
        %748 = vmatpush.msra.mxu0 %v533
        %749 = vmatpush.msra.mxu0 %v530
        %750 = vmatpush.msra.mxu0 %v527
        %751 = vmatpush.msra.mxu0 %v524
        %752 = vmatpush.msra.mxu0 %v521
        %753 = vmatpush.msra.mxu0 %v518
        %754 = vmatpush.msra.mxu0 %v515
        %755 = vmatmul.f32.gmra.mxu0 %v725
        %v756 = vpop.f32.mrf.mxu0
        %v757 = vadd.f32 %v673, %v756
        %758 = vmatmul.f32.gmra.mxu0 %v728
        %v759 = vpop.f32.mrf.mxu0
        %v760 = vadd.f32 %v676, %v759
        %761 = vdwg.mxu0
        %762 = vmatpush.msra.mxu0 0.0
        %763 = vmatpush.msra.mxu0 %v734
        %764 = vmatpush.msra.mxu0 %v555
        %765 = vmatpush.msra.mxu0 %v552
        %766 = vmatpush.msra.mxu0 %v549
        %767 = vmatpush.msra.mxu0 %v546
        %768 = vmatpush.msra.mxu0 %v543
        %769 = vmatpush.msra.mxu0 %v540
        %770 = vmatpush.msra.mxu0 %v537
        %771 = vmatpush.msra.mxu0 %v534
        %772 = vmatpush.msra.mxu0 %v531
        %773 = vmatpush.msra.mxu0 %v528
        %774 = vmatpush.msra.mxu0 %v525
        %775 = vmatpush.msra.mxu0 %v522
        %776 = vmatpush.msra.mxu0 %v519
        %777 = vmatpush.msra.mxu0 %v516
        %778 = vmatmul.f32.gmra.mxu0 %v725
        %v779 = vpop.f32.mrf.mxu0
        %v780 = vadd.f32 %v696, %v779
        %781 = vmatmul.f32.gmra.mxu0 %v728
        %v782 = vpop.f32.mrf.mxu0
        %v783 = vadd.f32 %v699, %v782
        %784 = vdwg.mxu0
        %785 = vmatpush.msra.mxu0 0.0
        %786 = vmatpush.msra.mxu0 %v737
        %787 = vmatpush.msra.mxu0 %v556
        %788 = vmatpush.msra.mxu0 %v553
        %789 = vmatpush.msra.mxu0 %v550
        %790 = vmatpush.msra.mxu0 %v547
        %791 = vmatpush.msra.mxu0 %v544
        %792 = vmatpush.msra.mxu0 %v541
        %793 = vmatpush.msra.mxu0 %v538
        %794 = vmatpush.msra.mxu0 %v535
        %795 = vmatpush.msra.mxu0 %v532
        %796 = vmatpush.msra.mxu0 %v529
        %797 = vmatpush.msra.mxu0 %v526
        %798 = vmatpush.msra.mxu0 %v523
        %799 = vmatpush.msra.mxu0 %v520
        %800 = vmatpush.msra.mxu0 %v517
        %801 = vmatmul.f32.gmra.mxu0 %v725
        %v802 = vpop.f32.mrf.mxu0
        %v803 = vadd.f32 %v719, %v802
        %804 = vmatmul.f32.gmra.mxu0 %v728
        %v805 = vpop.f32.mrf.mxu0
        %v806 = vadd.f32 %v722, %v805
        %807 = vdwg.mxu0
        %s808 = scalar_lea.vmem [#allocation2], 32
        %v809 = vld [vmem:[%s808] sm:$0xff]
        %v810 = vld [vmem:[%s808 + $0x8] sm:$0x7]
        %v812 = vsel %vm481, %v809, 0
        %v815 = vsel %vm481, %v810, 0
        %817 = vmatpush.msra.mxu0 0.0
        %818 = vmatpush.msra.mxu0 0.0
        %819 = vmatpush.msra.mxu0 0.0
        %820 = vmatpush.msra.mxu0 0.0
        %821 = vmatpush.msra.mxu0 0.0
        %822 = vmatpush.msra.mxu0 0.0
        %823 = vmatpush.msra.mxu0 0.0
        %824 = vmatpush.msra.mxu0 0.0
        %825 = vmatpush.msra.mxu0 0.0
        %826 = vmatpush.msra.mxu0 0.0
        %827 = vmatpush.msra.mxu0 0.0
        %828 = vmatpush.msra.mxu0 %v490
        %829 = vmatpush.msra.mxu0 %v477
        %830 = vmatpush.msra.mxu0 %v476
        %831 = vmatpush.msra.mxu0 %v475
        %832 = vmatpush.msra.mxu0 %v474
        %833 = vmatmul.f32.gmra.mxu0 %v812
        %v834 = vpop.f32.mrf.mxu0
        %v835 = vadd.f32 0.0, %v834
        %836 = vmatmul.f32.gmra.mxu0 %v815
        %v837 = vpop.f32.mrf.mxu0
        %v838 = vadd.f32 0.0, %v837
        %839 = vdwg.mxu0
        %s840 = scalar_lea.vmem [#allocation4], 720
        %v841 = vld [vmem:[%s840] sm:$0xff]
        %v842 = vld [vmem:[%s840 + $0x8] sm:$0xff]
        %v843 = vld [vmem:[%s840 + $0x10] sm:$0xff]
        %v844 = vld [vmem:[%s840 + $0x18] sm:$0xff]
        %v845 = vld [vmem:[%s840 + $0x20] sm:$0xff]
        %v846 = vld [vmem:[%s840 + $0x28] sm:$0xff]
        %v847 = vld [vmem:[%s840 + $0x30] sm:$0xff]
        %v848 = vld [vmem:[%s840 + $0x38] sm:$0xff]
        %v849 = vld [vmem:[%s840 + $0x40] sm:$0xff]
        %v850 = vld [vmem:[%s840 + $0x48] sm:$0xff]
        %v851 = vld [vmem:[%s840 + $0x50] sm:$0xff]
        %v852 = vld [vmem:[%s840 + $0x58] sm:$0xff]
        %v853 = vld [vmem:[%s840 + $0x60] sm:$0xff]
        %v854 = vld [vmem:[%s840 + $0x68] sm:$0xff]
        %v855 = vld [vmem:[%s840 + $0x70] sm:$0xff]
        %v856 = vld [vmem:[%s840 + $0x78] sm:$0xff]
        %v857 = vld [vmem:[%s840 + $0x80] sm:$0xff]
        %v858 = vld [vmem:[%s840 + $0x88] sm:$0xff]
        %v859 = vld [vmem:[%s840 + $0x90] sm:$0xff]
        %v860 = vld [vmem:[%s840 + $0x98] sm:$0xff]
        %v861 = vld [vmem:[%s840 + $0xa0] sm:$0xff]
        %v862 = vld [vmem:[%s840 + $0xa8] sm:$0xff]
        %v863 = vld [vmem:[%s840 + $0xb0] sm:$0xff]
        %v864 = vld [vmem:[%s840 + $0xb8] sm:$0xff]
        %v865 = vld [vmem:[%s840 + $0xc0] sm:$0xff]
        %v866 = vld [vmem:[%s840 + $0xc8] sm:$0xff]
        %v867 = vld [vmem:[%s840 + $0xd0] sm:$0xff]
        %v868 = vld [vmem:[%s840 + $0xd8] sm:$0xff]
        %v869 = vld [vmem:[%s840 + $0xe0] sm:$0xff]
        %v870 = vld [vmem:[%s840 + $0xe8] sm:$0xff]
        %v871 = vld [vmem:[%s840 + $0xf0] sm:$0xff]
        %v872 = vld [vmem:[%s840 + $0xf8] sm:$0xff]
        %v873 = vld [vmem:[%s840 + $0x100] sm:$0xff]
        %v874 = vld [vmem:[%s840 + $0x108] sm:$0xff]
        %v875 = vld [vmem:[%s840 + $0x110] sm:$0xff]
        %v876 = vld [vmem:[%s840 + $0x118] sm:$0xff]
        %v877 = vld [vmem:[%s840 + $0x120] sm:$0xff]
        %v878 = vld [vmem:[%s840 + $0x128] sm:$0xff]
        %v879 = vld [vmem:[%s840 + $0x130] sm:$0xff]
        %v880 = vld [vmem:[%s840 + $0x138] sm:$0xff]
        %v881 = vld [vmem:[%s840 + $0x140] sm:$0xff]
        %v882 = vld [vmem:[%s840 + $0x148] sm:$0xff]
        %v883 = vld [vmem:[%s840 + $0x150] sm:$0x3]
        %v884 = vld [vmem:[%s840 + $0x158] sm:$0x3]
        %v885 = vld [vmem:[%s840 + $0x160] sm:$0x3]
        %v887 = vsel %vm638, %v835, 0
        %v890 = vsel %vm638, %v838, 0
        %v893 = vsel %vm645, %v883, 0
        %v896 = vsel %vm645, %v884, 0
        %v899 = vsel %vm645, %v885, 0
        %901 = vmatpush.msra.mxu0 0.0
        %902 = vmatpush.msra.mxu0 %v893
        %903 = vmatpush.msra.mxu0 %v880
        %904 = vmatpush.msra.mxu0 %v877
        %905 = vmatpush.msra.mxu0 %v874
        %906 = vmatpush.msra.mxu0 %v871
        %907 = vmatpush.msra.mxu0 %v868
        %908 = vmatpush.msra.mxu0 %v865
        %909 = vmatpush.msra.mxu0 %v862
        %910 = vmatpush.msra.mxu0 %v859
        %911 = vmatpush.msra.mxu0 %v856
        %912 = vmatpush.msra.mxu0 %v853
        %913 = vmatpush.msra.mxu0 %v850
        %914 = vmatpush.msra.mxu0 %v847
        %915 = vmatpush.msra.mxu0 %v844
        %916 = vmatpush.msra.mxu0 %v841
        %917 = vmatmul.f32.gmra.mxu0 %v887
        %v918 = vpop.f32.mrf.mxu0
        %v919 = vadd.f32 0.0, %v918
        %920 = vmatmul.f32.gmra.mxu0 %v890
        %v921 = vpop.f32.mrf.mxu0
        %v922 = vadd.f32 0.0, %v921
        %923 = vdwg.mxu0
        %924 = vmatpush.msra.mxu0 0.0
        %925 = vmatpush.msra.mxu0 %v896
        %926 = vmatpush.msra.mxu0 %v881
        %927 = vmatpush.msra.mxu0 %v878
        %928 = vmatpush.msra.mxu0 %v875
        %929 = vmatpush.msra.mxu0 %v872
        %930 = vmatpush.msra.mxu0 %v869
        %931 = vmatpush.msra.mxu0 %v866
        %932 = vmatpush.msra.mxu0 %v863
        %933 = vmatpush.msra.mxu0 %v860
        %934 = vmatpush.msra.mxu0 %v857
        %935 = vmatpush.msra.mxu0 %v854
        %936 = vmatpush.msra.mxu0 %v851
        %937 = vmatpush.msra.mxu0 %v848
        %938 = vmatpush.msra.mxu0 %v845
        %939 = vmatpush.msra.mxu0 %v842
        %940 = vmatmul.f32.gmra.mxu0 %v887
        %v941 = vpop.f32.mrf.mxu0
        %v942 = vadd.f32 0.0, %v941
        %943 = vmatmul.f32.gmra.mxu0 %v890
        %v944 = vpop.f32.mrf.mxu0
        %v945 = vadd.f32 0.0, %v944
        %946 = vdwg.mxu0
        %947 = vmatpush.msra.mxu0 0.0
        %948 = vmatpush.msra.mxu0 %v899
        %949 = vmatpush.msra.mxu0 %v882
        %950 = vmatpush.msra.mxu0 %v879
        %951 = vmatpush.msra.mxu0 %v876
        %952 = vmatpush.msra.mxu0 %v873
        %953 = vmatpush.msra.mxu0 %v870
        %954 = vmatpush.msra.mxu0 %v867
        %955 = vmatpush.msra.mxu0 %v864
        %956 = vmatpush.msra.mxu0 %v861
        %957 = vmatpush.msra.mxu0 %v858
        %958 = vmatpush.msra.mxu0 %v855
        %959 = vmatpush.msra.mxu0 %v852
        %960 = vmatpush.msra.mxu0 %v849
        %961 = vmatpush.msra.mxu0 %v846
        %962 = vmatpush.msra.mxu0 %v843
        %963 = vmatmul.f32.gmra.mxu0 %v887
        %v964 = vpop.f32.mrf.mxu0
        %v965 = vadd.f32 0.0, %v964
        %966 = vmatmul.f32.gmra.mxu0 %v890
        %v967 = vpop.f32.mrf.mxu0
        %v968 = vadd.f32 0.0, %v967
        %969 = vdwg.mxu0
        %v970 = vadd.f32 %v757, %v919
        %v971 = vadd.f32 %v780, %v942
        %v972 = vadd.f32 %v803, %v965
        %v973 = vadd.f32 %v760, %v922
        %v974 = vadd.f32 %v783, %v945
        %v975 = vadd.f32 %v806, %v968
        %s976 = scalar_lea.vmem [#allocation2], 48
        %v977 = vld [vmem:[%s976] sm:$0xff]
        %v978 = vld [vmem:[%s976 + $0x8] sm:$0x7]
        %v980 = vsel %vm481, %v977, 0
        %v983 = vsel %vm481, %v978, 0
        %985 = vmatpush.msra.mxu0 0.0
        %986 = vmatpush.msra.mxu0 0.0
        %987 = vmatpush.msra.mxu0 0.0
        %988 = vmatpush.msra.mxu0 0.0
        %989 = vmatpush.msra.mxu0 0.0
        %990 = vmatpush.msra.mxu0 0.0
        %991 = vmatpush.msra.mxu0 0.0
        %992 = vmatpush.msra.mxu0 0.0
        %993 = vmatpush.msra.mxu0 0.0
        %994 = vmatpush.msra.mxu0 0.0
        %995 = vmatpush.msra.mxu0 0.0
        %996 = vmatpush.msra.mxu0 %v490
        %997 = vmatpush.msra.mxu0 %v477
        %998 = vmatpush.msra.mxu0 %v476
        %999 = vmatpush.msra.mxu0 %v475
        %1000 = vmatpush.msra.mxu0 %v474
        %1001 = vmatmul.f32.gmra.mxu0 %v980
        %v1002 = vpop.f32.mrf.mxu0
        %v1003 = vadd.f32 0.0, %v1002
        %1004 = vmatmul.f32.gmra.mxu0 %v983
        %v1005 = vpop.f32.mrf.mxu0
        %v1006 = vadd.f32 0.0, %v1005
        %1007 = vdwg.mxu0
        %s1008 = scalar_lea.vmem [#allocation4], 1080
        %v1009 = vld [vmem:[%s1008] sm:$0xff]
        %v1010 = vld [vmem:[%s1008 + $0x8] sm:$0xff]
        %v1011 = vld [vmem:[%s1008 + $0x10] sm:$0xff]
        %v1012 = vld [vmem:[%s1008 + $0x18] sm:$0xff]
        %v1013 = vld [vmem:[%s1008 + $0x20] sm:$0xff]
        %v1014 = vld [vmem:[%s1008 + $0x28] sm:$0xff]
        %v1015 = vld [vmem:[%s1008 + $0x30] sm:$0xff]
        %v1016 = vld [vmem:[%s1008 + $0x38] sm:$0xff]
        %v1017 = vld [vmem:[%s1008 + $0x40] sm:$0xff]
        %v1018 = vld [vmem:[%s1008 + $0x48] sm:$0xff]
        %v1019 = vld [vmem:[%s1008 + $0x50] sm:$0xff]
        %v1020 = vld [vmem:[%s1008 + $0x58] sm:$0xff]
        %v1021 = vld [vmem:[%s1008 + $0x60] sm:$0xff]
        %v1022 = vld [vmem:[%s1008 + $0x68] sm:$0xff]
        %v1023 = vld [vmem:[%s1008 + $0x70] sm:$0xff]
        %v1024 = vld [vmem:[%s1008 + $0x78] sm:$0xff]
        %v1025 = vld [vmem:[%s1008 + $0x80] sm:$0xff]
        %v1026 = vld [vmem:[%s1008 + $0x88] sm:$0xff]
        %v1027 = vld [vmem:[%s1008 + $0x90] sm:$0xff]
        %v1028 = vld [vmem:[%s1008 + $0x98] sm:$0xff]
        %v1029 = vld [vmem:[%s1008 + $0xa0] sm:$0xff]
        %v1030 = vld [vmem:[%s1008 + $0xa8] sm:$0xff]
        %v1031 = vld [vmem:[%s1008 + $0xb0] sm:$0xff]
        %v1032 = vld [vmem:[%s1008 + $0xb8] sm:$0xff]
        %v1033 = vld [vmem:[%s1008 + $0xc0] sm:$0xff]
        %v1034 = vld [vmem:[%s1008 + $0xc8] sm:$0xff]
        %v1035 = vld [vmem:[%s1008 + $0xd0] sm:$0xff]
        %v1036 = vld [vmem:[%s1008 + $0xd8] sm:$0xff]
        %v1037 = vld [vmem:[%s1008 + $0xe0] sm:$0xff]
        %v1038 = vld [vmem:[%s1008 + $0xe8] sm:$0xff]
        %v1039 = vld [vmem:[%s1008 + $0xf0] sm:$0xff]
        %v1040 = vld [vmem:[%s1008 + $0xf8] sm:$0xff]
        %v1041 = vld [vmem:[%s1008 + $0x100] sm:$0xff]
        %v1042 = vld [vmem:[%s1008 + $0x108] sm:$0xff]
        %v1043 = vld [vmem:[%s1008 + $0x110] sm:$0xff]
        %v1044 = vld [vmem:[%s1008 + $0x118] sm:$0xff]
        %v1045 = vld [vmem:[%s1008 + $0x120] sm:$0xff]
        %v1046 = vld [vmem:[%s1008 + $0x128] sm:$0xff]
        %v1047 = vld [vmem:[%s1008 + $0x130] sm:$0xff]
        %v1048 = vld [vmem:[%s1008 + $0x138] sm:$0xff]
        %v1049 = vld [vmem:[%s1008 + $0x140] sm:$0xff]
        %v1050 = vld [vmem:[%s1008 + $0x148] sm:$0xff]
        %v1051 = vld [vmem:[%s1008 + $0x150] sm:$0x3]
        %v1052 = vld [vmem:[%s1008 + $0x158] sm:$0x3]
        %v1053 = vld [vmem:[%s1008 + $0x160] sm:$0x3]
        %v1055 = vsel %vm638, %v1003, 0
        %v1058 = vsel %vm638, %v1006, 0
        %v1061 = vsel %vm645, %v1051, 0
        %v1064 = vsel %vm645, %v1052, 0
        %v1067 = vsel %vm645, %v1053, 0
        %1069 = vmatpush.msra.mxu0 0.0
        %1070 = vmatpush.msra.mxu0 %v1061
        %1071 = vmatpush.msra.mxu0 %v1048
        %1072 = vmatpush.msra.mxu0 %v1045
        %1073 = vmatpush.msra.mxu0 %v1042
        %1074 = vmatpush.msra.mxu0 %v1039
        %1075 = vmatpush.msra.mxu0 %v1036
        %1076 = vmatpush.msra.mxu0 %v1033
        %1077 = vmatpush.msra.mxu0 %v1030
        %1078 = vmatpush.msra.mxu0 %v1027
        %1079 = vmatpush.msra.mxu0 %v1024
        %1080 = vmatpush.msra.mxu0 %v1021
        %1081 = vmatpush.msra.mxu0 %v1018
        %1082 = vmatpush.msra.mxu0 %v1015
        %1083 = vmatpush.msra.mxu0 %v1012
        %1084 = vmatpush.msra.mxu0 %v1009
        %1085 = vmatmul.f32.gmra.mxu0 %v1055
        %v1086 = vpop.f32.mrf.mxu0
        %v1087 = vadd.f32 0.0, %v1086
        %1088 = vmatmul.f32.gmra.mxu0 %v1058
        %v1089 = vpop.f32.mrf.mxu0
        %v1090 = vadd.f32 0.0, %v1089
        %1091 = vdwg.mxu0
        %1092 = vmatpush.msra.mxu0 0.0
        %1093 = vmatpush.msra.mxu0 %v1064
        %1094 = vmatpush.msra.mxu0 %v1049
        %1095 = vmatpush.msra.mxu0 %v1046
        %1096 = vmatpush.msra.mxu0 %v1043
        %1097 = vmatpush.msra.mxu0 %v1040
        %1098 = vmatpush.msra.mxu0 %v1037
        %1099 = vmatpush.msra.mxu0 %v1034
        %1100 = vmatpush.msra.mxu0 %v1031
        %1101 = vmatpush.msra.mxu0 %v1028
        %1102 = vmatpush.msra.mxu0 %v1025
        %1103 = vmatpush.msra.mxu0 %v1022
        %1104 = vmatpush.msra.mxu0 %v1019
        %1105 = vmatpush.msra.mxu0 %v1016
        %1106 = vmatpush.msra.mxu0 %v1013
        %1107 = vmatpush.msra.mxu0 %v1010
        %1108 = vmatmul.f32.gmra.mxu0 %v1055
        %v1109 = vpop.f32.mrf.mxu0
        %v1110 = vadd.f32 0.0, %v1109
        %1111 = vmatmul.f32.gmra.mxu0 %v1058
        %v1112 = vpop.f32.mrf.mxu0
        %v1113 = vadd.f32 0.0, %v1112
        %1114 = vdwg.mxu0
        %1115 = vmatpush.msra.mxu0 0.0
        %1116 = vmatpush.msra.mxu0 %v1067
        %1117 = vmatpush.msra.mxu0 %v1050
        %1118 = vmatpush.msra.mxu0 %v1047
        %1119 = vmatpush.msra.mxu0 %v1044
        %1120 = vmatpush.msra.mxu0 %v1041
        %1121 = vmatpush.msra.mxu0 %v1038
        %1122 = vmatpush.msra.mxu0 %v1035
        %1123 = vmatpush.msra.mxu0 %v1032
        %1124 = vmatpush.msra.mxu0 %v1029
        %1125 = vmatpush.msra.mxu0 %v1026
        %1126 = vmatpush.msra.mxu0 %v1023
        %1127 = vmatpush.msra.mxu0 %v1020
        %1128 = vmatpush.msra.mxu0 %v1017
        %1129 = vmatpush.msra.mxu0 %v1014
        %1130 = vmatpush.msra.mxu0 %v1011
        %1131 = vmatmul.f32.gmra.mxu0 %v1055
        %v1132 = vpop.f32.mrf.mxu0
        %v1133 = vadd.f32 0.0, %v1132
        %1134 = vmatmul.f32.gmra.mxu0 %v1058
        %v1135 = vpop.f32.mrf.mxu0
        %v1136 = vadd.f32 0.0, %v1135
        %1137 = vdwg.mxu0
        %v1138 = vadd.f32 %v970, %v1087
        %v1139 = vadd.f32 %v971, %v1110
        %v1140 = vadd.f32 %v972, %v1133
        %v1141 = vadd.f32 %v973, %v1090
        %v1142 = vadd.f32 %v974, %v1113
        %v1143 = vadd.f32 %v975, %v1136
        %s1144 = scalar_lea.vmem [#allocation2], 64
        %v1145 = vld [vmem:[%s1144] sm:$0xff]
        %v1146 = vld [vmem:[%s1144 + $0x8] sm:$0x7]
        %v1148 = vsel %vm481, %v1145, 0
        %v1151 = vsel %vm481, %v1146, 0
        %1153 = vmatpush.msra.mxu0 0.0
        %1154 = vmatpush.msra.mxu0 0.0
        %1155 = vmatpush.msra.mxu0 0.0
        %1156 = vmatpush.msra.mxu0 0.0
        %1157 = vmatpush.msra.mxu0 0.0
        %1158 = vmatpush.msra.mxu0 0.0
        %1159 = vmatpush.msra.mxu0 0.0
        %1160 = vmatpush.msra.mxu0 0.0
        %1161 = vmatpush.msra.mxu0 0.0
        %1162 = vmatpush.msra.mxu0 0.0
        %1163 = vmatpush.msra.mxu0 0.0
        %1164 = vmatpush.msra.mxu0 %v490
        %1165 = vmatpush.msra.mxu0 %v477
        %1166 = vmatpush.msra.mxu0 %v476
        %1167 = vmatpush.msra.mxu0 %v475
        %1168 = vmatpush.msra.mxu0 %v474
        %1169 = vmatmul.f32.gmra.mxu0 %v1148
        %v1170 = vpop.f32.mrf.mxu0
        %v1171 = vadd.f32 0.0, %v1170
        %1172 = vmatmul.f32.gmra.mxu0 %v1151
        %v1173 = vpop.f32.mrf.mxu0
        %v1174 = vadd.f32 0.0, %v1173
        %1175 = vdwg.mxu0
        %s1176 = scalar_lea.vmem [#allocation4], 1440
        %v1177 = vld [vmem:[%s1176] sm:$0xff]
        %v1178 = vld [vmem:[%s1176 + $0x8] sm:$0xff]
        %v1179 = vld [vmem:[%s1176 + $0x10] sm:$0xff]
        %v1180 = vld [vmem:[%s1176 + $0x18] sm:$0xff]
        %v1181 = vld [vmem:[%s1176 + $0x20] sm:$0xff]
        %v1182 = vld [vmem:[%s1176 + $0x28] sm:$0xff]
        %v1183 = vld [vmem:[%s1176 + $0x30] sm:$0xff]
        %v1184 = vld [vmem:[%s1176 + $0x38] sm:$0xff]
        %v1185 = vld [vmem:[%s1176 + $0x40] sm:$0xff]
        %v1186 = vld [vmem:[%s1176 + $0x48] sm:$0xff]
        %v1187 = vld [vmem:[%s1176 + $0x50] sm:$0xff]
        %v1188 = vld [vmem:[%s1176 + $0x58] sm:$0xff]
        %v1189 = vld [vmem:[%s1176 + $0x60] sm:$0xff]
        %v1190 = vld [vmem:[%s1176 + $0x68] sm:$0xff]
        %v1191 = vld [vmem:[%s1176 + $0x70] sm:$0xff]
        %v1192 = vld [vmem:[%s1176 + $0x78] sm:$0xff]
        %v1193 = vld [vmem:[%s1176 + $0x80] sm:$0xff]
        %v1194 = vld [vmem:[%s1176 + $0x88] sm:$0xff]
        %v1195 = vld [vmem:[%s1176 + $0x90] sm:$0xff]
        %v1196 = vld [vmem:[%s1176 + $0x98] sm:$0xff]
        %v1197 = vld [vmem:[%s1176 + $0xa0] sm:$0xff]
        %v1198 = vld [vmem:[%s1176 + $0xa8] sm:$0xff]
        %v1199 = vld [vmem:[%s1176 + $0xb0] sm:$0xff]
        %v1200 = vld [vmem:[%s1176 + $0xb8] sm:$0xff]
        %v1201 = vld [vmem:[%s1176 + $0xc0] sm:$0xff]
        %v1202 = vld [vmem:[%s1176 + $0xc8] sm:$0xff]
        %v1203 = vld [vmem:[%s1176 + $0xd0] sm:$0xff]
        %v1204 = vld [vmem:[%s1176 + $0xd8] sm:$0xff]
        %v1205 = vld [vmem:[%s1176 + $0xe0] sm:$0xff]
        %v1206 = vld [vmem:[%s1176 + $0xe8] sm:$0xff]
        %v1207 = vld [vmem:[%s1176 + $0xf0] sm:$0xff]
        %v1208 = vld [vmem:[%s1176 + $0xf8] sm:$0xff]
        %v1209 = vld [vmem:[%s1176 + $0x100] sm:$0xff]
        %v1210 = vld [vmem:[%s1176 + $0x108] sm:$0xff]
        %v1211 = vld [vmem:[%s1176 + $0x110] sm:$0xff]
        %v1212 = vld [vmem:[%s1176 + $0x118] sm:$0xff]
        %v1213 = vld [vmem:[%s1176 + $0x120] sm:$0xff]
        %v1214 = vld [vmem:[%s1176 + $0x128] sm:$0xff]
        %v1215 = vld [vmem:[%s1176 + $0x130] sm:$0xff]
        %v1216 = vld [vmem:[%s1176 + $0x138] sm:$0xff]
        %v1217 = vld [vmem:[%s1176 + $0x140] sm:$0xff]
        %v1218 = vld [vmem:[%s1176 + $0x148] sm:$0xff]
        %v1219 = vld [vmem:[%s1176 + $0x150] sm:$0x3]
        %v1220 = vld [vmem:[%s1176 + $0x158] sm:$0x3]
        %v1221 = vld [vmem:[%s1176 + $0x160] sm:$0x3]
        %v1223 = vsel %vm638, %v1171, 0
        %v1226 = vsel %vm638, %v1174, 0
        %v1229 = vsel %vm645, %v1219, 0
        %v1232 = vsel %vm645, %v1220, 0
        %v1235 = vsel %vm645, %v1221, 0
        %1237 = vmatpush.msra.mxu0 0.0
        %1238 = vmatpush.msra.mxu0 %v1229
        %1239 = vmatpush.msra.mxu0 %v1216
        %1240 = vmatpush.msra.mxu0 %v1213
        %1241 = vmatpush.msra.mxu0 %v1210
        %1242 = vmatpush.msra.mxu0 %v1207
        %1243 = vmatpush.msra.mxu0 %v1204
        %1244 = vmatpush.msra.mxu0 %v1201
        %1245 = vmatpush.msra.mxu0 %v1198
        %1246 = vmatpush.msra.mxu0 %v1195
        %1247 = vmatpush.msra.mxu0 %v1192
        %1248 = vmatpush.msra.mxu0 %v1189
        %1249 = vmatpush.msra.mxu0 %v1186
        %1250 = vmatpush.msra.mxu0 %v1183
        %1251 = vmatpush.msra.mxu0 %v1180
        %1252 = vmatpush.msra.mxu0 %v1177
        %1253 = vmatmul.f32.gmra.mxu0 %v1223
        %v1254 = vpop.f32.mrf.mxu0
        %v1255 = vadd.f32 0.0, %v1254
        %1256 = vmatmul.f32.gmra.mxu0 %v1226
        %v1257 = vpop.f32.mrf.mxu0
        %v1258 = vadd.f32 0.0, %v1257
        %1259 = vdwg.mxu0
        %1260 = vmatpush.msra.mxu0 0.0
        %1261 = vmatpush.msra.mxu0 %v1232
        %1262 = vmatpush.msra.mxu0 %v1217
        %1263 = vmatpush.msra.mxu0 %v1214
        %1264 = vmatpush.msra.mxu0 %v1211
        %1265 = vmatpush.msra.mxu0 %v1208
        %1266 = vmatpush.msra.mxu0 %v1205
        %1267 = vmatpush.msra.mxu0 %v1202
        %1268 = vmatpush.msra.mxu0 %v1199
        %1269 = vmatpush.msra.mxu0 %v1196
        %1270 = vmatpush.msra.mxu0 %v1193
        %1271 = vmatpush.msra.mxu0 %v1190
        %1272 = vmatpush.msra.mxu0 %v1187
        %1273 = vmatpush.msra.mxu0 %v1184
        %1274 = vmatpush.msra.mxu0 %v1181
        %1275 = vmatpush.msra.mxu0 %v1178
        %1276 = vmatmul.f32.gmra.mxu0 %v1223
        %v1277 = vpop.f32.mrf.mxu0
        %v1278 = vadd.f32 0.0, %v1277
        %1279 = vmatmul.f32.gmra.mxu0 %v1226
        %v1280 = vpop.f32.mrf.mxu0
        %v1281 = vadd.f32 0.0, %v1280
        %1282 = vdwg.mxu0
        %1283 = vmatpush.msra.mxu0 0.0
        %1284 = vmatpush.msra.mxu0 %v1235
        %1285 = vmatpush.msra.mxu0 %v1218
        %1286 = vmatpush.msra.mxu0 %v1215
        %1287 = vmatpush.msra.mxu0 %v1212
        %1288 = vmatpush.msra.mxu0 %v1209
        %1289 = vmatpush.msra.mxu0 %v1206
        %1290 = vmatpush.msra.mxu0 %v1203
        %1291 = vmatpush.msra.mxu0 %v1200
        %1292 = vmatpush.msra.mxu0 %v1197
        %1293 = vmatpush.msra.mxu0 %v1194
        %1294 = vmatpush.msra.mxu0 %v1191
        %1295 = vmatpush.msra.mxu0 %v1188
        %1296 = vmatpush.msra.mxu0 %v1185
        %1297 = vmatpush.msra.mxu0 %v1182
        %1298 = vmatpush.msra.mxu0 %v1179
        %1299 = vmatmul.f32.gmra.mxu0 %v1223
        %v1300 = vpop.f32.mrf.mxu0
        %v1301 = vadd.f32 0.0, %v1300
        %1302 = vmatmul.f32.gmra.mxu0 %v1226
        %v1303 = vpop.f32.mrf.mxu0
        %v1304 = vadd.f32 0.0, %v1303
        %1305 = vdwg.mxu0
        %v1306 = vadd.f32 %v1138, %v1255
        %v1307 = vadd.f32 %v1139, %v1278
        %v1308 = vadd.f32 %v1140, %v1301
        %v1309 = vadd.f32 %v1141, %v1258
        %v1310 = vadd.f32 %v1142, %v1281
        %v1311 = vadd.f32 %v1143, %v1304
        %s1312 = scalar_lea.vmem [#allocation2], 80
        %v1313 = vld [vmem:[%s1312] sm:$0xff]
        %v1314 = vld [vmem:[%s1312 + $0x8] sm:$0x7]
        %v1316 = vsel %vm481, %v1313, 0
        %v1319 = vsel %vm481, %v1314, 0
        %1321 = vmatpush.msra.mxu0 0.0
        %1322 = vmatpush.msra.mxu0 0.0
        %1323 = vmatpush.msra.mxu0 0.0
        %1324 = vmatpush.msra.mxu0 0.0
        %1325 = vmatpush.msra.mxu0 0.0
        %1326 = vmatpush.msra.mxu0 0.0
        %1327 = vmatpush.msra.mxu0 0.0
        %1328 = vmatpush.msra.mxu0 0.0
        %1329 = vmatpush.msra.mxu0 0.0
        %1330 = vmatpush.msra.mxu0 0.0
        %1331 = vmatpush.msra.mxu0 0.0
        %1332 = vmatpush.msra.mxu0 %v490
        %1333 = vmatpush.msra.mxu0 %v477
        %1334 = vmatpush.msra.mxu0 %v476
        %1335 = vmatpush.msra.mxu0 %v475
        %1336 = vmatpush.msra.mxu0 %v474
        %1337 = vmatmul.f32.gmra.mxu0 %v1316
        %v1338 = vpop.f32.mrf.mxu0
        %v1339 = vadd.f32 0.0, %v1338
        %1340 = vmatmul.f32.gmra.mxu0 %v1319
        %v1341 = vpop.f32.mrf.mxu0
        %v1342 = vadd.f32 0.0, %v1341
        %1343 = vdwg.mxu0
        %s1344 = scalar_lea.vmem [#allocation4], 1800
        %v1345 = vld [vmem:[%s1344] sm:$0xff]
        %v1346 = vld [vmem:[%s1344 + $0x8] sm:$0xff]
        %v1347 = vld [vmem:[%s1344 + $0x10] sm:$0xff]
        %v1348 = vld [vmem:[%s1344 + $0x18] sm:$0xff]
        %v1349 = vld [vmem:[%s1344 + $0x20] sm:$0xff]
        %v1350 = vld [vmem:[%s1344 + $0x28] sm:$0xff]
        %v1351 = vld [vmem:[%s1344 + $0x30] sm:$0xff]
        %v1352 = vld [vmem:[%s1344 + $0x38] sm:$0xff]
        %v1353 = vld [vmem:[%s1344 + $0x40] sm:$0xff]
        %v1354 = vld [vmem:[%s1344 + $0x48] sm:$0xff]
        %v1355 = vld [vmem:[%s1344 + $0x50] sm:$0xff]
        %v1356 = vld [vmem:[%s1344 + $0x58] sm:$0xff]
        %v1357 = vld [vmem:[%s1344 + $0x60] sm:$0xff]
        %v1358 = vld [vmem:[%s1344 + $0x68] sm:$0xff]
        %v1359 = vld [vmem:[%s1344 + $0x70] sm:$0xff]
        %v1360 = vld [vmem:[%s1344 + $0x78] sm:$0xff]
        %v1361 = vld [vmem:[%s1344 + $0x80] sm:$0xff]
        %v1362 = vld [vmem:[%s1344 + $0x88] sm:$0xff]
        %v1363 = vld [vmem:[%s1344 + $0x90] sm:$0xff]
        %v1364 = vld [vmem:[%s1344 + $0x98] sm:$0xff]
        %v1365 = vld [vmem:[%s1344 + $0xa0] sm:$0xff]
        %v1366 = vld [vmem:[%s1344 + $0xa8] sm:$0xff]
        %v1367 = vld [vmem:[%s1344 + $0xb0] sm:$0xff]
        %v1368 = vld [vmem:[%s1344 + $0xb8] sm:$0xff]
        %v1369 = vld [vmem:[%s1344 + $0xc0] sm:$0xff]
        %v1370 = vld [vmem:[%s1344 + $0xc8] sm:$0xff]
        %v1371 = vld [vmem:[%s1344 + $0xd0] sm:$0xff]
        %v1372 = vld [vmem:[%s1344 + $0xd8] sm:$0xff]
        %v1373 = vld [vmem:[%s1344 + $0xe0] sm:$0xff]
        %v1374 = vld [vmem:[%s1344 + $0xe8] sm:$0xff]
        %v1375 = vld [vmem:[%s1344 + $0xf0] sm:$0xff]
        %v1376 = vld [vmem:[%s1344 + $0xf8] sm:$0xff]
        %v1377 = vld [vmem:[%s1344 + $0x100] sm:$0xff]
        %v1378 = vld [vmem:[%s1344 + $0x108] sm:$0xff]
        %v1379 = vld [vmem:[%s1344 + $0x110] sm:$0xff]
        %v1380 = vld [vmem:[%s1344 + $0x118] sm:$0xff]
        %v1381 = vld [vmem:[%s1344 + $0x120] sm:$0xff]
        %v1382 = vld [vmem:[%s1344 + $0x128] sm:$0xff]
        %v1383 = vld [vmem:[%s1344 + $0x130] sm:$0xff]
        %v1384 = vld [vmem:[%s1344 + $0x138] sm:$0xff]
        %v1385 = vld [vmem:[%s1344 + $0x140] sm:$0xff]
        %v1386 = vld [vmem:[%s1344 + $0x148] sm:$0xff]
        %v1387 = vld [vmem:[%s1344 + $0x150] sm:$0x3]
        %v1388 = vld [vmem:[%s1344 + $0x158] sm:$0x3]
        %v1389 = vld [vmem:[%s1344 + $0x160] sm:$0x3]
        %v1391 = vsel %vm638, %v1339, 0
        %v1394 = vsel %vm638, %v1342, 0
        %v1397 = vsel %vm645, %v1387, 0
        %v1400 = vsel %vm645, %v1388, 0
        %v1403 = vsel %vm645, %v1389, 0
        %1405 = vmatpush.msra.mxu0 0.0
        %1406 = vmatpush.msra.mxu0 %v1397
        %1407 = vmatpush.msra.mxu0 %v1384
        %1408 = vmatpush.msra.mxu0 %v1381
        %1409 = vmatpush.msra.mxu0 %v1378
        %1410 = vmatpush.msra.mxu0 %v1375
        %1411 = vmatpush.msra.mxu0 %v1372
        %1412 = vmatpush.msra.mxu0 %v1369
        %1413 = vmatpush.msra.mxu0 %v1366
        %1414 = vmatpush.msra.mxu0 %v1363
        %1415 = vmatpush.msra.mxu0 %v1360
        %1416 = vmatpush.msra.mxu0 %v1357
        %1417 = vmatpush.msra.mxu0 %v1354
        %1418 = vmatpush.msra.mxu0 %v1351
        %1419 = vmatpush.msra.mxu0 %v1348
        %1420 = vmatpush.msra.mxu0 %v1345
        %1421 = vmatmul.f32.gmra.mxu0 %v1391
        %v1422 = vpop.f32.mrf.mxu0
        %v1423 = vadd.f32 0.0, %v1422
        %1424 = vmatmul.f32.gmra.mxu0 %v1394
        %v1425 = vpop.f32.mrf.mxu0
        %v1426 = vadd.f32 0.0, %v1425
        %1427 = vdwg.mxu0
        %1428 = vmatpush.msra.mxu0 0.0
        %1429 = vmatpush.msra.mxu0 %v1400
        %1430 = vmatpush.msra.mxu0 %v1385
        %1431 = vmatpush.msra.mxu0 %v1382
        %1432 = vmatpush.msra.mxu0 %v1379
        %1433 = vmatpush.msra.mxu0 %v1376
        %1434 = vmatpush.msra.mxu0 %v1373
        %1435 = vmatpush.msra.mxu0 %v1370
        %1436 = vmatpush.msra.mxu0 %v1367
        %1437 = vmatpush.msra.mxu0 %v1364
        %1438 = vmatpush.msra.mxu0 %v1361
        %1439 = vmatpush.msra.mxu0 %v1358
        %1440 = vmatpush.msra.mxu0 %v1355
        %1441 = vmatpush.msra.mxu0 %v1352
        %1442 = vmatpush.msra.mxu0 %v1349
        %1443 = vmatpush.msra.mxu0 %v1346
        %1444 = vmatmul.f32.gmra.mxu0 %v1391
        %v1445 = vpop.f32.mrf.mxu0
        %v1446 = vadd.f32 0.0, %v1445
        %1447 = vmatmul.f32.gmra.mxu0 %v1394
        %v1448 = vpop.f32.mrf.mxu0
        %v1449 = vadd.f32 0.0, %v1448
        %1450 = vdwg.mxu0
        %1451 = vmatpush.msra.mxu0 0.0
        %1452 = vmatpush.msra.mxu0 %v1403
        %1453 = vmatpush.msra.mxu0 %v1386
        %1454 = vmatpush.msra.mxu0 %v1383
        %1455 = vmatpush.msra.mxu0 %v1380
        %1456 = vmatpush.msra.mxu0 %v1377
        %1457 = vmatpush.msra.mxu0 %v1374
        %1458 = vmatpush.msra.mxu0 %v1371
        %1459 = vmatpush.msra.mxu0 %v1368
        %1460 = vmatpush.msra.mxu0 %v1365
        %1461 = vmatpush.msra.mxu0 %v1362
        %1462 = vmatpush.msra.mxu0 %v1359
        %1463 = vmatpush.msra.mxu0 %v1356
        %1464 = vmatpush.msra.mxu0 %v1353
        %1465 = vmatpush.msra.mxu0 %v1350
        %1466 = vmatpush.msra.mxu0 %v1347
        %1467 = vmatmul.f32.gmra.mxu0 %v1391
        %v1468 = vpop.f32.mrf.mxu0
        %v1469 = vadd.f32 0.0, %v1468
        %1470 = vmatmul.f32.gmra.mxu0 %v1394
        %v1471 = vpop.f32.mrf.mxu0
        %v1472 = vadd.f32 0.0, %v1471
        %1473 = vdwg.mxu0
        %v1474 = vadd.f32 %v1306, %v1423
        %v1475 = vadd.f32 %v1307, %v1446
        %v1476 = vadd.f32 %v1308, %v1469
        %v1477 = vadd.f32 %v1309, %v1426
        %v1478 = vadd.f32 %v1310, %v1449
        %v1479 = vadd.f32 %v1311, %v1472
        %s1480 = scalar_lea.vmem [#allocation2], 96
        %v1481 = vld [vmem:[%s1480] sm:$0xff]
        %v1482 = vld [vmem:[%s1480 + $0x8] sm:$0x7]
        %v1484 = vsel %vm481, %v1481, 0
        %v1487 = vsel %vm481, %v1482, 0
        %1489 = vmatpush.msra.mxu0 0.0
        %1490 = vmatpush.msra.mxu0 0.0
        %1491 = vmatpush.msra.mxu0 0.0
        %1492 = vmatpush.msra.mxu0 0.0
        %1493 = vmatpush.msra.mxu0 0.0
        %1494 = vmatpush.msra.mxu0 0.0
        %1495 = vmatpush.msra.mxu0 0.0
        %1496 = vmatpush.msra.mxu0 0.0
        %1497 = vmatpush.msra.mxu0 0.0
        %1498 = vmatpush.msra.mxu0 0.0
        %1499 = vmatpush.msra.mxu0 0.0
        %1500 = vmatpush.msra.mxu0 %v490
        %1501 = vmatpush.msra.mxu0 %v477
        %1502 = vmatpush.msra.mxu0 %v476
        %1503 = vmatpush.msra.mxu0 %v475
        %1504 = vmatpush.msra.mxu0 %v474
        %1505 = vmatmul.f32.gmra.mxu0 %v1484
        %v1506 = vpop.f32.mrf.mxu0
        %v1507 = vadd.f32 0.0, %v1506
        %1508 = vmatmul.f32.gmra.mxu0 %v1487
        %v1509 = vpop.f32.mrf.mxu0
        %v1510 = vadd.f32 0.0, %v1509
        %1511 = vdwg.mxu0
        %s1512 = scalar_lea.vmem [#allocation4], 2160
        %v1513 = vld [vmem:[%s1512] sm:$0xff]
        %v1514 = vld [vmem:[%s1512 + $0x8] sm:$0xff]
        %v1515 = vld [vmem:[%s1512 + $0x10] sm:$0xff]
        %v1516 = vld [vmem:[%s1512 + $0x18] sm:$0xff]
        %v1517 = vld [vmem:[%s1512 + $0x20] sm:$0xff]
        %v1518 = vld [vmem:[%s1512 + $0x28] sm:$0xff]
        %v1519 = vld [vmem:[%s1512 + $0x30] sm:$0xff]
        %v1520 = vld [vmem:[%s1512 + $0x38] sm:$0xff]
        %v1521 = vld [vmem:[%s1512 + $0x40] sm:$0xff]
        %v1522 = vld [vmem:[%s1512 + $0x48] sm:$0xff]
        %v1523 = vld [vmem:[%s1512 + $0x50] sm:$0xff]
        %v1524 = vld [vmem:[%s1512 + $0x58] sm:$0xff]
        %v1525 = vld [vmem:[%s1512 + $0x60] sm:$0xff]
        %v1526 = vld [vmem:[%s1512 + $0x68] sm:$0xff]
        %v1527 = vld [vmem:[%s1512 + $0x70] sm:$0xff]
        %v1528 = vld [vmem:[%s1512 + $0x78] sm:$0xff]
        %v1529 = vld [vmem:[%s1512 + $0x80] sm:$0xff]
        %v1530 = vld [vmem:[%s1512 + $0x88] sm:$0xff]
        %v1531 = vld [vmem:[%s1512 + $0x90] sm:$0xff]
        %v1532 = vld [vmem:[%s1512 + $0x98] sm:$0xff]
        %v1533 = vld [vmem:[%s1512 + $0xa0] sm:$0xff]
        %v1534 = vld [vmem:[%s1512 + $0xa8] sm:$0xff]
        %v1535 = vld [vmem:[%s1512 + $0xb0] sm:$0xff]
        %v1536 = vld [vmem:[%s1512 + $0xb8] sm:$0xff]
        %v1537 = vld [vmem:[%s1512 + $0xc0] sm:$0xff]
        %v1538 = vld [vmem:[%s1512 + $0xc8] sm:$0xff]
        %v1539 = vld [vmem:[%s1512 + $0xd0] sm:$0xff]
        %v1540 = vld [vmem:[%s1512 + $0xd8] sm:$0xff]
        %v1541 = vld [vmem:[%s1512 + $0xe0] sm:$0xff]
        %v1542 = vld [vmem:[%s1512 + $0xe8] sm:$0xff]
        %v1543 = vld [vmem:[%s1512 + $0xf0] sm:$0xff]
        %v1544 = vld [vmem:[%s1512 + $0xf8] sm:$0xff]
        %v1545 = vld [vmem:[%s1512 + $0x100] sm:$0xff]
        %v1546 = vld [vmem:[%s1512 + $0x108] sm:$0xff]
        %v1547 = vld [vmem:[%s1512 + $0x110] sm:$0xff]
        %v1548 = vld [vmem:[%s1512 + $0x118] sm:$0xff]
        %v1549 = vld [vmem:[%s1512 + $0x120] sm:$0xff]
        %v1550 = vld [vmem:[%s1512 + $0x128] sm:$0xff]
        %v1551 = vld [vmem:[%s1512 + $0x130] sm:$0xff]
        %v1552 = vld [vmem:[%s1512 + $0x138] sm:$0xff]
        %v1553 = vld [vmem:[%s1512 + $0x140] sm:$0xff]
        %v1554 = vld [vmem:[%s1512 + $0x148] sm:$0xff]
        %v1555 = vld [vmem:[%s1512 + $0x150] sm:$0x3]
        %v1556 = vld [vmem:[%s1512 + $0x158] sm:$0x3]
        %v1557 = vld [vmem:[%s1512 + $0x160] sm:$0x3]
        %v1559 = vsel %vm638, %v1507, 0
        %v1562 = vsel %vm638, %v1510, 0
        %v1565 = vsel %vm645, %v1555, 0
        %v1568 = vsel %vm645, %v1556, 0
        %v1571 = vsel %vm645, %v1557, 0
        %1573 = vmatpush.msra.mxu0 0.0
        %1574 = vmatpush.msra.mxu0 %v1565
        %1575 = vmatpush.msra.mxu0 %v1552
        %1576 = vmatpush.msra.mxu0 %v1549
        %1577 = vmatpush.msra.mxu0 %v1546
        %1578 = vmatpush.msra.mxu0 %v1543
        %1579 = vmatpush.msra.mxu0 %v1540
        %1580 = vmatpush.msra.mxu0 %v1537
        %1581 = vmatpush.msra.mxu0 %v1534
        %1582 = vmatpush.msra.mxu0 %v1531
        %1583 = vmatpush.msra.mxu0 %v1528
        %1584 = vmatpush.msra.mxu0 %v1525
        %1585 = vmatpush.msra.mxu0 %v1522
        %1586 = vmatpush.msra.mxu0 %v1519
        %1587 = vmatpush.msra.mxu0 %v1516
        %1588 = vmatpush.msra.mxu0 %v1513
        %1589 = vmatmul.f32.gmra.mxu0 %v1559
        %v1590 = vpop.f32.mrf.mxu0
        %v1591 = vadd.f32 0.0, %v1590
        %1592 = vmatmul.f32.gmra.mxu0 %v1562
        %v1593 = vpop.f32.mrf.mxu0
        %v1594 = vadd.f32 0.0, %v1593
        %1595 = vdwg.mxu0
        %1596 = vmatpush.msra.mxu0 0.0
        %1597 = vmatpush.msra.mxu0 %v1568
        %1598 = vmatpush.msra.mxu0 %v1553
        %1599 = vmatpush.msra.mxu0 %v1550
        %1600 = vmatpush.msra.mxu0 %v1547
        %1601 = vmatpush.msra.mxu0 %v1544
        %1602 = vmatpush.msra.mxu0 %v1541
        %1603 = vmatpush.msra.mxu0 %v1538
        %1604 = vmatpush.msra.mxu0 %v1535
        %1605 = vmatpush.msra.mxu0 %v1532
        %1606 = vmatpush.msra.mxu0 %v1529
        %1607 = vmatpush.msra.mxu0 %v1526
        %1608 = vmatpush.msra.mxu0 %v1523
        %1609 = vmatpush.msra.mxu0 %v1520
        %1610 = vmatpush.msra.mxu0 %v1517
        %1611 = vmatpush.msra.mxu0 %v1514
        %1612 = vmatmul.f32.gmra.mxu0 %v1559
        %v1613 = vpop.f32.mrf.mxu0
        %v1614 = vadd.f32 0.0, %v1613
        %1615 = vmatmul.f32.gmra.mxu0 %v1562
        %v1616 = vpop.f32.mrf.mxu0
        %v1617 = vadd.f32 0.0, %v1616
        %1618 = vdwg.mxu0
        %1619 = vmatpush.msra.mxu0 0.0
        %1620 = vmatpush.msra.mxu0 %v1571
        %1621 = vmatpush.msra.mxu0 %v1554
        %1622 = vmatpush.msra.mxu0 %v1551
        %1623 = vmatpush.msra.mxu0 %v1548
        %1624 = vmatpush.msra.mxu0 %v1545
        %1625 = vmatpush.msra.mxu0 %v1542
        %1626 = vmatpush.msra.mxu0 %v1539
        %1627 = vmatpush.msra.mxu0 %v1536
        %1628 = vmatpush.msra.mxu0 %v1533
        %1629 = vmatpush.msra.mxu0 %v1530
        %1630 = vmatpush.msra.mxu0 %v1527
        %1631 = vmatpush.msra.mxu0 %v1524
        %1632 = vmatpush.msra.mxu0 %v1521
        %1633 = vmatpush.msra.mxu0 %v1518
        %1634 = vmatpush.msra.mxu0 %v1515
        %1635 = vmatmul.f32.gmra.mxu0 %v1559
        %v1636 = vpop.f32.mrf.mxu0
        %v1637 = vadd.f32 0.0, %v1636
        %1638 = vmatmul.f32.gmra.mxu0 %v1562
        %v1639 = vpop.f32.mrf.mxu0
        %v1640 = vadd.f32 0.0, %v1639
        %1641 = vdwg.mxu0
        %v1642 = vadd.f32 %v1474, %v1591
        %v1643 = vadd.f32 %v1475, %v1614
        %v1644 = vadd.f32 %v1476, %v1637
        %v1645 = vadd.f32 %v1477, %v1594
        %v1646 = vadd.f32 %v1478, %v1617
        %v1647 = vadd.f32 %v1479, %v1640
        %s1648 = scalar_lea.vmem [#allocation2], 112
        %v1649 = vld [vmem:[%s1648] sm:$0xff]
        %v1650 = vld [vmem:[%s1648 + $0x8] sm:$0x7]
        %v1652 = vsel %vm481, %v1649, 0
        %v1655 = vsel %vm481, %v1650, 0
        %1657 = vmatpush.msra.mxu0 0.0
        %1658 = vmatpush.msra.mxu0 0.0
        %1659 = vmatpush.msra.mxu0 0.0
        %1660 = vmatpush.msra.mxu0 0.0
        %1661 = vmatpush.msra.mxu0 0.0
        %1662 = vmatpush.msra.mxu0 0.0
        %1663 = vmatpush.msra.mxu0 0.0
        %1664 = vmatpush.msra.mxu0 0.0
        %1665 = vmatpush.msra.mxu0 0.0
        %1666 = vmatpush.msra.mxu0 0.0
        %1667 = vmatpush.msra.mxu0 0.0
        %1668 = vmatpush.msra.mxu0 %v490
        %1669 = vmatpush.msra.mxu0 %v477
        %1670 = vmatpush.msra.mxu0 %v476
        %1671 = vmatpush.msra.mxu0 %v475
        %1672 = vmatpush.msra.mxu0 %v474
        %1673 = vmatmul.f32.gmra.mxu0 %v1652
        %v1674 = vpop.f32.mrf.mxu0
        %v1675 = vadd.f32 0.0, %v1674
        %1676 = vmatmul.f32.gmra.mxu0 %v1655
        %v1677 = vpop.f32.mrf.mxu0
        %v1678 = vadd.f32 0.0, %v1677
        %1679 = vdwg.mxu0
        %s1680 = scalar_lea.vmem [#allocation4], 2520
        %v1681 = vld [vmem:[%s1680] sm:$0xff]
        %v1682 = vld [vmem:[%s1680 + $0x8] sm:$0xff]
        %v1683 = vld [vmem:[%s1680 + $0x10] sm:$0xff]
        %v1684 = vld [vmem:[%s1680 + $0x18] sm:$0xff]
        %v1685 = vld [vmem:[%s1680 + $0x20] sm:$0xff]
        %v1686 = vld [vmem:[%s1680 + $0x28] sm:$0xff]
        %v1687 = vld [vmem:[%s1680 + $0x30] sm:$0xff]
        %v1688 = vld [vmem:[%s1680 + $0x38] sm:$0xff]
        %v1689 = vld [vmem:[%s1680 + $0x40] sm:$0xff]
        %v1690 = vld [vmem:[%s1680 + $0x48] sm:$0xff]
        %v1691 = vld [vmem:[%s1680 + $0x50] sm:$0xff]
        %v1692 = vld [vmem:[%s1680 + $0x58] sm:$0xff]
        %v1693 = vld [vmem:[%s1680 + $0x60] sm:$0xff]
        %v1694 = vld [vmem:[%s1680 + $0x68] sm:$0xff]
        %v1695 = vld [vmem:[%s1680 + $0x70] sm:$0xff]
        %v1696 = vld [vmem:[%s1680 + $0x78] sm:$0xff]
        %v1697 = vld [vmem:[%s1680 + $0x80] sm:$0xff]
        %v1698 = vld [vmem:[%s1680 + $0x88] sm:$0xff]
        %v1699 = vld [vmem:[%s1680 + $0x90] sm:$0xff]
        %v1700 = vld [vmem:[%s1680 + $0x98] sm:$0xff]
        %v1701 = vld [vmem:[%s1680 + $0xa0] sm:$0xff]
        %v1702 = vld [vmem:[%s1680 + $0xa8] sm:$0xff]
        %v1703 = vld [vmem:[%s1680 + $0xb0] sm:$0xff]
        %v1704 = vld [vmem:[%s1680 + $0xb8] sm:$0xff]
        %v1705 = vld [vmem:[%s1680 + $0xc0] sm:$0xff]
        %v1706 = vld [vmem:[%s1680 + $0xc8] sm:$0xff]
        %v1707 = vld [vmem:[%s1680 + $0xd0] sm:$0xff]
        %v1708 = vld [vmem:[%s1680 + $0xd8] sm:$0xff]
        %v1709 = vld [vmem:[%s1680 + $0xe0] sm:$0xff]
        %v1710 = vld [vmem:[%s1680 + $0xe8] sm:$0xff]
        %v1711 = vld [vmem:[%s1680 + $0xf0] sm:$0xff]
        %v1712 = vld [vmem:[%s1680 + $0xf8] sm:$0xff]
        %v1713 = vld [vmem:[%s1680 + $0x100] sm:$0xff]
        %v1714 = vld [vmem:[%s1680 + $0x108] sm:$0xff]
        %v1715 = vld [vmem:[%s1680 + $0x110] sm:$0xff]
        %v1716 = vld [vmem:[%s1680 + $0x118] sm:$0xff]
        %v1717 = vld [vmem:[%s1680 + $0x120] sm:$0xff]
        %v1718 = vld [vmem:[%s1680 + $0x128] sm:$0xff]
        %v1719 = vld [vmem:[%s1680 + $0x130] sm:$0xff]
        %v1720 = vld [vmem:[%s1680 + $0x138] sm:$0xff]
        %v1721 = vld [vmem:[%s1680 + $0x140] sm:$0xff]
        %v1722 = vld [vmem:[%s1680 + $0x148] sm:$0xff]
        %v1723 = vld [vmem:[%s1680 + $0x150] sm:$0x3]
        %v1724 = vld [vmem:[%s1680 + $0x158] sm:$0x3]
        %v1725 = vld [vmem:[%s1680 + $0x160] sm:$0x3]
        %v1727 = vsel %vm638, %v1675, 0
        %v1730 = vsel %vm638, %v1678, 0
        %v1733 = vsel %vm645, %v1723, 0
        %v1736 = vsel %vm645, %v1724, 0
        %v1739 = vsel %vm645, %v1725, 0
        %1741 = vmatpush.msra.mxu0 0.0
        %1742 = vmatpush.msra.mxu0 %v1733
        %1743 = vmatpush.msra.mxu0 %v1720
        %1744 = vmatpush.msra.mxu0 %v1717
        %1745 = vmatpush.msra.mxu0 %v1714
        %1746 = vmatpush.msra.mxu0 %v1711
        %1747 = vmatpush.msra.mxu0 %v1708
        %1748 = vmatpush.msra.mxu0 %v1705
        %1749 = vmatpush.msra.mxu0 %v1702
        %1750 = vmatpush.msra.mxu0 %v1699
        %1751 = vmatpush.msra.mxu0 %v1696
        %1752 = vmatpush.msra.mxu0 %v1693
        %1753 = vmatpush.msra.mxu0 %v1690
        %1754 = vmatpush.msra.mxu0 %v1687
        %1755 = vmatpush.msra.mxu0 %v1684
        %1756 = vmatpush.msra.mxu0 %v1681
        %1757 = vmatmul.f32.gmra.mxu0 %v1727
        %v1758 = vpop.f32.mrf.mxu0
        %v1759 = vadd.f32 0.0, %v1758
        %1760 = vmatmul.f32.gmra.mxu0 %v1730
        %v1761 = vpop.f32.mrf.mxu0
        %v1762 = vadd.f32 0.0, %v1761
        %1763 = vdwg.mxu0
        %1764 = vmatpush.msra.mxu0 0.0
        %1765 = vmatpush.msra.mxu0 %v1736
        %1766 = vmatpush.msra.mxu0 %v1721
        %1767 = vmatpush.msra.mxu0 %v1718
        %1768 = vmatpush.msra.mxu0 %v1715
        %1769 = vmatpush.msra.mxu0 %v1712
        %1770 = vmatpush.msra.mxu0 %v1709
        %1771 = vmatpush.msra.mxu0 %v1706
        %1772 = vmatpush.msra.mxu0 %v1703
        %1773 = vmatpush.msra.mxu0 %v1700
        %1774 = vmatpush.msra.mxu0 %v1697
        %1775 = vmatpush.msra.mxu0 %v1694
        %1776 = vmatpush.msra.mxu0 %v1691
        %1777 = vmatpush.msra.mxu0 %v1688
        %1778 = vmatpush.msra.mxu0 %v1685
        %1779 = vmatpush.msra.mxu0 %v1682
        %1780 = vmatmul.f32.gmra.mxu0 %v1727
        %v1781 = vpop.f32.mrf.mxu0
        %v1782 = vadd.f32 0.0, %v1781
        %1783 = vmatmul.f32.gmra.mxu0 %v1730
        %v1784 = vpop.f32.mrf.mxu0
        %v1785 = vadd.f32 0.0, %v1784
        %1786 = vdwg.mxu0
        %1787 = vmatpush.msra.mxu0 0.0
        %1788 = vmatpush.msra.mxu0 %v1739
        %1789 = vmatpush.msra.mxu0 %v1722
        %1790 = vmatpush.msra.mxu0 %v1719
        %1791 = vmatpush.msra.mxu0 %v1716
        %1792 = vmatpush.msra.mxu0 %v1713
        %1793 = vmatpush.msra.mxu0 %v1710
        %1794 = vmatpush.msra.mxu0 %v1707
        %1795 = vmatpush.msra.mxu0 %v1704
        %1796 = vmatpush.msra.mxu0 %v1701
        %1797 = vmatpush.msra.mxu0 %v1698
        %1798 = vmatpush.msra.mxu0 %v1695
        %1799 = vmatpush.msra.mxu0 %v1692
        %1800 = vmatpush.msra.mxu0 %v1689
        %1801 = vmatpush.msra.mxu0 %v1686
        %1802 = vmatpush.msra.mxu0 %v1683
        %1803 = vmatmul.f32.gmra.mxu0 %v1727
        %v1804 = vpop.f32.mrf.mxu0
        %v1805 = vadd.f32 0.0, %v1804
        %1806 = vmatmul.f32.gmra.mxu0 %v1730
        %v1807 = vpop.f32.mrf.mxu0
        %v1808 = vadd.f32 0.0, %v1807
        %1809 = vdwg.mxu0
        %v1810 = vadd.f32 %v1642, %v1759
        %v1811 = vadd.f32 %v1643, %v1782
        %v1812 = vadd.f32 %v1644, %v1805
        %v1813 = vadd.f32 %v1645, %v1762
        %v1814 = vadd.f32 %v1646, %v1785
        %v1815 = vadd.f32 %v1647, %v1808
        %v1816 = vld [vmem:[#allocation6] sm:$0xff]
        %v1817 = vld [vmem:[#allocation6 + $0x8] sm:$0xff]
        %v1818 = vld [vmem:[#allocation6 + $0x10] sm:$0xff]
        %v1819 = vld [vmem:[#allocation6 + $0x18] sm:$0x7]
        %v1820 = vld [vmem:[#allocation6 + $0x20] sm:$0x7]
        %v1821 = vld [vmem:[#allocation6 + $0x28] sm:$0x7]
        %v1822 = vadd.f32 %v1810, %v1816
        %v1823 = vadd.f32 %v1811, %v1817
        %v1824 = vadd.f32 %v1812, %v1818
        %v1825 = vadd.f32 %v1813, %v1819
        %v1826 = vadd.f32 %v1814, %v1820
        %v1827 = vadd.f32 %v1815, %v1821
        %v1828 = vmax.f32 %v1822, 0.0
        %v1829 = vmax.f32 %v1823, 0.0
        %v1830 = vmax.f32 %v1824, 0.0
        %v1831 = vmax.f32 %v1825, 0.0
        %v1832 = vmax.f32 %v1826, 0.0
        %v1833 = vmax.f32 %v1827, 0.0
        %v1834 = vld [vmem:[#allocation7] sm:$0xf]
        %vm1835 = vcmask 89088
        %v1837 = vsel %vm1835, %v1834, 0
        %vm1839 = vcmask 1042432
        %v1841 = vsel %vm1839, %v1831, 0
        %v1844 = vsel %vm1839, %v1832, 0
        %v1847 = vsel %vm1839, %v1833, 0
        %1849 = vmatpush.msra.mxu0 0.0
        %1850 = vmatpush.msra.mxu0 0.0
        %1851 = vmatpush.msra.mxu0 0.0
        %1852 = vmatpush.msra.mxu0 0.0
        %1853 = vmatpush.msra.mxu0 0.0
        %1854 = vmatpush.msra.mxu0 0.0
        %1855 = vmatpush.msra.mxu0 0.0
        %1856 = vmatpush.msra.mxu0 0.0
        %1857 = vmatpush.msra.mxu0 0.0
        %1858 = vmatpush.msra.mxu0 0.0
        %1859 = vmatpush.msra.mxu0 0.0
        %1860 = vmatpush.msra.mxu0 0.0
        %1861 = vmatpush.msra.mxu0 0.0
        %1862 = vmatpush.msra.mxu0 0.0
        %1863 = vmatpush.msra.mxu0 %v1841
        %1864 = vmatpush.msra.mxu0 %v1828
        %1865 = vmatmul.f32.gmra.mxu0 %v1837
        %v1866 = vpop.f32.mrf.mxu0
        %v1867 = vadd.f32 0.0, %v1866
        %1868 = vdwg.mxu0
        %1869 = vmatpush.msra.mxu0 0.0
        %1870 = vmatpush.msra.mxu0 0.0
        %1871 = vmatpush.msra.mxu0 0.0
        %1872 = vmatpush.msra.mxu0 0.0
        %1873 = vmatpush.msra.mxu0 0.0
        %1874 = vmatpush.msra.mxu0 0.0
        %1875 = vmatpush.msra.mxu0 0.0
        %1876 = vmatpush.msra.mxu0 0.0
        %1877 = vmatpush.msra.mxu0 0.0
        %1878 = vmatpush.msra.mxu0 0.0
        %1879 = vmatpush.msra.mxu0 0.0
        %1880 = vmatpush.msra.mxu0 0.0
        %1881 = vmatpush.msra.mxu0 0.0
        %1882 = vmatpush.msra.mxu0 0.0
        %1883 = vmatpush.msra.mxu0 %v1844
        %1884 = vmatpush.msra.mxu0 %v1829
        %1885 = vmatmul.f32.gmra.mxu0 %v1837
        %v1886 = vpop.f32.mrf.mxu0
        %v1887 = vadd.f32 0.0, %v1886
        %1888 = vdwg.mxu0
        %1889 = vmatpush.msra.mxu0 0.0
        %1890 = vmatpush.msra.mxu0 0.0
        %1891 = vmatpush.msra.mxu0 0.0
        %1892 = vmatpush.msra.mxu0 0.0
        %1893 = vmatpush.msra.mxu0 0.0
        %1894 = vmatpush.msra.mxu0 0.0
        %1895 = vmatpush.msra.mxu0 0.0
        %1896 = vmatpush.msra.mxu0 0.0
        %1897 = vmatpush.msra.mxu0 0.0
        %1898 = vmatpush.msra.mxu0 0.0
        %1899 = vmatpush.msra.mxu0 0.0
        %1900 = vmatpush.msra.mxu0 0.0
        %1901 = vmatpush.msra.mxu0 0.0
        %1902 = vmatpush.msra.mxu0 0.0
        %1903 = vmatpush.msra.mxu0 %v1847
        %1904 = vmatpush.msra.mxu0 %v1830
        %1905 = vmatmul.f32.gmra.mxu0 %v1837
        %v1906 = vpop.f32.mrf.mxu0
        %v1907 = vadd.f32 0.0, %v1906
        %1908 = vdwg.mxu0
        %v1909 = vld [vmem:[#allocation9] sm:$0xff]
        %v1910 = vld [vmem:[#allocation9 + $0x8] sm:$0xff]
        %v1911 = vld [vmem:[#allocation9 + $0x10] sm:$0xff]
        %v1912 = vld [vmem:[#allocation9 + $0x18] sm:$0xff]
        %v1913 = vld [vmem:[#allocation9 + $0x20] sm:$0xff]
        %v1914 = vld [vmem:[#allocation9 + $0x28] sm:$0xff]
        %v1915 = vld [vmem:[#allocation9 + $0x30] sm:$0xff]
        %v1916 = vld [vmem:[#allocation9 + $0x38] sm:$0xff]
        %v1917 = vld [vmem:[#allocation9 + $0x40] sm:$0xff]
        %v1918 = vld [vmem:[#allocation9 + $0x48] sm:$0xff]
        %v1919 = vld [vmem:[#allocation9 + $0x50] sm:$0xff]
        %v1920 = vld [vmem:[#allocation9 + $0x58] sm:$0xff]
        %v1921 = vld [vmem:[#allocation9 + $0x60] sm:$0xff]
        %v1922 = vld [vmem:[#allocation9 + $0x68] sm:$0xff]
        %v1923 = vld [vmem:[#allocation9 + $0x70] sm:$0xff]
        %v1924 = vld [vmem:[#allocation9 + $0x78] sm:$0xff]
        %v1925 = vld [vmem:[#allocation9 + $0x80] sm:$0xff]
        %v1926 = vld [vmem:[#allocation9 + $0x88] sm:$0xff]
        %v1927 = vld [vmem:[#allocation9 + $0x90] sm:$0xff]
        %v1928 = vld [vmem:[#allocation9 + $0x98] sm:$0xff]
        %v1929 = vld [vmem:[#allocation9 + $0xa0] sm:$0xff]
        %v1930 = vld [vmem:[#allocation9 + $0xa8] sm:$0xff]
        %v1931 = vld [vmem:[#allocation9 + $0xb0] sm:$0xff]
        %v1932 = vld [vmem:[#allocation9 + $0xb8] sm:$0xff]
        %v1933 = vld [vmem:[#allocation9 + $0xc0] sm:$0xff]
        %v1934 = vld [vmem:[#allocation9 + $0xc8] sm:$0xff]
        %v1935 = vld [vmem:[#allocation9 + $0xd0] sm:$0xff]
        %v1936 = vld [vmem:[#allocation9 + $0xd8] sm:$0xff]
        %v1937 = vld [vmem:[#allocation9 + $0xe0] sm:$0xff]
        %v1938 = vld [vmem:[#allocation9 + $0xe8] sm:$0xff]
        %v1939 = vld [vmem:[#allocation9 + $0xf0] sm:$0xff]
        %v1940 = vld [vmem:[#allocation9 + $0xf8] sm:$0xff]
        %v1941 = vld [vmem:[#allocation9 + $0x100] sm:$0xff]
        %v1942 = vld [vmem:[#allocation9 + $0x108] sm:$0xff]
        %v1943 = vld [vmem:[#allocation9 + $0x110] sm:$0xff]
        %v1944 = vld [vmem:[#allocation9 + $0x118] sm:$0xff]
        %v1945 = vld [vmem:[#allocation9 + $0x120] sm:$0xff]
        %v1946 = vld [vmem:[#allocation9 + $0x128] sm:$0xff]
        %v1947 = vld [vmem:[#allocation9 + $0x130] sm:$0xff]
        %v1948 = vld [vmem:[#allocation9 + $0x138] sm:$0xff]
        %v1949 = vld [vmem:[#allocation9 + $0x140] sm:$0xff]
        %v1950 = vld [vmem:[#allocation9 + $0x148] sm:$0xff]
        %v1951 = vld [vmem:[#allocation9 + $0x150] sm:$0xff]
        %v1952 = vld [vmem:[#allocation9 + $0x158] sm:$0xff]
        %v1953 = vld [vmem:[#allocation9 + $0x160] sm:$0xff]
        %v1954 = vld [vmem:[#allocation9 + $0x168] sm:$0xff]
        %v1955 = vld [vmem:[#allocation9 + $0x170] sm:$0xff]
        %v1956 = vld [vmem:[#allocation9 + $0x178] sm:$0xff]
        %v1957 = vld [vmem:[#allocation9 + $0x180] sm:$0xff]
        %v1958 = vld [vmem:[#allocation9 + $0x188] sm:$0xff]
        %v1959 = vld [vmem:[#allocation9 + $0x190] sm:$0xff]
        %v1960 = vld [vmem:[#allocation9 + $0x198] sm:$0xff]
        %v1961 = vld [vmem:[#allocation9 + $0x1a0] sm:$0xff]
        %v1962 = vld [vmem:[#allocation9 + $0x1a8] sm:$0xff]
        %v1963 = vld [vmem:[#allocation9 + $0x1b0] sm:$0xff]
        %v1964 = vld [vmem:[#allocation9 + $0x1b8] sm:$0xff]
        %v1965 = vld [vmem:[#allocation9 + $0x1c0] sm:$0xff]
        %v1966 = vld [vmem:[#allocation9 + $0x1c8] sm:$0xff]
        %v1967 = vld [vmem:[#allocation9 + $0x1d0] sm:$0xff]
        %v1968 = vld [vmem:[#allocation9 + $0x1d8] sm:$0xff]
        %v1969 = vld [vmem:[#allocation9 + $0x1e0] sm:$0xff]
        %v1970 = vld [vmem:[#allocation9 + $0x1e8] sm:$0xff]
        %v1971 = vld [vmem:[#allocation9 + $0x1f0] sm:$0xff]
        %v1972 = vld [vmem:[#allocation9 + $0x1f8] sm:$0xff]
        %v1973 = vld [vmem:[#allocation9 + $0x200] sm:$0xff]
        %v1974 = vld [vmem:[#allocation9 + $0x208] sm:$0xff]
        %v1975 = vld [vmem:[#allocation9 + $0x210] sm:$0xff]
        %v1976 = vld [vmem:[#allocation9 + $0x218] sm:$0xff]
        %v1977 = vld [vmem:[#allocation9 + $0x220] sm:$0xff]
        %v1978 = vld [vmem:[#allocation9 + $0x228] sm:$0xff]
        %v1979 = vld [vmem:[#allocation9 + $0x230] sm:$0xff]
        %v1980 = vld [vmem:[#allocation9 + $0x238] sm:$0xff]
        %v1981 = vld [vmem:[#allocation9 + $0x240] sm:$0xff]
        %v1982 = vld [vmem:[#allocation9 + $0x248] sm:$0xff]
        %v1983 = vld [vmem:[#allocation9 + $0x250] sm:$0xff]
        %v1984 = vld [vmem:[#allocation9 + $0x258] sm:$0xff]
        %v1985 = vld [vmem:[#allocation9 + $0x260] sm:$0xff]
        %v1986 = vld [vmem:[#allocation9 + $0x268] sm:$0xff]
        %v1987 = vld [vmem:[#allocation9 + $0x270] sm:$0xff]
        %v1988 = vld [vmem:[#allocation9 + $0x278] sm:$0xff]
        %v1989 = vld [vmem:[#allocation9 + $0x280] sm:$0xff]
        %v1990 = vld [vmem:[#allocation9 + $0x288] sm:$0xff]
        %v1991 = vld [vmem:[#allocation9 + $0x290] sm:$0xff]
        %v1992 = vld [vmem:[#allocation9 + $0x298] sm:$0xff]
        %v1993 = vld [vmem:[#allocation9 + $0x2a0] sm:$0xff]
        %v1994 = vld [vmem:[#allocation9 + $0x2a8] sm:$0xff]
        %v1995 = vld [vmem:[#allocation9 + $0x2b0] sm:$0xff]
        %v1996 = vld [vmem:[#allocation9 + $0x2b8] sm:$0xff]
        %s1997 = scalar_lea.vmem [#allocation7], 4
        %v1998 = vld [vmem:[%s1997] sm:$0xf]
        %v2000 = vsel %vm1835, %v1998, 0
        %2002 = vmatpush.msra.mxu0 0.0
        %2003 = vmatpush.msra.mxu0 0.0
        %2004 = vmatpush.msra.mxu0 0.0
        %2005 = vmatpush.msra.mxu0 0.0
        %2006 = vmatpush.msra.mxu0 0.0
        %2007 = vmatpush.msra.mxu0 0.0
        %2008 = vmatpush.msra.mxu0 0.0
        %2009 = vmatpush.msra.mxu0 0.0
        %2010 = vmatpush.msra.mxu0 0.0
        %2011 = vmatpush.msra.mxu0 0.0
        %2012 = vmatpush.msra.mxu0 0.0
        %2013 = vmatpush.msra.mxu0 0.0
        %2014 = vmatpush.msra.mxu0 0.0
        %2015 = vmatpush.msra.mxu0 0.0
        %2016 = vmatpush.msra.mxu0 %v1841
        %2017 = vmatpush.msra.mxu0 %v1828
        %2018 = vmatmul.f32.gmra.mxu0 %v2000
        %v2019 = vpop.f32.mrf.mxu0
        %v2020 = vadd.f32 0.0, %v2019
        %2021 = vdwg.mxu0
        %2022 = vmatpush.msra.mxu0 0.0
        %2023 = vmatpush.msra.mxu0 0.0
        %2024 = vmatpush.msra.mxu0 0.0
        %2025 = vmatpush.msra.mxu0 0.0
        %2026 = vmatpush.msra.mxu0 0.0
        %2027 = vmatpush.msra.mxu0 0.0
        %2028 = vmatpush.msra.mxu0 0.0
        %2029 = vmatpush.msra.mxu0 0.0
        %2030 = vmatpush.msra.mxu0 0.0
        %2031 = vmatpush.msra.mxu0 0.0
        %2032 = vmatpush.msra.mxu0 0.0
        %2033 = vmatpush.msra.mxu0 0.0
        %2034 = vmatpush.msra.mxu0 0.0
        %2035 = vmatpush.msra.mxu0 0.0
        %2036 = vmatpush.msra.mxu0 %v1844
        %2037 = vmatpush.msra.mxu0 %v1829
        %2038 = vmatmul.f32.gmra.mxu0 %v2000
        %v2039 = vpop.f32.mrf.mxu0
        %v2040 = vadd.f32 0.0, %v2039
        %2041 = vdwg.mxu0
        %2042 = vmatpush.msra.mxu0 0.0
        %2043 = vmatpush.msra.mxu0 0.0
        %2044 = vmatpush.msra.mxu0 0.0
        %2045 = vmatpush.msra.mxu0 0.0
        %2046 = vmatpush.msra.mxu0 0.0
        %2047 = vmatpush.msra.mxu0 0.0
        %2048 = vmatpush.msra.mxu0 0.0
        %2049 = vmatpush.msra.mxu0 0.0
        %2050 = vmatpush.msra.mxu0 0.0
        %2051 = vmatpush.msra.mxu0 0.0
        %2052 = vmatpush.msra.mxu0 0.0
        %2053 = vmatpush.msra.mxu0 0.0
        %2054 = vmatpush.msra.mxu0 0.0
        %2055 = vmatpush.msra.mxu0 0.0
        %2056 = vmatpush.msra.mxu0 %v1847
        %2057 = vmatpush.msra.mxu0 %v1830
        %2058 = vmatmul.f32.gmra.mxu0 %v2000
        %v2059 = vpop.f32.mrf.mxu0
        %v2060 = vadd.f32 0.0, %v2059
        %2061 = vdwg.mxu0
        %s2062 = scalar_lea.vmem [#allocation9], 704
        %v2063 = vld [vmem:[%s2062] sm:$0xff]
        %v2064 = vld [vmem:[%s2062 + $0x8] sm:$0xff]
        %v2065 = vld [vmem:[%s2062 + $0x10] sm:$0xff]
        %v2066 = vld [vmem:[%s2062 + $0x18] sm:$0xff]
        %v2067 = vld [vmem:[%s2062 + $0x20] sm:$0xff]
        %v2068 = vld [vmem:[%s2062 + $0x28] sm:$0xff]
        %v2069 = vld [vmem:[%s2062 + $0x30] sm:$0xff]
        %v2070 = vld [vmem:[%s2062 + $0x38] sm:$0xff]
        %v2071 = vld [vmem:[%s2062 + $0x40] sm:$0xff]
        %v2072 = vld [vmem:[%s2062 + $0x48] sm:$0xff]
        %v2073 = vld [vmem:[%s2062 + $0x50] sm:$0xff]
        %v2074 = vld [vmem:[%s2062 + $0x58] sm:$0xff]
        %v2075 = vld [vmem:[%s2062 + $0x60] sm:$0xff]
        %v2076 = vld [vmem:[%s2062 + $0x68] sm:$0xff]
        %v2077 = vld [vmem:[%s2062 + $0x70] sm:$0xff]
        %v2078 = vld [vmem:[%s2062 + $0x78] sm:$0xff]
        %v2079 = vld [vmem:[%s2062 + $0x80] sm:$0xff]
        %v2080 = vld [vmem:[%s2062 + $0x88] sm:$0xff]
        %v2081 = vld [vmem:[%s2062 + $0x90] sm:$0xff]
        %v2082 = vld [vmem:[%s2062 + $0x98] sm:$0xff]
        %v2083 = vld [vmem:[%s2062 + $0xa0] sm:$0xff]
        %v2084 = vld [vmem:[%s2062 + $0xa8] sm:$0xff]
        %v2085 = vld [vmem:[%s2062 + $0xb0] sm:$0xff]
        %v2086 = vld [vmem:[%s2062 + $0xb8] sm:$0xff]
        %v2087 = vld [vmem:[%s2062 + $0xc0] sm:$0xff]
        %v2088 = vld [vmem:[%s2062 + $0xc8] sm:$0xff]
        %v2089 = vld [vmem:[%s2062 + $0xd0] sm:$0xff]
        %v2090 = vld [vmem:[%s2062 + $0xd8] sm:$0xff]
        %v2091 = vld [vmem:[%s2062 + $0xe0] sm:$0xff]
        %v2092 = vld [vmem:[%s2062 + $0xe8] sm:$0xff]
        %v2093 = vld [vmem:[%s2062 + $0xf0] sm:$0xff]
        %v2094 = vld [vmem:[%s2062 + $0xf8] sm:$0xff]
        %v2095 = vld [vmem:[%s2062 + $0x100] sm:$0xff]
        %v2096 = vld [vmem:[%s2062 + $0x108] sm:$0xff]
        %v2097 = vld [vmem:[%s2062 + $0x110] sm:$0xff]
        %v2098 = vld [vmem:[%s2062 + $0x118] sm:$0xff]
        %v2099 = vld [vmem:[%s2062 + $0x120] sm:$0xff]
        %v2100 = vld [vmem:[%s2062 + $0x128] sm:$0xff]
        %v2101 = vld [vmem:[%s2062 + $0x130] sm:$0xff]
        %v2102 = vld [vmem:[%s2062 + $0x138] sm:$0xff]
        %v2103 = vld [vmem:[%s2062 + $0x140] sm:$0xff]
        %v2104 = vld [vmem:[%s2062 + $0x148] sm:$0xff]
        %v2105 = vld [vmem:[%s2062 + $0x150] sm:$0xff]
        %v2106 = vld [vmem:[%s2062 + $0x158] sm:$0xff]
        %v2107 = vld [vmem:[%s2062 + $0x160] sm:$0xff]
        %v2108 = vld [vmem:[%s2062 + $0x168] sm:$0xff]
        %v2109 = vld [vmem:[%s2062 + $0x170] sm:$0xff]
        %v2110 = vld [vmem:[%s2062 + $0x178] sm:$0xff]
        %v2111 = vld [vmem:[%s2062 + $0x180] sm:$0xff]
        %v2112 = vld [vmem:[%s2062 + $0x188] sm:$0xff]
        %v2113 = vld [vmem:[%s2062 + $0x190] sm:$0xff]
        %v2114 = vld [vmem:[%s2062 + $0x198] sm:$0xff]
        %v2115 = vld [vmem:[%s2062 + $0x1a0] sm:$0xff]
        %v2116 = vld [vmem:[%s2062 + $0x1a8] sm:$0xff]
        %v2117 = vld [vmem:[%s2062 + $0x1b0] sm:$0xff]
        %v2118 = vld [vmem:[%s2062 + $0x1b8] sm:$0xff]
        %v2119 = vld [vmem:[%s2062 + $0x1c0] sm:$0xff]
        %v2120 = vld [vmem:[%s2062 + $0x1c8] sm:$0xff]
        %v2121 = vld [vmem:[%s2062 + $0x1d0] sm:$0xff]
        %v2122 = vld [vmem:[%s2062 + $0x1d8] sm:$0xff]
        %v2123 = vld [vmem:[%s2062 + $0x1e0] sm:$0xff]
        %v2124 = vld [vmem:[%s2062 + $0x1e8] sm:$0xff]
        %v2125 = vld [vmem:[%s2062 + $0x1f0] sm:$0xff]
        %v2126 = vld [vmem:[%s2062 + $0x1f8] sm:$0xff]
        %v2127 = vld [vmem:[%s2062 + $0x200] sm:$0xff]
        %v2128 = vld [vmem:[%s2062 + $0x208] sm:$0xff]
        %v2129 = vld [vmem:[%s2062 + $0x210] sm:$0xff]
        %v2130 = vld [vmem:[%s2062 + $0x218] sm:$0xff]
        %v2131 = vld [vmem:[%s2062 + $0x220] sm:$0xff]
        %v2132 = vld [vmem:[%s2062 + $0x228] sm:$0xff]
        %v2133 = vld [vmem:[%s2062 + $0x230] sm:$0xff]
        %v2134 = vld [vmem:[%s2062 + $0x238] sm:$0xff]
        %v2135 = vld [vmem:[%s2062 + $0x240] sm:$0xff]
        %v2136 = vld [vmem:[%s2062 + $0x248] sm:$0xff]
        %v2137 = vld [vmem:[%s2062 + $0x250] sm:$0xff]
        %v2138 = vld [vmem:[%s2062 + $0x258] sm:$0xff]
        %v2139 = vld [vmem:[%s2062 + $0x260] sm:$0xff]
        %v2140 = vld [vmem:[%s2062 + $0x268] sm:$0xff]
        %v2141 = vld [vmem:[%s2062 + $0x270] sm:$0xff]
        %v2142 = vld [vmem:[%s2062 + $0x278] sm:$0xff]
        %v2143 = vld [vmem:[%s2062 + $0x280] sm:$0xff]
        %v2144 = vld [vmem:[%s2062 + $0x288] sm:$0xff]
        %v2145 = vld [vmem:[%s2062 + $0x290] sm:$0xff]
        %v2146 = vld [vmem:[%s2062 + $0x298] sm:$0xff]
        %v2147 = vld [vmem:[%s2062 + $0x2a0] sm:$0xff]
        %v2148 = vld [vmem:[%s2062 + $0x2a8] sm:$0xff]
        %v2149 = vld [vmem:[%s2062 + $0x2b0] sm:$0xff]
        %v2150 = vld [vmem:[%s2062 + $0x2b8] sm:$0xff]
        %vm2151 = vcmask 785408
        %v2153 = vsel %vm2151, %v2060, 0
        %2155 = vmatpush.msra.mxu0 %v2093
        %2156 = vmatpush.msra.mxu0 %v2091
        %2157 = vmatpush.msra.mxu0 %v2089
        %2158 = vmatpush.msra.mxu0 %v2087
        %2159 = vmatpush.msra.mxu0 %v2085
        %2160 = vmatpush.msra.mxu0 %v2083
        %2161 = vmatpush.msra.mxu0 %v2081
        %2162 = vmatpush.msra.mxu0 %v2079
        %2163 = vmatpush.msra.mxu0 %v2077
        %2164 = vmatpush.msra.mxu0 %v2075
        %2165 = vmatpush.msra.mxu0 %v2073
        %2166 = vmatpush.msra.mxu0 %v2071
        %2167 = vmatpush.msra.mxu0 %v2069
        %2168 = vmatpush.msra.mxu0 %v2067
        %2169 = vmatpush.msra.mxu0 %v2065
        %2170 = vmatpush.msra.mxu0 %v2063
        %2171 = vmatmul.f32.gmra.mxu0 %v2020
        %v2172 = vpop.f32.mrf.mxu0
        %v2173 = vadd.f32 0.0, %v2172
        %2174 = vdwg.mxu0
        %2175 = vmatpush.msra.mxu0 %v2125
        %2176 = vmatpush.msra.mxu0 %v2123
        %2177 = vmatpush.msra.mxu0 %v2121
        %2178 = vmatpush.msra.mxu0 %v2119
        %2179 = vmatpush.msra.mxu0 %v2117
        %2180 = vmatpush.msra.mxu0 %v2115
        %2181 = vmatpush.msra.mxu0 %v2113
        %2182 = vmatpush.msra.mxu0 %v2111
        %2183 = vmatpush.msra.mxu0 %v2109
        %2184 = vmatpush.msra.mxu0 %v2107
        %2185 = vmatpush.msra.mxu0 %v2105
        %2186 = vmatpush.msra.mxu0 %v2103
        %2187 = vmatpush.msra.mxu0 %v2101
        %2188 = vmatpush.msra.mxu0 %v2099
        %2189 = vmatpush.msra.mxu0 %v2097
        %2190 = vmatpush.msra.mxu0 %v2095
        %2191 = vmatmul.f32.gmra.mxu0 %v2040
        %v2192 = vpop.f32.mrf.mxu0
        %v2193 = vadd.f32 %v2173, %v2192
        %2194 = vdwg.mxu0
        %2195 = vmatpush.msra.mxu0 0.0
        %2196 = vmatpush.msra.mxu0 0.0
        %2197 = vmatpush.msra.mxu0 0.0
        %2198 = vmatpush.msra.mxu0 0.0
        %2199 = vmatpush.msra.mxu0 %v2149
        %2200 = vmatpush.msra.mxu0 %v2147
        %2201 = vmatpush.msra.mxu0 %v2145
        %2202 = vmatpush.msra.mxu0 %v2143
        %2203 = vmatpush.msra.mxu0 %v2141
        %2204 = vmatpush.msra.mxu0 %v2139
        %2205 = vmatpush.msra.mxu0 %v2137
        %2206 = vmatpush.msra.mxu0 %v2135
        %2207 = vmatpush.msra.mxu0 %v2133
        %2208 = vmatpush.msra.mxu0 %v2131
        %2209 = vmatpush.msra.mxu0 %v2129
        %2210 = vmatpush.msra.mxu0 %v2127
        %2211 = vmatmul.f32.gmra.mxu0 %v2153
        %v2212 = vpop.f32.mrf.mxu0
        %v2213 = vadd.f32 %v2193, %v2212
        %2214 = vdwg.mxu0
        %2215 = vmatpush.msra.mxu0 %v2094
        %2216 = vmatpush.msra.mxu0 %v2092
        %2217 = vmatpush.msra.mxu0 %v2090
        %2218 = vmatpush.msra.mxu0 %v2088
        %2219 = vmatpush.msra.mxu0 %v2086
        %2220 = vmatpush.msra.mxu0 %v2084
        %2221 = vmatpush.msra.mxu0 %v2082
        %2222 = vmatpush.msra.mxu0 %v2080
        %2223 = vmatpush.msra.mxu0 %v2078
        %2224 = vmatpush.msra.mxu0 %v2076
        %2225 = vmatpush.msra.mxu0 %v2074
        %2226 = vmatpush.msra.mxu0 %v2072
        %2227 = vmatpush.msra.mxu0 %v2070
        %2228 = vmatpush.msra.mxu0 %v2068
        %2229 = vmatpush.msra.mxu0 %v2066
        %2230 = vmatpush.msra.mxu0 %v2064
        %2231 = vmatmul.f32.gmra.mxu0 %v2020
        %v2232 = vpop.f32.mrf.mxu0
        %v2233 = vadd.f32 0.0, %v2232
        %2234 = vdwg.mxu0
        %2235 = vmatpush.msra.mxu0 %v2126
        %2236 = vmatpush.msra.mxu0 %v2124
        %2237 = vmatpush.msra.mxu0 %v2122
        %2238 = vmatpush.msra.mxu0 %v2120
        %2239 = vmatpush.msra.mxu0 %v2118
        %2240 = vmatpush.msra.mxu0 %v2116
        %2241 = vmatpush.msra.mxu0 %v2114
        %2242 = vmatpush.msra.mxu0 %v2112
        %2243 = vmatpush.msra.mxu0 %v2110
        %2244 = vmatpush.msra.mxu0 %v2108
        %2245 = vmatpush.msra.mxu0 %v2106
        %2246 = vmatpush.msra.mxu0 %v2104
        %2247 = vmatpush.msra.mxu0 %v2102
        %2248 = vmatpush.msra.mxu0 %v2100
        %2249 = vmatpush.msra.mxu0 %v2098
        %2250 = vmatpush.msra.mxu0 %v2096
        %2251 = vmatmul.f32.gmra.mxu0 %v2040
        %v2252 = vpop.f32.mrf.mxu0
        %v2253 = vadd.f32 %v2233, %v2252
        %2254 = vdwg.mxu0
        %2255 = vmatpush.msra.mxu0 0.0
        %2256 = vmatpush.msra.mxu0 0.0
        %2257 = vmatpush.msra.mxu0 0.0
        %2258 = vmatpush.msra.mxu0 0.0
        %2259 = vmatpush.msra.mxu0 %v2150
        %2260 = vmatpush.msra.mxu0 %v2148
        %2261 = vmatpush.msra.mxu0 %v2146
        %2262 = vmatpush.msra.mxu0 %v2144
        %2263 = vmatpush.msra.mxu0 %v2142
        %2264 = vmatpush.msra.mxu0 %v2140
        %2265 = vmatpush.msra.mxu0 %v2138
        %2266 = vmatpush.msra.mxu0 %v2136
        %2267 = vmatpush.msra.mxu0 %v2134
        %2268 = vmatpush.msra.mxu0 %v2132
        %2269 = vmatpush.msra.mxu0 %v2130
        %2270 = vmatpush.msra.mxu0 %v2128
        %2271 = vmatmul.f32.gmra.mxu0 %v2153
        %v2272 = vpop.f32.mrf.mxu0
        %v2273 = vadd.f32 %v2253, %v2272
        %2274 = vdwg.mxu0
        %v2276 = vsel %vm2151, %v1907, 0
        %2278 = vmatpush.msra.mxu0 %v1939
        %2279 = vmatpush.msra.mxu0 %v1937
        %2280 = vmatpush.msra.mxu0 %v1935
        %2281 = vmatpush.msra.mxu0 %v1933
        %2282 = vmatpush.msra.mxu0 %v1931
        %2283 = vmatpush.msra.mxu0 %v1929
        %2284 = vmatpush.msra.mxu0 %v1927
        %2285 = vmatpush.msra.mxu0 %v1925
        %2286 = vmatpush.msra.mxu0 %v1923
        %2287 = vmatpush.msra.mxu0 %v1921
        %2288 = vmatpush.msra.mxu0 %v1919
        %2289 = vmatpush.msra.mxu0 %v1917
        %2290 = vmatpush.msra.mxu0 %v1915
        %2291 = vmatpush.msra.mxu0 %v1913
        %2292 = vmatpush.msra.mxu0 %v1911
        %2293 = vmatpush.msra.mxu0 %v1909
        %2294 = vmatmul.f32.gmra.mxu0 %v1867
        %v2295 = vpop.f32.mrf.mxu0
        %v2296 = vadd.f32 %v2213, %v2295
        %2297 = vdwg.mxu0
        %2298 = vmatpush.msra.mxu0 %v1971
        %2299 = vmatpush.msra.mxu0 %v1969
        %2300 = vmatpush.msra.mxu0 %v1967
        %2301 = vmatpush.msra.mxu0 %v1965
        %2302 = vmatpush.msra.mxu0 %v1963
        %2303 = vmatpush.msra.mxu0 %v1961
        %2304 = vmatpush.msra.mxu0 %v1959
        %2305 = vmatpush.msra.mxu0 %v1957
        %2306 = vmatpush.msra.mxu0 %v1955
        %2307 = vmatpush.msra.mxu0 %v1953
        %2308 = vmatpush.msra.mxu0 %v1951
        %2309 = vmatpush.msra.mxu0 %v1949
        %2310 = vmatpush.msra.mxu0 %v1947
        %2311 = vmatpush.msra.mxu0 %v1945
        %2312 = vmatpush.msra.mxu0 %v1943
        %2313 = vmatpush.msra.mxu0 %v1941
        %2314 = vmatmul.f32.gmra.mxu0 %v1887
        %v2315 = vpop.f32.mrf.mxu0
        %v2316 = vadd.f32 %v2296, %v2315
        %2317 = vdwg.mxu0
        %2318 = vmatpush.msra.mxu0 0.0
        %2319 = vmatpush.msra.mxu0 0.0
        %2320 = vmatpush.msra.mxu0 0.0
        %2321 = vmatpush.msra.mxu0 0.0
        %2322 = vmatpush.msra.mxu0 %v1995
        %2323 = vmatpush.msra.mxu0 %v1993
        %2324 = vmatpush.msra.mxu0 %v1991
        %2325 = vmatpush.msra.mxu0 %v1989
        %2326 = vmatpush.msra.mxu0 %v1987
        %2327 = vmatpush.msra.mxu0 %v1985
        %2328 = vmatpush.msra.mxu0 %v1983
        %2329 = vmatpush.msra.mxu0 %v1981
        %2330 = vmatpush.msra.mxu0 %v1979
        %2331 = vmatpush.msra.mxu0 %v1977
        %2332 = vmatpush.msra.mxu0 %v1975
        %2333 = vmatpush.msra.mxu0 %v1973
        %2334 = vmatmul.f32.gmra.mxu0 %v2276
        %v2335 = vpop.f32.mrf.mxu0
        %v2336 = vadd.f32 %v2316, %v2335
        %2337 = vdwg.mxu0
        %2338 = vmatpush.msra.mxu0 %v1940
        %2339 = vmatpush.msra.mxu0 %v1938
        %2340 = vmatpush.msra.mxu0 %v1936
        %2341 = vmatpush.msra.mxu0 %v1934
        %2342 = vmatpush.msra.mxu0 %v1932
        %2343 = vmatpush.msra.mxu0 %v1930
        %2344 = vmatpush.msra.mxu0 %v1928
        %2345 = vmatpush.msra.mxu0 %v1926
        %2346 = vmatpush.msra.mxu0 %v1924
        %2347 = vmatpush.msra.mxu0 %v1922
        %2348 = vmatpush.msra.mxu0 %v1920
        %2349 = vmatpush.msra.mxu0 %v1918
        %2350 = vmatpush.msra.mxu0 %v1916
        %2351 = vmatpush.msra.mxu0 %v1914
        %2352 = vmatpush.msra.mxu0 %v1912
        %2353 = vmatpush.msra.mxu0 %v1910
        %2354 = vmatmul.f32.gmra.mxu0 %v1867
        %v2355 = vpop.f32.mrf.mxu0
        %v2356 = vadd.f32 %v2273, %v2355
        %2357 = vdwg.mxu0
        %2358 = vmatpush.msra.mxu0 %v1972
        %2359 = vmatpush.msra.mxu0 %v1970
        %2360 = vmatpush.msra.mxu0 %v1968
        %2361 = vmatpush.msra.mxu0 %v1966
        %2362 = vmatpush.msra.mxu0 %v1964
        %2363 = vmatpush.msra.mxu0 %v1962
        %2364 = vmatpush.msra.mxu0 %v1960
        %2365 = vmatpush.msra.mxu0 %v1958
        %2366 = vmatpush.msra.mxu0 %v1956
        %2367 = vmatpush.msra.mxu0 %v1954
        %2368 = vmatpush.msra.mxu0 %v1952
        %2369 = vmatpush.msra.mxu0 %v1950
        %2370 = vmatpush.msra.mxu0 %v1948
        %2371 = vmatpush.msra.mxu0 %v1946
        %2372 = vmatpush.msra.mxu0 %v1944
        %2373 = vmatpush.msra.mxu0 %v1942
        %2374 = vmatmul.f32.gmra.mxu0 %v1887
        %v2375 = vpop.f32.mrf.mxu0
        %v2376 = vadd.f32 %v2356, %v2375
        %2377 = vdwg.mxu0
        %2378 = vmatpush.msra.mxu0 0.0
        %2379 = vmatpush.msra.mxu0 0.0
        %2380 = vmatpush.msra.mxu0 0.0
        %2381 = vmatpush.msra.mxu0 0.0
        %2382 = vmatpush.msra.mxu0 %v1996
        %2383 = vmatpush.msra.mxu0 %v1994
        %2384 = vmatpush.msra.mxu0 %v1992
        %2385 = vmatpush.msra.mxu0 %v1990
        %2386 = vmatpush.msra.mxu0 %v1988
        %2387 = vmatpush.msra.mxu0 %v1986
        %2388 = vmatpush.msra.mxu0 %v1984
        %2389 = vmatpush.msra.mxu0 %v1982
        %2390 = vmatpush.msra.mxu0 %v1980
        %2391 = vmatpush.msra.mxu0 %v1978
        %2392 = vmatpush.msra.mxu0 %v1976
        %2393 = vmatpush.msra.mxu0 %v1974
        %2394 = vmatmul.f32.gmra.mxu0 %v2276
        %v2395 = vpop.f32.mrf.mxu0
        %v2396 = vadd.f32 %v2376, %v2395
        %2397 = vdwg.mxu0
        %s2398 = scalar_lea.vmem [#allocation7], 8
        %v2399 = vld [vmem:[%s2398] sm:$0xf]
        %v2401 = vsel %vm1835, %v2399, 0
        %2403 = vmatpush.msra.mxu0 0.0
        %2404 = vmatpush.msra.mxu0 0.0
        %2405 = vmatpush.msra.mxu0 0.0
        %2406 = vmatpush.msra.mxu0 0.0
        %2407 = vmatpush.msra.mxu0 0.0
        %2408 = vmatpush.msra.mxu0 0.0
        %2409 = vmatpush.msra.mxu0 0.0
        %2410 = vmatpush.msra.mxu0 0.0
        %2411 = vmatpush.msra.mxu0 0.0
        %2412 = vmatpush.msra.mxu0 0.0
        %2413 = vmatpush.msra.mxu0 0.0
        %2414 = vmatpush.msra.mxu0 0.0
        %2415 = vmatpush.msra.mxu0 0.0
        %2416 = vmatpush.msra.mxu0 0.0
        %2417 = vmatpush.msra.mxu0 %v1841
        %2418 = vmatpush.msra.mxu0 %v1828
        %2419 = vmatmul.f32.gmra.mxu0 %v2401
        %v2420 = vpop.f32.mrf.mxu0
        %v2421 = vadd.f32 0.0, %v2420
        %2422 = vdwg.mxu0
        %2423 = vmatpush.msra.mxu0 0.0
        %2424 = vmatpush.msra.mxu0 0.0
        %2425 = vmatpush.msra.mxu0 0.0
        %2426 = vmatpush.msra.mxu0 0.0
        %2427 = vmatpush.msra.mxu0 0.0
        %2428 = vmatpush.msra.mxu0 0.0
        %2429 = vmatpush.msra.mxu0 0.0
        %2430 = vmatpush.msra.mxu0 0.0
        %2431 = vmatpush.msra.mxu0 0.0
        %2432 = vmatpush.msra.mxu0 0.0
        %2433 = vmatpush.msra.mxu0 0.0
        %2434 = vmatpush.msra.mxu0 0.0
        %2435 = vmatpush.msra.mxu0 0.0
        %2436 = vmatpush.msra.mxu0 0.0
        %2437 = vmatpush.msra.mxu0 %v1844
        %2438 = vmatpush.msra.mxu0 %v1829
        %2439 = vmatmul.f32.gmra.mxu0 %v2401
        %v2440 = vpop.f32.mrf.mxu0
        %v2441 = vadd.f32 0.0, %v2440
        %2442 = vdwg.mxu0
        %2443 = vmatpush.msra.mxu0 0.0
        %2444 = vmatpush.msra.mxu0 0.0
        %2445 = vmatpush.msra.mxu0 0.0
        %2446 = vmatpush.msra.mxu0 0.0
        %2447 = vmatpush.msra.mxu0 0.0
        %2448 = vmatpush.msra.mxu0 0.0
        %2449 = vmatpush.msra.mxu0 0.0
        %2450 = vmatpush.msra.mxu0 0.0
        %2451 = vmatpush.msra.mxu0 0.0
        %2452 = vmatpush.msra.mxu0 0.0
        %2453 = vmatpush.msra.mxu0 0.0
        %2454 = vmatpush.msra.mxu0 0.0
        %2455 = vmatpush.msra.mxu0 0.0
        %2456 = vmatpush.msra.mxu0 0.0
        %2457 = vmatpush.msra.mxu0 %v1847
        %2458 = vmatpush.msra.mxu0 %v1830
        %2459 = vmatmul.f32.gmra.mxu0 %v2401
        %v2460 = vpop.f32.mrf.mxu0
        %v2461 = vadd.f32 0.0, %v2460
        %2462 = vdwg.mxu0
        %s2463 = scalar_lea.vmem [#allocation9], 1408
        %v2464 = vld [vmem:[%s2463] sm:$0xff]
        %v2465 = vld [vmem:[%s2463 + $0x8] sm:$0xff]
        %v2466 = vld [vmem:[%s2463 + $0x10] sm:$0xff]
        %v2467 = vld [vmem:[%s2463 + $0x18] sm:$0xff]
        %v2468 = vld [vmem:[%s2463 + $0x20] sm:$0xff]
        %v2469 = vld [vmem:[%s2463 + $0x28] sm:$0xff]
        %v2470 = vld [vmem:[%s2463 + $0x30] sm:$0xff]
        %v2471 = vld [vmem:[%s2463 + $0x38] sm:$0xff]
        %v2472 = vld [vmem:[%s2463 + $0x40] sm:$0xff]
        %v2473 = vld [vmem:[%s2463 + $0x48] sm:$0xff]
        %v2474 = vld [vmem:[%s2463 + $0x50] sm:$0xff]
        %v2475 = vld [vmem:[%s2463 + $0x58] sm:$0xff]
        %v2476 = vld [vmem:[%s2463 + $0x60] sm:$0xff]
        %v2477 = vld [vmem:[%s2463 + $0x68] sm:$0xff]
        %v2478 = vld [vmem:[%s2463 + $0x70] sm:$0xff]
        %v2479 = vld [vmem:[%s2463 + $0x78] sm:$0xff]
        %v2480 = vld [vmem:[%s2463 + $0x80] sm:$0xff]
        %v2481 = vld [vmem:[%s2463 + $0x88] sm:$0xff]
        %v2482 = vld [vmem:[%s2463 + $0x90] sm:$0xff]
        %v2483 = vld [vmem:[%s2463 + $0x98] sm:$0xff]
        %v2484 = vld [vmem:[%s2463 + $0xa0] sm:$0xff]
        %v2485 = vld [vmem:[%s2463 + $0xa8] sm:$0xff]
        %v2486 = vld [vmem:[%s2463 + $0xb0] sm:$0xff]
        %v2487 = vld [vmem:[%s2463 + $0xb8] sm:$0xff]
        %v2488 = vld [vmem:[%s2463 + $0xc0] sm:$0xff]
        %v2489 = vld [vmem:[%s2463 + $0xc8] sm:$0xff]
        %v2490 = vld [vmem:[%s2463 + $0xd0] sm:$0xff]
        %v2491 = vld [vmem:[%s2463 + $0xd8] sm:$0xff]
        %v2492 = vld [vmem:[%s2463 + $0xe0] sm:$0xff]
        %v2493 = vld [vmem:[%s2463 + $0xe8] sm:$0xff]
        %v2494 = vld [vmem:[%s2463 + $0xf0] sm:$0xff]
        %v2495 = vld [vmem:[%s2463 + $0xf8] sm:$0xff]
        %v2496 = vld [vmem:[%s2463 + $0x100] sm:$0xff]
        %v2497 = vld [vmem:[%s2463 + $0x108] sm:$0xff]
        %v2498 = vld [vmem:[%s2463 + $0x110] sm:$0xff]
        %v2499 = vld [vmem:[%s2463 + $0x118] sm:$0xff]
        %v2500 = vld [vmem:[%s2463 + $0x120] sm:$0xff]
        %v2501 = vld [vmem:[%s2463 + $0x128] sm:$0xff]
        %v2502 = vld [vmem:[%s2463 + $0x130] sm:$0xff]
        %v2503 = vld [vmem:[%s2463 + $0x138] sm:$0xff]
        %v2504 = vld [vmem:[%s2463 + $0x140] sm:$0xff]
        %v2505 = vld [vmem:[%s2463 + $0x148] sm:$0xff]
        %v2506 = vld [vmem:[%s2463 + $0x150] sm:$0xff]
        %v2507 = vld [vmem:[%s2463 + $0x158] sm:$0xff]
        %v2508 = vld [vmem:[%s2463 + $0x160] sm:$0xff]
        %v2509 = vld [vmem:[%s2463 + $0x168] sm:$0xff]
        %v2510 = vld [vmem:[%s2463 + $0x170] sm:$0xff]
        %v2511 = vld [vmem:[%s2463 + $0x178] sm:$0xff]
        %v2512 = vld [vmem:[%s2463 + $0x180] sm:$0xff]
        %v2513 = vld [vmem:[%s2463 + $0x188] sm:$0xff]
        %v2514 = vld [vmem:[%s2463 + $0x190] sm:$0xff]
        %v2515 = vld [vmem:[%s2463 + $0x198] sm:$0xff]
        %v2516 = vld [vmem:[%s2463 + $0x1a0] sm:$0xff]
        %v2517 = vld [vmem:[%s2463 + $0x1a8] sm:$0xff]
        %v2518 = vld [vmem:[%s2463 + $0x1b0] sm:$0xff]
        %v2519 = vld [vmem:[%s2463 + $0x1b8] sm:$0xff]
        %v2520 = vld [vmem:[%s2463 + $0x1c0] sm:$0xff]
        %v2521 = vld [vmem:[%s2463 + $0x1c8] sm:$0xff]
        %v2522 = vld [vmem:[%s2463 + $0x1d0] sm:$0xff]
        %v2523 = vld [vmem:[%s2463 + $0x1d8] sm:$0xff]
        %v2524 = vld [vmem:[%s2463 + $0x1e0] sm:$0xff]
        %v2525 = vld [vmem:[%s2463 + $0x1e8] sm:$0xff]
        %v2526 = vld [vmem:[%s2463 + $0x1f0] sm:$0xff]
        %v2527 = vld [vmem:[%s2463 + $0x1f8] sm:$0xff]
        %v2528 = vld [vmem:[%s2463 + $0x200] sm:$0xff]
        %v2529 = vld [vmem:[%s2463 + $0x208] sm:$0xff]
        %v2530 = vld [vmem:[%s2463 + $0x210] sm:$0xff]
        %v2531 = vld [vmem:[%s2463 + $0x218] sm:$0xff]
        %v2532 = vld [vmem:[%s2463 + $0x220] sm:$0xff]
        %v2533 = vld [vmem:[%s2463 + $0x228] sm:$0xff]
        %v2534 = vld [vmem:[%s2463 + $0x230] sm:$0xff]
        %v2535 = vld [vmem:[%s2463 + $0x238] sm:$0xff]
        %v2536 = vld [vmem:[%s2463 + $0x240] sm:$0xff]
        %v2537 = vld [vmem:[%s2463 + $0x248] sm:$0xff]
        %v2538 = vld [vmem:[%s2463 + $0x250] sm:$0xff]
        %v2539 = vld [vmem:[%s2463 + $0x258] sm:$0xff]
        %v2540 = vld [vmem:[%s2463 + $0x260] sm:$0xff]
        %v2541 = vld [vmem:[%s2463 + $0x268] sm:$0xff]
        %v2542 = vld [vmem:[%s2463 + $0x270] sm:$0xff]
        %v2543 = vld [vmem:[%s2463 + $0x278] sm:$0xff]
        %v2544 = vld [vmem:[%s2463 + $0x280] sm:$0xff]
        %v2545 = vld [vmem:[%s2463 + $0x288] sm:$0xff]
        %v2546 = vld [vmem:[%s2463 + $0x290] sm:$0xff]
        %v2547 = vld [vmem:[%s2463 + $0x298] sm:$0xff]
        %v2548 = vld [vmem:[%s2463 + $0x2a0] sm:$0xff]
        %v2549 = vld [vmem:[%s2463 + $0x2a8] sm:$0xff]
        %v2550 = vld [vmem:[%s2463 + $0x2b0] sm:$0xff]
        %v2551 = vld [vmem:[%s2463 + $0x2b8] sm:$0xff]
        %v2553 = vsel %vm2151, %v2461, 0
        %2555 = vmatpush.msra.mxu0 %v2494
        %2556 = vmatpush.msra.mxu0 %v2492
        %2557 = vmatpush.msra.mxu0 %v2490
        %2558 = vmatpush.msra.mxu0 %v2488
        %2559 = vmatpush.msra.mxu0 %v2486
        %2560 = vmatpush.msra.mxu0 %v2484
        %2561 = vmatpush.msra.mxu0 %v2482
        %2562 = vmatpush.msra.mxu0 %v2480
        %2563 = vmatpush.msra.mxu0 %v2478
        %2564 = vmatpush.msra.mxu0 %v2476
        %2565 = vmatpush.msra.mxu0 %v2474
        %2566 = vmatpush.msra.mxu0 %v2472
        %2567 = vmatpush.msra.mxu0 %v2470
        %2568 = vmatpush.msra.mxu0 %v2468
        %2569 = vmatpush.msra.mxu0 %v2466
        %2570 = vmatpush.msra.mxu0 %v2464
        %2571 = vmatmul.f32.gmra.mxu0 %v2421
        %v2572 = vpop.f32.mrf.mxu0
        %v2573 = vadd.f32 0.0, %v2572
        %2574 = vdwg.mxu0
        %2575 = vmatpush.msra.mxu0 %v2526
        %2576 = vmatpush.msra.mxu0 %v2524
        %2577 = vmatpush.msra.mxu0 %v2522
        %2578 = vmatpush.msra.mxu0 %v2520
        %2579 = vmatpush.msra.mxu0 %v2518
        %2580 = vmatpush.msra.mxu0 %v2516
        %2581 = vmatpush.msra.mxu0 %v2514
        %2582 = vmatpush.msra.mxu0 %v2512
        %2583 = vmatpush.msra.mxu0 %v2510
        %2584 = vmatpush.msra.mxu0 %v2508
        %2585 = vmatpush.msra.mxu0 %v2506
        %2586 = vmatpush.msra.mxu0 %v2504
        %2587 = vmatpush.msra.mxu0 %v2502
        %2588 = vmatpush.msra.mxu0 %v2500
        %2589 = vmatpush.msra.mxu0 %v2498
        %2590 = vmatpush.msra.mxu0 %v2496
        %2591 = vmatmul.f32.gmra.mxu0 %v2441
        %v2592 = vpop.f32.mrf.mxu0
        %v2593 = vadd.f32 %v2573, %v2592
        %2594 = vdwg.mxu0
        %2595 = vmatpush.msra.mxu0 0.0
        %2596 = vmatpush.msra.mxu0 0.0
        %2597 = vmatpush.msra.mxu0 0.0
        %2598 = vmatpush.msra.mxu0 0.0
        %2599 = vmatpush.msra.mxu0 %v2550
        %2600 = vmatpush.msra.mxu0 %v2548
        %2601 = vmatpush.msra.mxu0 %v2546
        %2602 = vmatpush.msra.mxu0 %v2544
        %2603 = vmatpush.msra.mxu0 %v2542
        %2604 = vmatpush.msra.mxu0 %v2540
        %2605 = vmatpush.msra.mxu0 %v2538
        %2606 = vmatpush.msra.mxu0 %v2536
        %2607 = vmatpush.msra.mxu0 %v2534
        %2608 = vmatpush.msra.mxu0 %v2532
        %2609 = vmatpush.msra.mxu0 %v2530
        %2610 = vmatpush.msra.mxu0 %v2528
        %2611 = vmatmul.f32.gmra.mxu0 %v2553
        %v2612 = vpop.f32.mrf.mxu0
        %v2613 = vadd.f32 %v2593, %v2612
        %2614 = vdwg.mxu0
        %2615 = vmatpush.msra.mxu0 %v2495
        %2616 = vmatpush.msra.mxu0 %v2493
        %2617 = vmatpush.msra.mxu0 %v2491
        %2618 = vmatpush.msra.mxu0 %v2489
        %2619 = vmatpush.msra.mxu0 %v2487
        %2620 = vmatpush.msra.mxu0 %v2485
        %2621 = vmatpush.msra.mxu0 %v2483
        %2622 = vmatpush.msra.mxu0 %v2481
        %2623 = vmatpush.msra.mxu0 %v2479
        %2624 = vmatpush.msra.mxu0 %v2477
        %2625 = vmatpush.msra.mxu0 %v2475
        %2626 = vmatpush.msra.mxu0 %v2473
        %2627 = vmatpush.msra.mxu0 %v2471
        %2628 = vmatpush.msra.mxu0 %v2469
        %2629 = vmatpush.msra.mxu0 %v2467
        %2630 = vmatpush.msra.mxu0 %v2465
        %2631 = vmatmul.f32.gmra.mxu0 %v2421
        %v2632 = vpop.f32.mrf.mxu0
        %v2633 = vadd.f32 0.0, %v2632
        %2634 = vdwg.mxu0
        %2635 = vmatpush.msra.mxu0 %v2527
        %2636 = vmatpush.msra.mxu0 %v2525
        %2637 = vmatpush.msra.mxu0 %v2523
        %2638 = vmatpush.msra.mxu0 %v2521
        %2639 = vmatpush.msra.mxu0 %v2519
        %2640 = vmatpush.msra.mxu0 %v2517
        %2641 = vmatpush.msra.mxu0 %v2515
        %2642 = vmatpush.msra.mxu0 %v2513
        %2643 = vmatpush.msra.mxu0 %v2511
        %2644 = vmatpush.msra.mxu0 %v2509
        %2645 = vmatpush.msra.mxu0 %v2507
        %2646 = vmatpush.msra.mxu0 %v2505
        %2647 = vmatpush.msra.mxu0 %v2503
        %2648 = vmatpush.msra.mxu0 %v2501
        %2649 = vmatpush.msra.mxu0 %v2499
        %2650 = vmatpush.msra.mxu0 %v2497
        %2651 = vmatmul.f32.gmra.mxu0 %v2441
        %v2652 = vpop.f32.mrf.mxu0
        %v2653 = vadd.f32 %v2633, %v2652
        %2654 = vdwg.mxu0
        %2655 = vmatpush.msra.mxu0 0.0
        %2656 = vmatpush.msra.mxu0 0.0
        %2657 = vmatpush.msra.mxu0 0.0
        %2658 = vmatpush.msra.mxu0 0.0
        %2659 = vmatpush.msra.mxu0 %v2551
        %2660 = vmatpush.msra.mxu0 %v2549
        %2661 = vmatpush.msra.mxu0 %v2547
        %2662 = vmatpush.msra.mxu0 %v2545
        %2663 = vmatpush.msra.mxu0 %v2543
        %2664 = vmatpush.msra.mxu0 %v2541
        %2665 = vmatpush.msra.mxu0 %v2539
        %2666 = vmatpush.msra.mxu0 %v2537
        %2667 = vmatpush.msra.mxu0 %v2535
        %2668 = vmatpush.msra.mxu0 %v2533
        %2669 = vmatpush.msra.mxu0 %v2531
        %2670 = vmatpush.msra.mxu0 %v2529
        %2671 = vmatmul.f32.gmra.mxu0 %v2553
        %v2672 = vpop.f32.mrf.mxu0
        %v2673 = vadd.f32 %v2653, %v2672
        %2674 = vdwg.mxu0
        %v2675 = vadd.f32 %v2336, %v2613
        %v2676 = vadd.f32 %v2396, %v2673
        %s2677 = scalar_lea.vmem [#allocation7], 12
        %v2678 = vld [vmem:[%s2677] sm:$0xf]
        %v2680 = vsel %vm1835, %v2678, 0
        %2682 = vmatpush.msra.mxu0 0.0
        %2683 = vmatpush.msra.mxu0 0.0
        %2684 = vmatpush.msra.mxu0 0.0
        %2685 = vmatpush.msra.mxu0 0.0
        %2686 = vmatpush.msra.mxu0 0.0
        %2687 = vmatpush.msra.mxu0 0.0
        %2688 = vmatpush.msra.mxu0 0.0
        %2689 = vmatpush.msra.mxu0 0.0
        %2690 = vmatpush.msra.mxu0 0.0
        %2691 = vmatpush.msra.mxu0 0.0
        %2692 = vmatpush.msra.mxu0 0.0
        %2693 = vmatpush.msra.mxu0 0.0
        %2694 = vmatpush.msra.mxu0 0.0
        %2695 = vmatpush.msra.mxu0 0.0
        %2696 = vmatpush.msra.mxu0 %v1841
        %2697 = vmatpush.msra.mxu0 %v1828
        %2698 = vmatmul.f32.gmra.mxu0 %v2680
        %v2699 = vpop.f32.mrf.mxu0
        %v2700 = vadd.f32 0.0, %v2699
        %2701 = vdwg.mxu0
        %2702 = vmatpush.msra.mxu0 0.0
        %2703 = vmatpush.msra.mxu0 0.0
        %2704 = vmatpush.msra.mxu0 0.0
        %2705 = vmatpush.msra.mxu0 0.0
        %2706 = vmatpush.msra.mxu0 0.0
        %2707 = vmatpush.msra.mxu0 0.0
        %2708 = vmatpush.msra.mxu0 0.0
        %2709 = vmatpush.msra.mxu0 0.0
        %2710 = vmatpush.msra.mxu0 0.0
        %2711 = vmatpush.msra.mxu0 0.0
        %2712 = vmatpush.msra.mxu0 0.0
        %2713 = vmatpush.msra.mxu0 0.0
        %2714 = vmatpush.msra.mxu0 0.0
        %2715 = vmatpush.msra.mxu0 0.0
        %2716 = vmatpush.msra.mxu0 %v1844
        %2717 = vmatpush.msra.mxu0 %v1829
        %2718 = vmatmul.f32.gmra.mxu0 %v2680
        %v2719 = vpop.f32.mrf.mxu0
        %v2720 = vadd.f32 0.0, %v2719
        %2721 = vdwg.mxu0
        %2722 = vmatpush.msra.mxu0 0.0
        %2723 = vmatpush.msra.mxu0 0.0
        %2724 = vmatpush.msra.mxu0 0.0
        %2725 = vmatpush.msra.mxu0 0.0
        %2726 = vmatpush.msra.mxu0 0.0
        %2727 = vmatpush.msra.mxu0 0.0
        %2728 = vmatpush.msra.mxu0 0.0
        %2729 = vmatpush.msra.mxu0 0.0
        %2730 = vmatpush.msra.mxu0 0.0
        %2731 = vmatpush.msra.mxu0 0.0
        %2732 = vmatpush.msra.mxu0 0.0
        %2733 = vmatpush.msra.mxu0 0.0
        %2734 = vmatpush.msra.mxu0 0.0
        %2735 = vmatpush.msra.mxu0 0.0
        %2736 = vmatpush.msra.mxu0 %v1847
        %2737 = vmatpush.msra.mxu0 %v1830
        %2738 = vmatmul.f32.gmra.mxu0 %v2680
        %v2739 = vpop.f32.mrf.mxu0
        %v2740 = vadd.f32 0.0, %v2739
        %2741 = vdwg.mxu0
        %s2742 = scalar_lea.vmem [#allocation9], 2112
        %v2743 = vld [vmem:[%s2742] sm:$0xff]
        %v2744 = vld [vmem:[%s2742 + $0x8] sm:$0xff]
        %v2745 = vld [vmem:[%s2742 + $0x10] sm:$0xff]
        %v2746 = vld [vmem:[%s2742 + $0x18] sm:$0xff]
        %v2747 = vld [vmem:[%s2742 + $0x20] sm:$0xff]
        %v2748 = vld [vmem:[%s2742 + $0x28] sm:$0xff]
        %v2749 = vld [vmem:[%s2742 + $0x30] sm:$0xff]
        %v2750 = vld [vmem:[%s2742 + $0x38] sm:$0xff]
        %v2751 = vld [vmem:[%s2742 + $0x40] sm:$0xff]
        %v2752 = vld [vmem:[%s2742 + $0x48] sm:$0xff]
        %v2753 = vld [vmem:[%s2742 + $0x50] sm:$0xff]
        %v2754 = vld [vmem:[%s2742 + $0x58] sm:$0xff]
        %v2755 = vld [vmem:[%s2742 + $0x60] sm:$0xff]
        %v2756 = vld [vmem:[%s2742 + $0x68] sm:$0xff]
        %v2757 = vld [vmem:[%s2742 + $0x70] sm:$0xff]
        %v2758 = vld [vmem:[%s2742 + $0x78] sm:$0xff]
        %v2759 = vld [vmem:[%s2742 + $0x80] sm:$0xff]
        %v2760 = vld [vmem:[%s2742 + $0x88] sm:$0xff]
        %v2761 = vld [vmem:[%s2742 + $0x90] sm:$0xff]
        %v2762 = vld [vmem:[%s2742 + $0x98] sm:$0xff]
        %v2763 = vld [vmem:[%s2742 + $0xa0] sm:$0xff]
        %v2764 = vld [vmem:[%s2742 + $0xa8] sm:$0xff]
        %v2765 = vld [vmem:[%s2742 + $0xb0] sm:$0xff]
        %v2766 = vld [vmem:[%s2742 + $0xb8] sm:$0xff]
        %v2767 = vld [vmem:[%s2742 + $0xc0] sm:$0xff]
        %v2768 = vld [vmem:[%s2742 + $0xc8] sm:$0xff]
        %v2769 = vld [vmem:[%s2742 + $0xd0] sm:$0xff]
        %v2770 = vld [vmem:[%s2742 + $0xd8] sm:$0xff]
        %v2771 = vld [vmem:[%s2742 + $0xe0] sm:$0xff]
        %v2772 = vld [vmem:[%s2742 + $0xe8] sm:$0xff]
        %v2773 = vld [vmem:[%s2742 + $0xf0] sm:$0xff]
        %v2774 = vld [vmem:[%s2742 + $0xf8] sm:$0xff]
        %v2775 = vld [vmem:[%s2742 + $0x100] sm:$0xff]
        %v2776 = vld [vmem:[%s2742 + $0x108] sm:$0xff]
        %v2777 = vld [vmem:[%s2742 + $0x110] sm:$0xff]
        %v2778 = vld [vmem:[%s2742 + $0x118] sm:$0xff]
        %v2779 = vld [vmem:[%s2742 + $0x120] sm:$0xff]
        %v2780 = vld [vmem:[%s2742 + $0x128] sm:$0xff]
        %v2781 = vld [vmem:[%s2742 + $0x130] sm:$0xff]
        %v2782 = vld [vmem:[%s2742 + $0x138] sm:$0xff]
        %v2783 = vld [vmem:[%s2742 + $0x140] sm:$0xff]
        %v2784 = vld [vmem:[%s2742 + $0x148] sm:$0xff]
        %v2785 = vld [vmem:[%s2742 + $0x150] sm:$0xff]
        %v2786 = vld [vmem:[%s2742 + $0x158] sm:$0xff]
        %v2787 = vld [vmem:[%s2742 + $0x160] sm:$0xff]
        %v2788 = vld [vmem:[%s2742 + $0x168] sm:$0xff]
        %v2789 = vld [vmem:[%s2742 + $0x170] sm:$0xff]
        %v2790 = vld [vmem:[%s2742 + $0x178] sm:$0xff]
        %v2791 = vld [vmem:[%s2742 + $0x180] sm:$0xff]
        %v2792 = vld [vmem:[%s2742 + $0x188] sm:$0xff]
        %v2793 = vld [vmem:[%s2742 + $0x190] sm:$0xff]
        %v2794 = vld [vmem:[%s2742 + $0x198] sm:$0xff]
        %v2795 = vld [vmem:[%s2742 + $0x1a0] sm:$0xff]
        %v2796 = vld [vmem:[%s2742 + $0x1a8] sm:$0xff]
        %v2797 = vld [vmem:[%s2742 + $0x1b0] sm:$0xff]
        %v2798 = vld [vmem:[%s2742 + $0x1b8] sm:$0xff]
        %v2799 = vld [vmem:[%s2742 + $0x1c0] sm:$0xff]
        %v2800 = vld [vmem:[%s2742 + $0x1c8] sm:$0xff]
        %v2801 = vld [vmem:[%s2742 + $0x1d0] sm:$0xff]
        %v2802 = vld [vmem:[%s2742 + $0x1d8] sm:$0xff]
        %v2803 = vld [vmem:[%s2742 + $0x1e0] sm:$0xff]
        %v2804 = vld [vmem:[%s2742 + $0x1e8] sm:$0xff]
        %v2805 = vld [vmem:[%s2742 + $0x1f0] sm:$0xff]
        %v2806 = vld [vmem:[%s2742 + $0x1f8] sm:$0xff]
        %v2807 = vld [vmem:[%s2742 + $0x200] sm:$0xff]
        %v2808 = vld [vmem:[%s2742 + $0x208] sm:$0xff]
        %v2809 = vld [vmem:[%s2742 + $0x210] sm:$0xff]
        %v2810 = vld [vmem:[%s2742 + $0x218] sm:$0xff]
        %v2811 = vld [vmem:[%s2742 + $0x220] sm:$0xff]
        %v2812 = vld [vmem:[%s2742 + $0x228] sm:$0xff]
        %v2813 = vld [vmem:[%s2742 + $0x230] sm:$0xff]
        %v2814 = vld [vmem:[%s2742 + $0x238] sm:$0xff]
        %v2815 = vld [vmem:[%s2742 + $0x240] sm:$0xff]
        %v2816 = vld [vmem:[%s2742 + $0x248] sm:$0xff]
        %v2817 = vld [vmem:[%s2742 + $0x250] sm:$0xff]
        %v2818 = vld [vmem:[%s2742 + $0x258] sm:$0xff]
        %v2819 = vld [vmem:[%s2742 + $0x260] sm:$0xff]
        %v2820 = vld [vmem:[%s2742 + $0x268] sm:$0xff]
        %v2821 = vld [vmem:[%s2742 + $0x270] sm:$0xff]
        %v2822 = vld [vmem:[%s2742 + $0x278] sm:$0xff]
        %v2823 = vld [vmem:[%s2742 + $0x280] sm:$0xff]
        %v2824 = vld [vmem:[%s2742 + $0x288] sm:$0xff]
        %v2825 = vld [vmem:[%s2742 + $0x290] sm:$0xff]
        %v2826 = vld [vmem:[%s2742 + $0x298] sm:$0xff]
        %v2827 = vld [vmem:[%s2742 + $0x2a0] sm:$0xff]
        %v2828 = vld [vmem:[%s2742 + $0x2a8] sm:$0xff]
        %v2829 = vld [vmem:[%s2742 + $0x2b0] sm:$0xff]
        %v2830 = vld [vmem:[%s2742 + $0x2b8] sm:$0xff]
        %v2832 = vsel %vm2151, %v2740, 0
        %2834 = vmatpush.msra.mxu0 %v2773
        %2835 = vmatpush.msra.mxu0 %v2771
        %2836 = vmatpush.msra.mxu0 %v2769
        %2837 = vmatpush.msra.mxu0 %v2767
        %2838 = vmatpush.msra.mxu0 %v2765
        %2839 = vmatpush.msra.mxu0 %v2763
        %2840 = vmatpush.msra.mxu0 %v2761
        %2841 = vmatpush.msra.mxu0 %v2759
        %2842 = vmatpush.msra.mxu0 %v2757
        %2843 = vmatpush.msra.mxu0 %v2755
        %2844 = vmatpush.msra.mxu0 %v2753
        %2845 = vmatpush.msra.mxu0 %v2751
        %2846 = vmatpush.msra.mxu0 %v2749
        %2847 = vmatpush.msra.mxu0 %v2747
        %2848 = vmatpush.msra.mxu0 %v2745
        %2849 = vmatpush.msra.mxu0 %v2743
        %2850 = vmatmul.f32.gmra.mxu0 %v2700
        %v2851 = vpop.f32.mrf.mxu0
        %v2852 = vadd.f32 0.0, %v2851
        %2853 = vdwg.mxu0
        %2854 = vmatpush.msra.mxu0 %v2805
        %2855 = vmatpush.msra.mxu0 %v2803
        %2856 = vmatpush.msra.mxu0 %v2801
        %2857 = vmatpush.msra.mxu0 %v2799
        %2858 = vmatpush.msra.mxu0 %v2797
        %2859 = vmatpush.msra.mxu0 %v2795
        %2860 = vmatpush.msra.mxu0 %v2793
        %2861 = vmatpush.msra.mxu0 %v2791
        %2862 = vmatpush.msra.mxu0 %v2789
        %2863 = vmatpush.msra.mxu0 %v2787
        %2864 = vmatpush.msra.mxu0 %v2785
        %2865 = vmatpush.msra.mxu0 %v2783
        %2866 = vmatpush.msra.mxu0 %v2781
        %2867 = vmatpush.msra.mxu0 %v2779
        %2868 = vmatpush.msra.mxu0 %v2777
        %2869 = vmatpush.msra.mxu0 %v2775
        %2870 = vmatmul.f32.gmra.mxu0 %v2720
        %v2871 = vpop.f32.mrf.mxu0
        %v2872 = vadd.f32 %v2852, %v2871
        %2873 = vdwg.mxu0
        %2874 = vmatpush.msra.mxu0 0.0
        %2875 = vmatpush.msra.mxu0 0.0
        %2876 = vmatpush.msra.mxu0 0.0
        %2877 = vmatpush.msra.mxu0 0.0
        %2878 = vmatpush.msra.mxu0 %v2829
        %2879 = vmatpush.msra.mxu0 %v2827
        %2880 = vmatpush.msra.mxu0 %v2825
        %2881 = vmatpush.msra.mxu0 %v2823
        %2882 = vmatpush.msra.mxu0 %v2821
        %2883 = vmatpush.msra.mxu0 %v2819
        %2884 = vmatpush.msra.mxu0 %v2817
        %2885 = vmatpush.msra.mxu0 %v2815
        %2886 = vmatpush.msra.mxu0 %v2813
        %2887 = vmatpush.msra.mxu0 %v2811
        %2888 = vmatpush.msra.mxu0 %v2809
        %2889 = vmatpush.msra.mxu0 %v2807
        %2890 = vmatmul.f32.gmra.mxu0 %v2832
        %v2891 = vpop.f32.mrf.mxu0
        %v2892 = vadd.f32 %v2872, %v2891
        %2893 = vdwg.mxu0
        %2894 = vmatpush.msra.mxu0 %v2774
        %2895 = vmatpush.msra.mxu0 %v2772
        %2896 = vmatpush.msra.mxu0 %v2770
        %2897 = vmatpush.msra.mxu0 %v2768
        %2898 = vmatpush.msra.mxu0 %v2766
        %2899 = vmatpush.msra.mxu0 %v2764
        %2900 = vmatpush.msra.mxu0 %v2762
        %2901 = vmatpush.msra.mxu0 %v2760
        %2902 = vmatpush.msra.mxu0 %v2758
        %2903 = vmatpush.msra.mxu0 %v2756
        %2904 = vmatpush.msra.mxu0 %v2754
        %2905 = vmatpush.msra.mxu0 %v2752
        %2906 = vmatpush.msra.mxu0 %v2750
        %2907 = vmatpush.msra.mxu0 %v2748
        %2908 = vmatpush.msra.mxu0 %v2746
        %2909 = vmatpush.msra.mxu0 %v2744
        %2910 = vmatmul.f32.gmra.mxu0 %v2700
        %v2911 = vpop.f32.mrf.mxu0
        %v2912 = vadd.f32 0.0, %v2911
        %2913 = vdwg.mxu0
        %2914 = vmatpush.msra.mxu0 %v2806
        %2915 = vmatpush.msra.mxu0 %v2804
        %2916 = vmatpush.msra.mxu0 %v2802
        %2917 = vmatpush.msra.mxu0 %v2800
        %2918 = vmatpush.msra.mxu0 %v2798
        %2919 = vmatpush.msra.mxu0 %v2796
        %2920 = vmatpush.msra.mxu0 %v2794
        %2921 = vmatpush.msra.mxu0 %v2792
        %2922 = vmatpush.msra.mxu0 %v2790
        %2923 = vmatpush.msra.mxu0 %v2788
        %2924 = vmatpush.msra.mxu0 %v2786
        %2925 = vmatpush.msra.mxu0 %v2784
        %2926 = vmatpush.msra.mxu0 %v2782
        %2927 = vmatpush.msra.mxu0 %v2780
        %2928 = vmatpush.msra.mxu0 %v2778
        %2929 = vmatpush.msra.mxu0 %v2776
        %2930 = vmatmul.f32.gmra.mxu0 %v2720
        %v2931 = vpop.f32.mrf.mxu0
        %v2932 = vadd.f32 %v2912, %v2931
        %2933 = vdwg.mxu0
        %2934 = vmatpush.msra.mxu0 0.0
        %2935 = vmatpush.msra.mxu0 0.0
        %2936 = vmatpush.msra.mxu0 0.0
        %2937 = vmatpush.msra.mxu0 0.0
        %2938 = vmatpush.msra.mxu0 %v2830
        %2939 = vmatpush.msra.mxu0 %v2828
        %2940 = vmatpush.msra.mxu0 %v2826
        %2941 = vmatpush.msra.mxu0 %v2824
        %2942 = vmatpush.msra.mxu0 %v2822
        %2943 = vmatpush.msra.mxu0 %v2820
        %2944 = vmatpush.msra.mxu0 %v2818
        %2945 = vmatpush.msra.mxu0 %v2816
        %2946 = vmatpush.msra.mxu0 %v2814
        %2947 = vmatpush.msra.mxu0 %v2812
        %2948 = vmatpush.msra.mxu0 %v2810
        %2949 = vmatpush.msra.mxu0 %v2808
        %2950 = vmatmul.f32.gmra.mxu0 %v2832
        %v2951 = vpop.f32.mrf.mxu0
        %v2952 = vadd.f32 %v2932, %v2951
        %2953 = vdwg.mxu0
        %v2954 = vadd.f32 %v2675, %v2892
        %v2955 = vadd.f32 %v2676, %v2952
        %v2956 = vld [vmem:[%s6] sm:$0x3]
        %v2958 = vperm.slane %v2956, 0
        %v2959 = vperm.slane %v2956, 1
        %v2962 = vadd.f32 %v2954, %v2958
        %v2963 = vadd.f32 %v2955, %v2959
        %v2964 = vmax.f32 %v2962, 0.0
        %v2965 = vmax.f32 %v2963, 0.0
        %v2966 = vld [vmem:[#allocation10] sm:$0x3]
        %vm2967 = vcmask 31744
        %v2969 = vsel %vm2967, %v2966, 0
        %vm2971 = vcmask 1043456
        %v2973 = vsel %vm2971, %v2964, 0
        %v2976 = vsel %vm2971, %v2965, 0
        %2978 = vmatpush.msra.mxu0 0.0
        %2979 = vmatpush.msra.mxu0 0.0
        %2980 = vmatpush.msra.mxu0 0.0
        %2981 = vmatpush.msra.mxu0 0.0
        %2982 = vmatpush.msra.mxu0 0.0
        %2983 = vmatpush.msra.mxu0 0.0
        %2984 = vmatpush.msra.mxu0 0.0
        %2985 = vmatpush.msra.mxu0 0.0
        %2986 = vmatpush.msra.mxu0 0.0
        %2987 = vmatpush.msra.mxu0 0.0
        %2988 = vmatpush.msra.mxu0 0.0
        %2989 = vmatpush.msra.mxu0 0.0
        %2990 = vmatpush.msra.mxu0 0.0
        %2991 = vmatpush.msra.mxu0 0.0
        %2992 = vmatpush.msra.mxu0 0.0
        %2993 = vmatpush.msra.mxu0 %v2973
        %2994 = vmatmul.f32.gmra.mxu0 %v2969
        %v2995 = vpop.f32.mrf.mxu0
        %v2996 = vadd.f32 0.0, %v2995
        %2997 = vdwg.mxu0
        %2998 = vmatpush.msra.mxu0 0.0
        %2999 = vmatpush.msra.mxu0 0.0
        %3000 = vmatpush.msra.mxu0 0.0
        %3001 = vmatpush.msra.mxu0 0.0
        %3002 = vmatpush.msra.mxu0 0.0
        %3003 = vmatpush.msra.mxu0 0.0
        %3004 = vmatpush.msra.mxu0 0.0
        %3005 = vmatpush.msra.mxu0 0.0
        %3006 = vmatpush.msra.mxu0 0.0
        %3007 = vmatpush.msra.mxu0 0.0
        %3008 = vmatpush.msra.mxu0 0.0
        %3009 = vmatpush.msra.mxu0 0.0
        %3010 = vmatpush.msra.mxu0 0.0
        %3011 = vmatpush.msra.mxu0 0.0
        %3012 = vmatpush.msra.mxu0 0.0
        %3013 = vmatpush.msra.mxu0 %v2976
        %3014 = vmatmul.f32.gmra.mxu0 %v2969
        %v3015 = vpop.f32.mrf.mxu0
        %v3016 = vadd.f32 0.0, %v3015
        %3017 = vdwg.mxu0
        %v3018 = vld [vmem:[#allocation12] sm:$0xff]
        %v3019 = vld [vmem:[#allocation12 + $0x8] sm:$0xff]
        %v3020 = vld [vmem:[#allocation12 + $0x10] sm:$0xff]
        %v3021 = vld [vmem:[#allocation12 + $0x18] sm:$0xff]
        %v3022 = vld [vmem:[#allocation12 + $0x20] sm:$0xff]
        %v3023 = vld [vmem:[#allocation12 + $0x28] sm:$0xff]
        %v3024 = vld [vmem:[#allocation12 + $0x30] sm:$0xff]
        %v3025 = vld [vmem:[#allocation12 + $0x38] sm:$0xff]
        %v3026 = vld [vmem:[#allocation12 + $0x40] sm:$0xff]
        %v3027 = vld [vmem:[#allocation12 + $0x48] sm:$0xff]
        %v3028 = vld [vmem:[#allocation12 + $0x50] sm:$0xff]
        %v3029 = vld [vmem:[#allocation12 + $0x58] sm:$0xff]
        %v3030 = vld [vmem:[#allocation12 + $0x60] sm:$0xff]
        %v3031 = vld [vmem:[#allocation12 + $0x68] sm:$0xff]
        %v3032 = vld [vmem:[#allocation12 + $0x70] sm:$0xff]
        %v3033 = vld [vmem:[#allocation12 + $0x78] sm:$0xff]
        %v3034 = vld [vmem:[#allocation12 + $0x80] sm:$0xff]
        %v3035 = vld [vmem:[#allocation12 + $0x88] sm:$0xff]
        %v3036 = vld [vmem:[#allocation12 + $0x90] sm:$0xff]
        %v3037 = vld [vmem:[#allocation12 + $0x98] sm:$0xff]
        %v3038 = vld [vmem:[#allocation12 + $0xa0] sm:$0xff]
        %v3039 = vld [vmem:[#allocation12 + $0xa8] sm:$0xff]
        %v3040 = vld [vmem:[#allocation12 + $0xb0] sm:$0xff]
        %v3041 = vld [vmem:[#allocation12 + $0xb8] sm:$0xff]
        %v3042 = vld [vmem:[#allocation12 + $0xc0] sm:$0xff]
        %v3043 = vld [vmem:[#allocation12 + $0xc8] sm:$0xff]
        %v3044 = vld [vmem:[#allocation12 + $0xd0] sm:$0xff]
        %v3045 = vld [vmem:[#allocation12 + $0xd8] sm:$0xff]
        %v3046 = vld [vmem:[#allocation12 + $0xe0] sm:$0xff]
        %v3047 = vld [vmem:[#allocation12 + $0xe8] sm:$0xff]
        %v3048 = vld [vmem:[#allocation12 + $0xf0] sm:$0xff]
        %v3049 = vld [vmem:[#allocation12 + $0xf8] sm:$0xff]
        %s3050 = scalar_lea.vmem [#allocation10], 2
        %v3051 = vld [vmem:[%s3050] sm:$0x3]
        %v3053 = vsel %vm2967, %v3051, 0
        %3055 = vmatpush.msra.mxu0 0.0
        %3056 = vmatpush.msra.mxu0 0.0
        %3057 = vmatpush.msra.mxu0 0.0
        %3058 = vmatpush.msra.mxu0 0.0
        %3059 = vmatpush.msra.mxu0 0.0
        %3060 = vmatpush.msra.mxu0 0.0
        %3061 = vmatpush.msra.mxu0 0.0
        %3062 = vmatpush.msra.mxu0 0.0
        %3063 = vmatpush.msra.mxu0 0.0
        %3064 = vmatpush.msra.mxu0 0.0
        %3065 = vmatpush.msra.mxu0 0.0
        %3066 = vmatpush.msra.mxu0 0.0
        %3067 = vmatpush.msra.mxu0 0.0
        %3068 = vmatpush.msra.mxu0 0.0
        %3069 = vmatpush.msra.mxu0 0.0
        %3070 = vmatpush.msra.mxu0 %v2973
        %3071 = vmatmul.f32.gmra.mxu0 %v3053
        %v3072 = vpop.f32.mrf.mxu0
        %v3073 = vadd.f32 0.0, %v3072
        %3074 = vdwg.mxu0
        %3075 = vmatpush.msra.mxu0 0.0
        %3076 = vmatpush.msra.mxu0 0.0
        %3077 = vmatpush.msra.mxu0 0.0
        %3078 = vmatpush.msra.mxu0 0.0
        %3079 = vmatpush.msra.mxu0 0.0
        %3080 = vmatpush.msra.mxu0 0.0
        %3081 = vmatpush.msra.mxu0 0.0
        %3082 = vmatpush.msra.mxu0 0.0
        %3083 = vmatpush.msra.mxu0 0.0
        %3084 = vmatpush.msra.mxu0 0.0
        %3085 = vmatpush.msra.mxu0 0.0
        %3086 = vmatpush.msra.mxu0 0.0
        %3087 = vmatpush.msra.mxu0 0.0
        %3088 = vmatpush.msra.mxu0 0.0
        %3089 = vmatpush.msra.mxu0 0.0
        %3090 = vmatpush.msra.mxu0 %v2976
        %3091 = vmatmul.f32.gmra.mxu0 %v3053
        %v3092 = vpop.f32.mrf.mxu0
        %v3093 = vadd.f32 0.0, %v3092
        %3094 = vdwg.mxu0
        %s3095 = scalar_lea.vmem [#allocation12], 256
        %v3096 = vld [vmem:[%s3095] sm:$0xff]
        %v3097 = vld [vmem:[%s3095 + $0x8] sm:$0xff]
        %v3098 = vld [vmem:[%s3095 + $0x10] sm:$0xff]
        %v3099 = vld [vmem:[%s3095 + $0x18] sm:$0xff]
        %v3100 = vld [vmem:[%s3095 + $0x20] sm:$0xff]
        %v3101 = vld [vmem:[%s3095 + $0x28] sm:$0xff]
        %v3102 = vld [vmem:[%s3095 + $0x30] sm:$0xff]
        %v3103 = vld [vmem:[%s3095 + $0x38] sm:$0xff]
        %v3104 = vld [vmem:[%s3095 + $0x40] sm:$0xff]
        %v3105 = vld [vmem:[%s3095 + $0x48] sm:$0xff]
        %v3106 = vld [vmem:[%s3095 + $0x50] sm:$0xff]
        %v3107 = vld [vmem:[%s3095 + $0x58] sm:$0xff]
        %v3108 = vld [vmem:[%s3095 + $0x60] sm:$0xff]
        %v3109 = vld [vmem:[%s3095 + $0x68] sm:$0xff]
        %v3110 = vld [vmem:[%s3095 + $0x70] sm:$0xff]
        %v3111 = vld [vmem:[%s3095 + $0x78] sm:$0xff]
        %v3112 = vld [vmem:[%s3095 + $0x80] sm:$0xff]
        %v3113 = vld [vmem:[%s3095 + $0x88] sm:$0xff]
        %v3114 = vld [vmem:[%s3095 + $0x90] sm:$0xff]
        %v3115 = vld [vmem:[%s3095 + $0x98] sm:$0xff]
        %v3116 = vld [vmem:[%s3095 + $0xa0] sm:$0xff]
        %v3117 = vld [vmem:[%s3095 + $0xa8] sm:$0xff]
        %v3118 = vld [vmem:[%s3095 + $0xb0] sm:$0xff]
        %v3119 = vld [vmem:[%s3095 + $0xb8] sm:$0xff]
        %v3120 = vld [vmem:[%s3095 + $0xc0] sm:$0xff]
        %v3121 = vld [vmem:[%s3095 + $0xc8] sm:$0xff]
        %v3122 = vld [vmem:[%s3095 + $0xd0] sm:$0xff]
        %v3123 = vld [vmem:[%s3095 + $0xd8] sm:$0xff]
        %v3124 = vld [vmem:[%s3095 + $0xe0] sm:$0xff]
        %v3125 = vld [vmem:[%s3095 + $0xe8] sm:$0xff]
        %v3126 = vld [vmem:[%s3095 + $0xf0] sm:$0xff]
        %v3127 = vld [vmem:[%s3095 + $0xf8] sm:$0xff]
        %3128 = vmatpush.msra.mxu0 %v3111
        %3129 = vmatpush.msra.mxu0 %v3110
        %3130 = vmatpush.msra.mxu0 %v3109
        %3131 = vmatpush.msra.mxu0 %v3108
        %3132 = vmatpush.msra.mxu0 %v3107
        %3133 = vmatpush.msra.mxu0 %v3106
        %3134 = vmatpush.msra.mxu0 %v3105
        %3135 = vmatpush.msra.mxu0 %v3104
        %3136 = vmatpush.msra.mxu0 %v3103
        %3137 = vmatpush.msra.mxu0 %v3102
        %3138 = vmatpush.msra.mxu0 %v3101
        %3139 = vmatpush.msra.mxu0 %v3100
        %3140 = vmatpush.msra.mxu0 %v3099
        %3141 = vmatpush.msra.mxu0 %v3098
        %3142 = vmatpush.msra.mxu0 %v3097
        %3143 = vmatpush.msra.mxu0 %v3096
        %3144 = vmatmul.f32.gmra.mxu0 %v3073
        %v3145 = vpop.f32.mrf.mxu0
        %v3146 = vadd.f32 0.0, %v3145
        %3147 = vdwg.mxu0
        %3148 = vmatpush.msra.mxu0 %v3127
        %3149 = vmatpush.msra.mxu0 %v3126
        %3150 = vmatpush.msra.mxu0 %v3125
        %3151 = vmatpush.msra.mxu0 %v3124
        %3152 = vmatpush.msra.mxu0 %v3123
        %3153 = vmatpush.msra.mxu0 %v3122
        %3154 = vmatpush.msra.mxu0 %v3121
        %3155 = vmatpush.msra.mxu0 %v3120
        %3156 = vmatpush.msra.mxu0 %v3119
        %3157 = vmatpush.msra.mxu0 %v3118
        %3158 = vmatpush.msra.mxu0 %v3117
        %3159 = vmatpush.msra.mxu0 %v3116
        %3160 = vmatpush.msra.mxu0 %v3115
        %3161 = vmatpush.msra.mxu0 %v3114
        %3162 = vmatpush.msra.mxu0 %v3113
        %3163 = vmatpush.msra.mxu0 %v3112
        %3164 = vmatmul.f32.gmra.mxu0 %v3093
        %v3165 = vpop.f32.mrf.mxu0
        %v3166 = vadd.f32 %v3146, %v3165
        %3167 = vdwg.mxu0
        %3168 = vmatpush.msra.mxu0 %v3033
        %3169 = vmatpush.msra.mxu0 %v3032
        %3170 = vmatpush.msra.mxu0 %v3031
        %3171 = vmatpush.msra.mxu0 %v3030
        %3172 = vmatpush.msra.mxu0 %v3029
        %3173 = vmatpush.msra.mxu0 %v3028
        %3174 = vmatpush.msra.mxu0 %v3027
        %3175 = vmatpush.msra.mxu0 %v3026
        %3176 = vmatpush.msra.mxu0 %v3025
        %3177 = vmatpush.msra.mxu0 %v3024
        %3178 = vmatpush.msra.mxu0 %v3023
        %3179 = vmatpush.msra.mxu0 %v3022
        %3180 = vmatpush.msra.mxu0 %v3021
        %3181 = vmatpush.msra.mxu0 %v3020
        %3182 = vmatpush.msra.mxu0 %v3019
        %3183 = vmatpush.msra.mxu0 %v3018
        %3184 = vmatmul.f32.gmra.mxu0 %v2996
        %v3185 = vpop.f32.mrf.mxu0
        %v3186 = vadd.f32 %v3166, %v3185
        %3187 = vdwg.mxu0
        %3188 = vmatpush.msra.mxu0 %v3049
        %3189 = vmatpush.msra.mxu0 %v3048
        %3190 = vmatpush.msra.mxu0 %v3047
        %3191 = vmatpush.msra.mxu0 %v3046
        %3192 = vmatpush.msra.mxu0 %v3045
        %3193 = vmatpush.msra.mxu0 %v3044
        %3194 = vmatpush.msra.mxu0 %v3043
        %3195 = vmatpush.msra.mxu0 %v3042
        %3196 = vmatpush.msra.mxu0 %v3041
        %3197 = vmatpush.msra.mxu0 %v3040
        %3198 = vmatpush.msra.mxu0 %v3039
        %3199 = vmatpush.msra.mxu0 %v3038
        %3200 = vmatpush.msra.mxu0 %v3037
        %3201 = vmatpush.msra.mxu0 %v3036
        %3202 = vmatpush.msra.mxu0 %v3035
        %3203 = vmatpush.msra.mxu0 %v3034
        %3204 = vmatmul.f32.gmra.mxu0 %v3016
        %v3205 = vpop.f32.mrf.mxu0
        %v3206 = vadd.f32 %v3186, %v3205
        %3207 = vdwg.mxu0
        %s3208 = scalar_lea.vmem [#allocation10], 4
        %v3209 = vld [vmem:[%s3208] sm:$0x3]
        %v3211 = vsel %vm2967, %v3209, 0
        %3213 = vmatpush.msra.mxu0 0.0
        %3214 = vmatpush.msra.mxu0 0.0
        %3215 = vmatpush.msra.mxu0 0.0
        %3216 = vmatpush.msra.mxu0 0.0
        %3217 = vmatpush.msra.mxu0 0.0
        %3218 = vmatpush.msra.mxu0 0.0
        %3219 = vmatpush.msra.mxu0 0.0
        %3220 = vmatpush.msra.mxu0 0.0
        %3221 = vmatpush.msra.mxu0 0.0
        %3222 = vmatpush.msra.mxu0 0.0
        %3223 = vmatpush.msra.mxu0 0.0
        %3224 = vmatpush.msra.mxu0 0.0
        %3225 = vmatpush.msra.mxu0 0.0
        %3226 = vmatpush.msra.mxu0 0.0
        %3227 = vmatpush.msra.mxu0 0.0
        %3228 = vmatpush.msra.mxu0 %v2973
        %3229 = vmatmul.f32.gmra.mxu0 %v3211
        %v3230 = vpop.f32.mrf.mxu0
        %v3231 = vadd.f32 0.0, %v3230
        %3232 = vdwg.mxu0
        %3233 = vmatpush.msra.mxu0 0.0
        %3234 = vmatpush.msra.mxu0 0.0
        %3235 = vmatpush.msra.mxu0 0.0
        %3236 = vmatpush.msra.mxu0 0.0
        %3237 = vmatpush.msra.mxu0 0.0
        %3238 = vmatpush.msra.mxu0 0.0
        %3239 = vmatpush.msra.mxu0 0.0
        %3240 = vmatpush.msra.mxu0 0.0
        %3241 = vmatpush.msra.mxu0 0.0
        %3242 = vmatpush.msra.mxu0 0.0
        %3243 = vmatpush.msra.mxu0 0.0
        %3244 = vmatpush.msra.mxu0 0.0
        %3245 = vmatpush.msra.mxu0 0.0
        %3246 = vmatpush.msra.mxu0 0.0
        %3247 = vmatpush.msra.mxu0 0.0
        %3248 = vmatpush.msra.mxu0 %v2976
        %3249 = vmatmul.f32.gmra.mxu0 %v3211
        %v3250 = vpop.f32.mrf.mxu0
        %v3251 = vadd.f32 0.0, %v3250
        %3252 = vdwg.mxu0
        %s3253 = scalar_lea.vmem [#allocation12], 512
        %v3254 = vld [vmem:[%s3253] sm:$0xff]
        %v3255 = vld [vmem:[%s3253 + $0x8] sm:$0xff]
        %v3256 = vld [vmem:[%s3253 + $0x10] sm:$0xff]
        %v3257 = vld [vmem:[%s3253 + $0x18] sm:$0xff]
        %v3258 = vld [vmem:[%s3253 + $0x20] sm:$0xff]
        %v3259 = vld [vmem:[%s3253 + $0x28] sm:$0xff]
        %v3260 = vld [vmem:[%s3253 + $0x30] sm:$0xff]
        %v3261 = vld [vmem:[%s3253 + $0x38] sm:$0xff]
        %v3262 = vld [vmem:[%s3253 + $0x40] sm:$0xff]
        %v3263 = vld [vmem:[%s3253 + $0x48] sm:$0xff]
        %v3264 = vld [vmem:[%s3253 + $0x50] sm:$0xff]
        %v3265 = vld [vmem:[%s3253 + $0x58] sm:$0xff]
        %v3266 = vld [vmem:[%s3253 + $0x60] sm:$0xff]
        %v3267 = vld [vmem:[%s3253 + $0x68] sm:$0xff]
        %v3268 = vld [vmem:[%s3253 + $0x70] sm:$0xff]
        %v3269 = vld [vmem:[%s3253 + $0x78] sm:$0xff]
        %v3270 = vld [vmem:[%s3253 + $0x80] sm:$0xff]
        %v3271 = vld [vmem:[%s3253 + $0x88] sm:$0xff]
        %v3272 = vld [vmem:[%s3253 + $0x90] sm:$0xff]
        %v3273 = vld [vmem:[%s3253 + $0x98] sm:$0xff]
        %v3274 = vld [vmem:[%s3253 + $0xa0] sm:$0xff]
        %v3275 = vld [vmem:[%s3253 + $0xa8] sm:$0xff]
        %v3276 = vld [vmem:[%s3253 + $0xb0] sm:$0xff]
        %v3277 = vld [vmem:[%s3253 + $0xb8] sm:$0xff]
        %v3278 = vld [vmem:[%s3253 + $0xc0] sm:$0xff]
        %v3279 = vld [vmem:[%s3253 + $0xc8] sm:$0xff]
        %v3280 = vld [vmem:[%s3253 + $0xd0] sm:$0xff]
        %v3281 = vld [vmem:[%s3253 + $0xd8] sm:$0xff]
        %v3282 = vld [vmem:[%s3253 + $0xe0] sm:$0xff]
        %v3283 = vld [vmem:[%s3253 + $0xe8] sm:$0xff]
        %v3284 = vld [vmem:[%s3253 + $0xf0] sm:$0xff]
        %v3285 = vld [vmem:[%s3253 + $0xf8] sm:$0xff]
        %3286 = vmatpush.msra.mxu0 %v3269
        %3287 = vmatpush.msra.mxu0 %v3268
        %3288 = vmatpush.msra.mxu0 %v3267
        %3289 = vmatpush.msra.mxu0 %v3266
        %3290 = vmatpush.msra.mxu0 %v3265
        %3291 = vmatpush.msra.mxu0 %v3264
        %3292 = vmatpush.msra.mxu0 %v3263
        %3293 = vmatpush.msra.mxu0 %v3262
        %3294 = vmatpush.msra.mxu0 %v3261
        %3295 = vmatpush.msra.mxu0 %v3260
        %3296 = vmatpush.msra.mxu0 %v3259
        %3297 = vmatpush.msra.mxu0 %v3258
        %3298 = vmatpush.msra.mxu0 %v3257
        %3299 = vmatpush.msra.mxu0 %v3256
        %3300 = vmatpush.msra.mxu0 %v3255
        %3301 = vmatpush.msra.mxu0 %v3254
        %3302 = vmatmul.f32.gmra.mxu0 %v3231
        %v3303 = vpop.f32.mrf.mxu0
        %v3304 = vadd.f32 0.0, %v3303
        %3305 = vdwg.mxu0
        %3306 = vmatpush.msra.mxu0 %v3285
        %3307 = vmatpush.msra.mxu0 %v3284
        %3308 = vmatpush.msra.mxu0 %v3283
        %3309 = vmatpush.msra.mxu0 %v3282
        %3310 = vmatpush.msra.mxu0 %v3281
        %3311 = vmatpush.msra.mxu0 %v3280
        %3312 = vmatpush.msra.mxu0 %v3279
        %3313 = vmatpush.msra.mxu0 %v3278
        %3314 = vmatpush.msra.mxu0 %v3277
        %3315 = vmatpush.msra.mxu0 %v3276
        %3316 = vmatpush.msra.mxu0 %v3275
        %3317 = vmatpush.msra.mxu0 %v3274
        %3318 = vmatpush.msra.mxu0 %v3273
        %3319 = vmatpush.msra.mxu0 %v3272
        %3320 = vmatpush.msra.mxu0 %v3271
        %3321 = vmatpush.msra.mxu0 %v3270
        %3322 = vmatmul.f32.gmra.mxu0 %v3251
        %v3323 = vpop.f32.mrf.mxu0
        %v3324 = vadd.f32 %v3304, %v3323
        %3325 = vdwg.mxu0
        %v3326 = vadd.f32 %v3206, %v3324
        %v3327 = vld [vmem:[%s9] sm:$0x1]
        %v3329 = vperm.slane %v3327, 0
        %v3331 = vadd.f32 %v3326, %v3329
        %v3332 = vmax.f32 %v3331, 0.0
        %vm3333 = vcmask 517120
        %3334 = vst.msk [vmem:[%s473] sm:$0x3] %vm3333, %v3332
        %p3335 = scmp.lt.s32.totalorder %s25, 1
        %s3336 = scalar_select %p3335, %s25, 1
        %s3337 = smul.addr %s3336, 2
        %s3338 = scalar_lea.vmem %s10, %s3337
        // Predicated region
        $region89: #{_lambda_.1} parent=59 // pred_check
          %p3339 = pneg %p258
        $region90: #{_lambda_.1} parent=59 // pred_check_branch
          %3341 = sbr.rel (%p3339) target = $region92
        $region91: #{_lambda_.1} parent=59 // pred_region
          _
        $region92: #{_lambda_.1} parent=59 // pred_fallthru
          _
      $region60: #{_lambda_.1} parent=5 // pred_fallthru
        _
      %p3342 = scmp.le.s32.totalorder 2, %s20
      // Predicated region
      $region93: #{_lambda_.1} parent=5 // pred_check
        %p3343 = pneg %p3342
      $region94: #{_lambda_.1} parent=5 // pred_check_branch
        %3345 = sbr.rel (%p3343) target = $region96
      $region95: #{_lambda_.1} parent=5 // pred_region
        %s3346 = ssub.s32 %s20, 2
        // Predicated region
        $region97: #{_lambda_.1} parent=95 // pred_check
          %p3347 = pneg %p264
        $region98: #{_lambda_.1} parent=95 // pred_check_branch
          %3349 = sbr.rel (%p3347) target = $region100
        $region99: #{_lambda_.1} parent=95 // pred_region
          %p3350 = scmp.lt.s32.totalorder %s26, 1
          %s3351 = scalar_select %p3350, %s26, 1
          %s3352 = smul.addr %s3351, 2
          %s3353 = scalar_lea.vmem %s10, %s3352
        $region100: #{_lambda_.1} parent=95 // pred_fallthru
          _
      $region96: #{_lambda_.1} parent=5 // pred_fallthru
        _
    $region6: #{_lambda_.1} parent=1 // loop_footer
      %s24 = sadd.s32 1, %s20
    $region7: #{_lambda_.1} parent=1 // loop_footer_branch
      %19 = sbr.rel target = $region3
    $region8: #{_lambda_.1} parent=1 // loop_exit
      _
    %3354 = vsyncpa [#allocation3], 1
    %s3355 = scalar_lea.sflag [#allocation3], 1
    %3356 = vsyncpa %s3355, 1
    %3357 = vsyncpa [#allocation5], 1
    %3358 = vsyncpa [#allocation8], 1
    %3359 = vsyncpa [#allocation11], 1

</llo_original>
